<compile_context>
chip_gen: v5e
topology: v5e:2x2
jax: 0.10.0
libtpu: 0.0.40
codegen_flags: <defaults>
</compile_context>

<pallas_src>
import functools

import jax
import jax.numpy as jnp
from jax.experimental import pallas as pl
from jax.experimental.pallas import tpu as pltpu

# ----------------------------- configuration --------------------------------
B = 2             # batch (number of sentence pairs)
S = 8             # sequence length
H = 128           # hidden size          (768 in real BERT) — lane-dense
NH = 2            # attention heads
DH = H // NH      # head dim
I = 256           # FFN intermediate     (3072 in real BERT)
L = 2             # transformer layers   (12 in real BERT)
VOCAB = 100
MAX_POS = 16
TYPE_VOCAB = 2
NUM_CLASSES = 2
EPS = 1e-12

_PAR = pltpu.CompilerParams(dimension_semantics=("parallel",))


# ------------------------------ fused kernel ---------------------------------
def _fused_forward_kernel(
        x_ref, mask_ref, emb_g_ref, emb_b_ref,
        wqkv_ref, bqkv_ref, wo_ref, bo_ref, ln1g_ref, ln1b_ref,
        w1_ref, b1_ref, w2_ref, b2_ref, ln2g_ref, ln2b_ref,
        pool_w_ref, pool_b_ref,
        w1a_ref, w1b_ref, w1c_ref, b1h_ref, w2h_ref, b2h_ref,
        oh_ref,
        logits_ref, nll_ref,
        *, num_layers, num_heads, head_dim, seq_len, eps):
    """One sentence PAIR per grid step: embedding LN -> L transformer layers
    (both sequences, 2*S rows) -> pooler -> [a,b,|a-b|] MLP -> logits + NLL."""
    bf = jnp.bfloat16
    hsize = num_heads * head_dim
    n_seq = 2                       # sentence A and sentence B of this pair
    scale = 1.0 / (head_dim ** 0.5)

    def layer_norm(z, g, b):
        mu = jnp.mean(z, axis=-1, keepdims=True)
        var = jnp.mean(jnp.square(z - mu), axis=-1, keepdims=True)
        return (z - mu) * jax.lax.rsqrt(var + eps) * g + b

    # ---- embedding LayerNorm (folded into the fused kernel) ----
    x = layer_norm(x_ref[...], emb_g_ref[...], emb_b_ref[...])     # (2S, H) f32

    # ---- additive attention mask built in-kernel from the int mask ----
    addmask = (1.0 - mask_ref[0].astype(jnp.float32)) * -1e9       # (2, S)

    # ---- transformer layers (static unroll, weights resident in VMEM) ----
    for l in range(num_layers):
        wqkv = wqkv_ref[l]                                         # (H, 3H) bf16
        wo = wo_ref[l]                                             # (H, H)  bf16
        qkv = jax.lax.dot_general(
            x.astype(bf), wqkv, (((1,), (0,)), ((), ())),
            preferred_element_type=jnp.float32) + bqkv_ref[l]      # (2S, 3H) f32
        q = qkv[:, :hsize]
        k = qkv[:, hsize:2 * hsize]
        v = qkv[:, 2 * hsize:]

        attn_out = None
        for h in range(num_heads):                                 # static
            cs = slice(h * head_dim, (h + 1) * head_dim)
            qh = q[:, cs].astype(bf)                               # (2S, DH)
            kh = k[:, cs].astype(bf)
            vh = v[:, cs].astype(bf)
            ctx_parts = []
            for si in range(n_seq):                                # static
                rs = slice(si * seq_len, (si + 1) * seq_len)
                sc = jax.lax.dot_general(
                    qh[rs], kh[rs], (((1,), (1,)), ((), ())),
                    preferred_element_type=jnp.float32) * scale    # (S, S)
                sc = sc + addmask[si:si + 1, :]
                mx = jnp.max(sc, axis=-1, keepdims=True)
                p = jnp.exp(sc - mx)
                p = p * pl.reciprocal(jnp.sum(p, axis=-1, keepdims=True),
                                      approx=True)
                ctx_parts.append(jnp.dot(p.astype(bf), vh[rs],
                                         preferred_element_type=jnp.float32))
            ctx = jnp.concatenate(ctx_parts, axis=0)               # (2S, DH) sublane
            # fold the head concat into the output projection (sublane W_o slice)
            part = jnp.dot(ctx.astype(bf), wo[cs, :],
                           preferred_element_type=jnp.float32)     # (2S, H)
            attn_out = part if attn_out is None else attn_out + part

        y = layer_norm(attn_out + bo_ref[l] + x, ln1g_ref[l], ln1b_ref[l])

        hdn = jnp.dot(y.astype(bf), w1_ref[l],
                      preferred_element_type=jnp.float32) + b1_ref[l]
        hdn = jax.nn.gelu(hdn)  # tanh-approx gelu; HF BERT uses erf gelu (minor diff)
        ffn = jnp.dot(hdn.astype(bf), w2_ref[l],
                      preferred_element_type=jnp.float32) + b2_ref[l]
        x = layer_norm(ffn + y, ln2g_ref[l], ln2b_ref[l])

    # ---- pooler (tanh) on the two CLS rows of this pair ----
    cls = jnp.concatenate([x[0:1, :], x[seq_len:seq_len + 1, :]], axis=0)  # (2, H)
    pooled = jnp.tanh(jnp.dot(cls.astype(bf), pool_w_ref[...],
                              preferred_element_type=jnp.float32)
                      + pool_b_ref[...])                           # (2, H)
    a_rep = pooled[0:1, :]
    b_rep = pooled[1:2, :]
    d_rep = jnp.abs(a_rep - b_rep)

    # ---- [a, b, |a-b|] MLP head (W1 pre-sliced -> no lane-axis concat) ----
    hfeat = (jnp.dot(a_rep.astype(bf), w1a_ref[...], preferred_element_type=jnp.float32)
             + jnp.dot(b_rep.astype(bf), w1b_ref[...], preferred_element_type=jnp.float32)
             + jnp.dot(d_rep.astype(bf), w1c_ref[...], preferred_element_type=jnp.float32)
             + b1h_ref[...])
    hfeat = jnp.maximum(hfeat, 0.0)                                # ReLU
    logits = jnp.dot(hfeat.astype(bf), w2h_ref[...],
                     preferred_element_type=jnp.float32) + b2h_ref[...]   # (1, C)
    logits_ref[...] = logits.reshape(logits_ref.shape)

    # ---- per-pair cross-entropy (mean over pairs taken outside) ----
    oh = oh_ref[0]                                                 # (1, C)
    mx = jnp.max(logits, axis=-1, keepdims=True)
    lse = mx + jnp.log(jnp.sum(jnp.exp(logits - mx), axis=-1, keepdims=True))
    nll = lse - jnp.sum(logits * oh, axis=-1, keepdims=True)       # (1, 1)
    nll_ref[...] = nll.reshape(nll_ref.shape)


def pallas_fused_forward(x_flat, mask_pairs, onehot, p):
    n_pairs = mask_pairs.shape[0]
    R = 2 * S
    c2 = lambda pid: (0, 0)
    c3 = lambda pid: (0, 0, 0)
    in_specs = [
        pl.BlockSpec((R, H), lambda pid: (pid, 0)),               # x (pair block)
        pl.BlockSpec((1, 2, S), lambda pid: (pid, 0, 0)),         # int attn mask
        pl.BlockSpec((1, H), c2), pl.BlockSpec((1, H), c2),       # emb LN g/b
        pl.BlockSpec((L, H, 3 * H), c3), pl.BlockSpec((L, 1, 3 * H), c3),
        pl.BlockSpec((L, H, H), c3), pl.BlockSpec((L, 1, H), c3),
        pl.BlockSpec((L, 1, H), c3), pl.BlockSpec((L, 1, H), c3),
        pl.BlockSpec((L, H, I), c3), pl.BlockSpec((L, 1, I), c3),
        pl.BlockSpec((L, I, H), c3), pl.BlockSpec((L, 1, H), c3),
        pl.BlockSpec((L, 1, H), c3), pl.BlockSpec((L, 1, H), c3),
        pl.BlockSpec((H, H), c2), pl.BlockSpec((1, H), c2),       # pooler
        pl.BlockSpec((H, H), c2), pl.BlockSpec((H, H), c2), pl.BlockSpec((H, H), c2),
        pl.BlockSpec((1, H), c2),
        pl.BlockSpec((H, NUM_CLASSES), c2), pl.BlockSpec((1, NUM_CLASSES), c2),
        pl.BlockSpec((1, 1, NUM_CLASSES), lambda pid: (pid, 0, 0)),  # onehot label
    ]
    out_specs = (pl.BlockSpec((1, 1, NUM_CLASSES), lambda pid: (pid, 0, 0)),
                 pl.BlockSpec((1, 1, 1), lambda pid: (pid, 0, 0)))
    out_shape = (jax.ShapeDtypeStruct((n_pairs, 1, NUM_CLASSES), jnp.float32),
                 jax.ShapeDtypeStruct((n_pairs, 1, 1), jnp.float32))
    return pl.pallas_call(
        functools.partial(_fused_forward_kernel, num_layers=L, num_heads=NH,
                          head_dim=DH, seq_len=S, eps=EPS),
        grid=(n_pairs,),
        in_specs=in_specs,
        out_specs=out_specs,
        out_shape=out_shape,
        compiler_params=_PAR,
    )(x_flat, mask_pairs,
      p["emb_ln_g"], p["emb_ln_b"],
      p["wqkv"], p["bqkv"], p["wo"], p["bo"], p["ln1_g"], p["ln1_b"],
      p["w1"], p["b1"], p["w2"], p["b2"], p["ln2_g"], p["ln2_b"],
      p["pool_w"], p["pool_b"],
      p["mlp_w1a"], p["mlp_w1b"], p["mlp_w1c"], p["mlp_b1"],
      p["mlp_w2"], p["mlp_b2"],
      onehot)


# ------------------------------ parameters -----------------------------------
def init_params(key):
    keys = iter(jax.random.split(key, 64))
    WDT = jnp.bfloat16          # matmul operands (MXU); biases / LN stay f32

    def nrm(shape, std=0.02, dtype=jnp.float32):
        return (jax.random.normal(next(keys), shape, jnp.float32) * std).astype(dtype)

    def xavier_normal(shape):   # matches torch.nn.init.xavier_normal_
        fan_in, fan_out = shape
        std = (2.0 / (fan_in + fan_out)) ** 0.5
        return jax.random.normal(next(keys), shape, jnp.float32) * std

    w1_full = xavier_normal((3 * H, H))
    p = {
        "word_emb": nrm((VOCAB, H)),
        "pos_emb": nrm((MAX_POS, H)),
        "type_emb": nrm((TYPE_VOCAB, H)),
        "emb_ln_g": jnp.ones((1, H), jnp.float32),
        "emb_ln_b": jnp.zeros((1, H), jnp.float32),
        "pool_w": nrm((H, H), dtype=WDT),
        "pool_b": jnp.zeros((1, H), jnp.float32),
        # W1 of nn.Linear(3H, H) pre-sliced into the a / b / |a-b| pieces
        "mlp_w1a": w1_full[:H].astype(WDT),
        "mlp_w1b": w1_full[H:2 * H].astype(WDT),
        "mlp_w1c": w1_full[2 * H:].astype(WDT),
        "mlp_b1": jnp.zeros((1, H), jnp.float32),
        "mlp_w2": xavier_normal((H, NUM_CLASSES)).astype(WDT),
        "mlp_b2": jnp.zeros((1, NUM_CLASSES), jnp.float32),
        # per-layer encoder weights stacked along a leading L axis
        "wqkv": jnp.stack([nrm((H, 3 * H), dtype=WDT) for _ in range(L)]),
        "bqkv": jnp.zeros((L, 1, 3 * H), jnp.float32),
        "wo": jnp.stack([nrm((H, H), dtype=WDT) for _ in range(L)]),
        "bo": jnp.zeros((L, 1, H), jnp.float32),
        "ln1_g": jnp.ones((L, 1, H), jnp.float32),
        "ln1_b": jnp.zeros((L, 1, H), jnp.float32),
        "w1": jnp.stack([nrm((H, I), dtype=WDT) for _ in range(L)]),
        "b1": jnp.zeros((L, 1, I), jnp.float32),
        "w2": jnp.stack([nrm((I, H), dtype=WDT) for _ in range(L)]),
        "b2": jnp.zeros((L, 1, H), jnp.float32),
        "ln2_g": jnp.ones((L, 1, H), jnp.float32),
        "ln2_b": jnp.zeros((L, 1, H), jnp.float32),
    }
    return p


# ------------------------------ forward ---------------------------------------
def bert_classification_forward(params, sent_a_id, sent_a_attn, sent_a_type,
                                sent_b_id, sent_b_attn, sent_b_type, y_label):
    # Embedding gathers stay in JAX (tiny glue); everything else is one kernel.
    pos = params["pos_emb"][:S][None, :, :]
    xa = params["word_emb"][sent_a_id] + pos + params["type_emb"][sent_a_type]
    xb = params["word_emb"][sent_b_id] + pos + params["type_emb"][sent_b_type]
    # Pair-interleave so each grid block holds one (sentence A, sentence B) pair.
    x_flat = jnp.stack([xa, xb], axis=1).reshape(2 * B * S, H).astype(jnp.float32)
    mask_pairs = jnp.stack([sent_a_attn, sent_b_attn], axis=1).astype(jnp.int32)  # (B,2,S)
    onehot = jax.nn.one_hot(y_label, NUM_CLASSES,
                            dtype=jnp.float32).reshape(B, 1, NUM_CLASSES)

    logits3, nll3 = pallas_fused_forward(x_flat, mask_pairs, onehot, params)
    logits = logits3.reshape(B, NUM_CLASSES)
    loss = jnp.sum(nll3) / B          # CrossEntropyLoss mean reduction
    return logits, loss


# ------------------------------------ main ------------------------------------
if __name__ == "__main__":
    key = jax.random.PRNGKey(0)
    pkey, ka, kb, kl = jax.random.split(key, 4)
    params = init_params(pkey)

    sent_a_id = jax.random.randint(ka, (B, S), 0, VOCAB, dtype=jnp.int32)
    sent_b_id = jax.random.randint(kb, (B, S), 0, VOCAB, dtype=jnp.int32)
    sent_a_attn = jnp.ones((B, S), jnp.int32)
    sent_b_attn = jnp.ones((B, S), jnp.int32).at[:, S - 2:].set(0)  # padded tail
    sent_a_type = jnp.zeros((B, S), jnp.int32)
    sent_b_type = jnp.zeros((B, S), jnp.int32)
    y_label = jax.random.randint(kl, (B,), 0, NUM_CLASSES, dtype=jnp.int32)

    fwd = jax.jit(bert_classification_forward)
    logits, loss = fwd(params, sent_a_id, sent_a_attn, sent_a_type,
                       sent_b_id, sent_b_attn, sent_b_type, y_label)
    jax.block_until_ready((logits, loss))
    assert logits.shape == (B, NUM_CLASSES)
    assert loss.shape == ()
    print("KERNEL_OK")
</pallas_src>

<mosaic_0001>
module attributes {stable_mosaic.version = 11 : i64} {
  func.func @_fused_forward_kernel(%arg0: i32, %arg1: memref<16x128xf32, #tpu.memory_space<vmem>>, %arg2: memref<1x2x8xi32, #tpu.memory_space<vmem>>, %arg3: memref<1x128xf32, #tpu.memory_space<vmem>>, %arg4: memref<1x128xf32, #tpu.memory_space<vmem>>, %arg5: memref<2x128x384xbf16, #tpu.memory_space<vmem>>, %arg6: memref<2x1x384xf32, #tpu.memory_space<vmem>>, %arg7: memref<2x128x128xbf16, #tpu.memory_space<vmem>>, %arg8: memref<2x1x128xf32, #tpu.memory_space<vmem>>, %arg9: memref<2x1x128xf32, #tpu.memory_space<vmem>>, %arg10: memref<2x1x128xf32, #tpu.memory_space<vmem>>, %arg11: memref<2x128x256xbf16, #tpu.memory_space<vmem>>, %arg12: memref<2x1x256xf32, #tpu.memory_space<vmem>>, %arg13: memref<2x256x128xbf16, #tpu.memory_space<vmem>>, %arg14: memref<2x1x128xf32, #tpu.memory_space<vmem>>, %arg15: memref<2x1x128xf32, #tpu.memory_space<vmem>>, %arg16: memref<2x1x128xf32, #tpu.memory_space<vmem>>, %arg17: memref<128x128xbf16, #tpu.memory_space<vmem>>, %arg18: memref<1x128xf32, #tpu.memory_space<vmem>>, %arg19: memref<128x128xbf16, #tpu.memory_space<vmem>>, %arg20: memref<128x128xbf16, #tpu.memory_space<vmem>>, %arg21: memref<128x128xbf16, #tpu.memory_space<vmem>>, %arg22: memref<1x128xf32, #tpu.memory_space<vmem>>, %arg23: memref<128x2xbf16, #tpu.memory_space<vmem>>, %arg24: memref<1x2xf32, #tpu.memory_space<vmem>>, %arg25: memref<1x1x2xf32, #tpu.memory_space<vmem>>, %arg26: memref<1x1x2xf32, #tpu.memory_space<vmem>>, %arg27: memref<1x1x1xf32, #tpu.memory_space<vmem>>) attributes {dimension_semantics = [#tpu.dimension_semantics<parallel>], iteration_bounds = array<i64: 2>, scalar_prefetch = 0 : i64, scratch_operands = 0 : i64, tpu.core_type = #tpu.core_type<tc>, window_params = [{transform_indices = @transform_0, window_bounds = array<i64: 16, 128>}, {transform_indices = @transform_1, window_bounds = array<i64: 1, 2, 8>}, {pipeline_mode = #tpu.pipeline_mode<synchronous>, transform_indices = @transform_2, window_bounds = array<i64: 1, 128>}, {pipeline_mode = #tpu.pipeline_mode<synchronous>, transform_indices = @transform_3, window_bounds = array<i64: 1, 128>}, {pipeline_mode = #tpu.pipeline_mode<synchronous>, transform_indices = @transform_4, window_bounds = array<i64: 2, 128, 384>}, {pipeline_mode = #tpu.pipeline_mode<synchronous>, transform_indices = @transform_5, window_bounds = array<i64: 2, 1, 384>}, {pipeline_mode = #tpu.pipeline_mode<synchronous>, transform_indices = @transform_6, window_bounds = array<i64: 2, 128, 128>}, {pipeline_mode = #tpu.pipeline_mode<synchronous>, transform_indices = @transform_7, window_bounds = array<i64: 2, 1, 128>}, {pipeline_mode = #tpu.pipeline_mode<synchronous>, transform_indices = @transform_8, window_bounds = array<i64: 2, 1, 128>}, {pipeline_mode = #tpu.pipeline_mode<synchronous>, transform_indices = @transform_9, window_bounds = array<i64: 2, 1, 128>}, {pipeline_mode = #tpu.pipeline_mode<synchronous>, transform_indices = @transform_10, window_bounds = array<i64: 2, 128, 256>}, {pipeline_mode = #tpu.pipeline_mode<synchronous>, transform_indices = @transform_11, window_bounds = array<i64: 2, 1, 256>}, {pipeline_mode = #tpu.pipeline_mode<synchronous>, transform_indices = @transform_12, window_bounds = array<i64: 2, 256, 128>}, {pipeline_mode = #tpu.pipeline_mode<synchronous>, transform_indices = @transform_13, window_bounds = array<i64: 2, 1, 128>}, {pipeline_mode = #tpu.pipeline_mode<synchronous>, transform_indices = @transform_14, window_bounds = array<i64: 2, 1, 128>}, {pipeline_mode = #tpu.pipeline_mode<synchronous>, transform_indices = @transform_15, window_bounds = array<i64: 2, 1, 128>}, {pipeline_mode = #tpu.pipeline_mode<synchronous>, transform_indices = @transform_16, window_bounds = array<i64: 128, 128>}, {pipeline_mode = #tpu.pipeline_mode<synchronous>, transform_indices = @transform_17, window_bounds = array<i64: 1, 128>}, {pipeline_mode = #tpu.pipeline_mode<synchronous>, transform_indices = @transform_18, window_bounds = array<i64: 128, 128>}, {pipeline_mode = #tpu.pipeline_mode<synchronous>, transform_indices = @transform_19, window_bounds = array<i64: 128, 128>}, {pipeline_mode = #tpu.pipeline_mode<synchronous>, transform_indices = @transform_20, window_bounds = array<i64: 128, 128>}, {pipeline_mode = #tpu.pipeline_mode<synchronous>, transform_indices = @transform_21, window_bounds = array<i64: 1, 128>}, {pipeline_mode = #tpu.pipeline_mode<synchronous>, transform_indices = @transform_22, window_bounds = array<i64: 128, 2>}, {pipeline_mode = #tpu.pipeline_mode<synchronous>, transform_indices = @transform_23, window_bounds = array<i64: 1, 2>}, {transform_indices = @transform_24, window_bounds = array<i64: 1, 1, 2>}, {transform_indices = @transform_25, window_bounds = array<i64: 1, 1, 2>}, {transform_indices = @transform_26, window_bounds = array<i64: 1, 1, 1>}]} {
    %c0 = arith.constant 0 : index
    %c0_0 = arith.constant 0 : index
    %0 = vector.load %arg1[%c0, %c0_0] : memref<16x128xf32, #tpu.memory_space<vmem>>, vector<16x128xf32>
    %c0_1 = arith.constant 0 : index
    %c0_2 = arith.constant 0 : index
    %1 = vector.load %arg3[%c0_1, %c0_2] : memref<1x128xf32, #tpu.memory_space<vmem>>, vector<1x128xf32>
    %c0_3 = arith.constant 0 : index
    %c0_4 = arith.constant 0 : index
    %2 = vector.load %arg4[%c0_3, %c0_4] : memref<1x128xf32, #tpu.memory_space<vmem>>, vector<1x128xf32>
    %cst = arith.constant dense<0.000000e+00> : vector<16xf32>
    %3 = vector.multi_reduction <add>, %0, %cst [1] : vector<16x128xf32> to vector<16xf32>
    %4 = vector.shape_cast %3 : vector<16xf32> to vector<16x1xf32>
    %cst_5 = arith.constant 1.280000e+02 : f32
    %5 = vector.broadcast %cst_5 : f32 to vector<16x1xf32>
    %6 = arith.divf %4, %5 : vector<16x1xf32>
    %7 = vector.broadcast %6 : vector<16x1xf32> to vector<16x128xf32>
    %8 = arith.subf %0, %7 : vector<16x128xf32>
    %9 = arith.mulf %8, %8 : vector<16x128xf32>
    %cst_6 = arith.constant dense<0.000000e+00> : vector<16xf32>
    %10 = vector.multi_reduction <add>, %9, %cst_6 [1] : vector<16x128xf32> to vector<16xf32>
    %11 = vector.shape_cast %10 : vector<16xf32> to vector<16x1xf32>
    %cst_7 = arith.constant 1.280000e+02 : f32
    %12 = vector.broadcast %cst_7 : f32 to vector<16x1xf32>
    %13 = arith.divf %11, %12 : vector<16x1xf32>
    %14 = vector.broadcast %6 : vector<16x1xf32> to vector<16x128xf32>
    %15 = arith.subf %0, %14 : vector<16x128xf32>
    %cst_8 = arith.constant 9.99999996E-13 : f32
    %16 = vector.broadcast %cst_8 : f32 to vector<16x1xf32>
    %17 = arith.addf %13, %16 : vector<16x1xf32>
    %18 = math.rsqrt %17 : vector<16x1xf32>
    %19 = vector.broadcast %18 : vector<16x1xf32> to vector<16x128xf32>
    %20 = arith.mulf %15, %19 : vector<16x128xf32>
    %21 = vector.broadcast %1 : vector<1x128xf32> to vector<16x128xf32>
    %22 = arith.mulf %20, %21 : vector<16x128xf32>
    %23 = vector.broadcast %2 : vector<1x128xf32> to vector<16x128xf32>
    %24 = arith.addf %22, %23 : vector<16x128xf32>
    %c0_9 = arith.constant 0 : index
    %c0_10 = arith.constant 0 : index
    %c0_11 = arith.constant 0 : index
    %25 = vector.load %arg2[%c0_9, %c0_10, %c0_11] : memref<1x2x8xi32, #tpu.memory_space<vmem>>, vector<1x2x8xi32>
    %26 = vector.shape_cast %25 : vector<1x2x8xi32> to vector<2x8xi32>
    %27 = arith.sitofp %26 : vector<2x8xi32> to vector<2x8xf32>
    %cst_12 = arith.constant 1.000000e+00 : f32
    %28 = vector.broadcast %cst_12 : f32 to vector<2x8xf32>
    %29 = arith.subf %28, %27 : vector<2x8xf32>
    %cst_13 = arith.constant -1.000000e+09 : f32
    %30 = vector.broadcast %cst_13 : f32 to vector<2x8xf32>
    %31 = arith.mulf %29, %30 : vector<2x8xf32>
    %c0_14 = arith.constant 0 : index
    %c0_15 = arith.constant 0 : index
    %c0_16 = arith.constant 0 : index
    %32 = vector.load %arg5[%c0_14, %c0_15, %c0_16] : memref<2x128x384xbf16, #tpu.memory_space<vmem>>, vector<1x128x384xbf16>
    %33 = vector.shape_cast %32 : vector<1x128x384xbf16> to vector<128x384xbf16>
    %c0_17 = arith.constant 0 : index
    %c0_18 = arith.constant 0 : index
    %c0_19 = arith.constant 0 : index
    %34 = vector.load %arg7[%c0_17, %c0_18, %c0_19] : memref<2x128x128xbf16, #tpu.memory_space<vmem>>, vector<1x128x128xbf16>
    %35 = vector.shape_cast %34 : vector<1x128x128xbf16> to vector<128x128xbf16>
    %36 = arith.truncf %24 : vector<16x128xf32> to vector<16x128xbf16>
    %cst_20 = arith.constant dense<0.000000e+00> : vector<16x384xf32>
    %37 = tpu.matmul %36, %33, %cst_20 {dimension_numbers = #tpu.dot_dimension_numbers<[1], [0], [0], [1], [0, 0, 1, 1], [], []>} : vector<16x128xbf16>, vector<128x384xbf16>, vector<16x384xf32> -> vector<16x384xf32>
    %c0_21 = arith.constant 0 : index
    %c0_22 = arith.constant 0 : index
    %c0_23 = arith.constant 0 : index
    %38 = vector.load %arg6[%c0_21, %c0_22, %c0_23] : memref<2x1x384xf32, #tpu.memory_space<vmem>>, vector<1x1x384xf32>
    %39 = vector.shape_cast %38 : vector<1x1x384xf32> to vector<1x384xf32>
    %40 = vector.broadcast %39 : vector<1x384xf32> to vector<16x384xf32>
    %41 = arith.addf %37, %40 : vector<16x384xf32>
    %42 = vector.extract_strided_slice %41 {offsets = [0, 0], sizes = [16, 128], strides = [1, 1]} : vector<16x384xf32> to vector<16x128xf32>
    %43 = vector.extract_strided_slice %41 {offsets = [0, 128], sizes = [16, 128], strides = [1, 1]} : vector<16x384xf32> to vector<16x128xf32>
    %44 = vector.extract_strided_slice %41 {offsets = [0, 256], sizes = [16, 128], strides = [1, 1]} : vector<16x384xf32> to vector<16x128xf32>
    %45 = vector.extract_strided_slice %42 {offsets = [0, 0], sizes = [16, 64], strides = [1, 1]} : vector<16x128xf32> to vector<16x64xf32>
    %46 = arith.truncf %45 : vector<16x64xf32> to vector<16x64xbf16>
    %47 = vector.extract_strided_slice %43 {offsets = [0, 0], sizes = [16, 64], strides = [1, 1]} : vector<16x128xf32> to vector<16x64xf32>
    %48 = arith.truncf %47 : vector<16x64xf32> to vector<16x64xbf16>
    %49 = vector.extract_strided_slice %44 {offsets = [0, 0], sizes = [16, 64], strides = [1, 1]} : vector<16x128xf32> to vector<16x64xf32>
    %50 = arith.truncf %49 : vector<16x64xf32> to vector<16x64xbf16>
    %51 = vector.extract_strided_slice %46 {offsets = [0, 0], sizes = [8, 64], strides = [1, 1]} : vector<16x64xbf16> to vector<8x64xbf16>
    %52 = vector.extract_strided_slice %48 {offsets = [0, 0], sizes = [8, 64], strides = [1, 1]} : vector<16x64xbf16> to vector<8x64xbf16>
    %cst_24 = arith.constant dense<0.000000e+00> : vector<8x8xf32>
    %53 = tpu.matmul %51, %52, %cst_24 {dimension_numbers = #tpu.dot_dimension_numbers<[1], [1], [0], [0], [0, 0, 1, 0], [], []>} : vector<8x64xbf16>, vector<8x64xbf16>, vector<8x8xf32> -> vector<8x8xf32>
    %cst_25 = arith.constant 1.250000e-01 : f32
    %54 = vector.broadcast %cst_25 : f32 to vector<8x8xf32>
    %55 = arith.mulf %53, %54 : vector<8x8xf32>
    %56 = vector.extract_strided_slice %31 {offsets = [0, 0], sizes = [1, 8], strides = [1, 1]} : vector<2x8xf32> to vector<1x8xf32>
    %57 = vector.broadcast %56 : vector<1x8xf32> to vector<8x8xf32>
    %58 = arith.addf %55, %57 : vector<8x8xf32>
    %cst_26 = arith.constant dense<0xFF800000> : vector<8xf32>
    %59 = vector.multi_reduction <maximumf>, %58, %cst_26 [1] : vector<8x8xf32> to vector<8xf32>
    %60 = vector.shape_cast %59 : vector<8xf32> to vector<8x1xf32>
    %61 = vector.broadcast %60 : vector<8x1xf32> to vector<8x8xf32>
    %62 = arith.subf %58, %61 : vector<8x8xf32>
    %63 = math.exp %62 : vector<8x8xf32>
    %cst_27 = arith.constant dense<0.000000e+00> : vector<8xf32>
    %64 = vector.multi_reduction <add>, %63, %cst_27 [1] : vector<8x8xf32> to vector<8xf32>
    %65 = vector.shape_cast %64 : vector<8xf32> to vector<8x1xf32>
    %66 = tpu.reciprocal %65 {approx = true} : vector<8x1xf32> -> vector<8x1xf32>
    %67 = vector.broadcast %66 : vector<8x1xf32> to vector<8x8xf32>
    %68 = arith.mulf %63, %67 : vector<8x8xf32>
    %69 = arith.truncf %68 : vector<8x8xf32> to vector<8x8xbf16>
    %70 = vector.extract_strided_slice %50 {offsets = [0, 0], sizes = [8, 64], strides = [1, 1]} : vector<16x64xbf16> to vector<8x64xbf16>
    %cst_28 = arith.constant dense<0.000000e+00> : vector<8x64xf32>
    %71 = tpu.matmul %69, %70, %cst_28 {dimension_numbers = #tpu.dot_dimension_numbers<[1], [0], [0], [1], [0, 0, 1, 1], [], []>} : vector<8x8xbf16>, vector<8x64xbf16>, vector<8x64xf32> -> vector<8x64xf32>
    %72 = vector.extract_strided_slice %46 {offsets = [8, 0], sizes = [8, 64], strides = [1, 1]} : vector<16x64xbf16> to vector<8x64xbf16>
    %73 = vector.extract_strided_slice %48 {offsets = [8, 0], sizes = [8, 64], strides = [1, 1]} : vector<16x64xbf16> to vector<8x64xbf16>
    %cst_29 = arith.constant dense<0.000000e+00> : vector<8x8xf32>
    %74 = tpu.matmul %72, %73, %cst_29 {dimension_numbers = #tpu.dot_dimension_numbers<[1], [1], [0], [0], [0, 0, 1, 0], [], []>} : vector<8x64xbf16>, vector<8x64xbf16>, vector<8x8xf32> -> vector<8x8xf32>
    %cst_30 = arith.constant 1.250000e-01 : f32
    %75 = vector.broadcast %cst_30 : f32 to vector<8x8xf32>
    %76 = arith.mulf %74, %75 : vector<8x8xf32>
    %77 = vector.extract_strided_slice %31 {offsets = [1, 0], sizes = [1, 8], strides = [1, 1]} : vector<2x8xf32> to vector<1x8xf32>
    %78 = vector.broadcast %77 : vector<1x8xf32> to vector<8x8xf32>
    %79 = arith.addf %76, %78 : vector<8x8xf32>
    %cst_31 = arith.constant dense<0xFF800000> : vector<8xf32>
    %80 = vector.multi_reduction <maximumf>, %79, %cst_31 [1] : vector<8x8xf32> to vector<8xf32>
    %81 = vector.shape_cast %80 : vector<8xf32> to vector<8x1xf32>
    %82 = vector.broadcast %81 : vector<8x1xf32> to vector<8x8xf32>
    %83 = arith.subf %79, %82 : vector<8x8xf32>
    %84 = math.exp %83 : vector<8x8xf32>
    %cst_32 = arith.constant dense<0.000000e+00> : vector<8xf32>
    %85 = vector.multi_reduction <add>, %84, %cst_32 [1] : vector<8x8xf32> to vector<8xf32>
    %86 = vector.shape_cast %85 : vector<8xf32> to vector<8x1xf32>
    %87 = tpu.reciprocal %86 {approx = true} : vector<8x1xf32> -> vector<8x1xf32>
    %88 = vector.broadcast %87 : vector<8x1xf32> to vector<8x8xf32>
    %89 = arith.mulf %84, %88 : vector<8x8xf32>
    %90 = arith.truncf %89 : vector<8x8xf32> to vector<8x8xbf16>
    %91 = vector.extract_strided_slice %50 {offsets = [8, 0], sizes = [8, 64], strides = [1, 1]} : vector<16x64xbf16> to vector<8x64xbf16>
    %cst_33 = arith.constant dense<0.000000e+00> : vector<8x64xf32>
    %92 = tpu.matmul %90, %91, %cst_33 {dimension_numbers = #tpu.dot_dimension_numbers<[1], [0], [0], [1], [0, 0, 1, 1], [], []>} : vector<8x8xbf16>, vector<8x64xbf16>, vector<8x64xf32> -> vector<8x64xf32>
    %93 = tpu.concatenate %71, %92 in 0 : vector<8x64xf32>, vector<8x64xf32> -> vector<16x64xf32>
    %94 = arith.truncf %93 : vector<16x64xf32> to vector<16x64xbf16>
    %95 = vector.extract_strided_slice %35 {offsets = [0, 0], sizes = [64, 128], strides = [1, 1]} : vector<128x128xbf16> to vector<64x128xbf16>
    %cst_34 = arith.constant dense<0.000000e+00> : vector<16x128xf32>
    %96 = tpu.matmul %94, %95, %cst_34 {dimension_numbers = #tpu.dot_dimension_numbers<[1], [0], [0], [1], [0, 0, 1, 1], [], []>} : vector<16x64xbf16>, vector<64x128xbf16>, vector<16x128xf32> -> vector<16x128xf32>
    %97 = vector.extract_strided_slice %42 {offsets = [0, 64], sizes = [16, 64], strides = [1, 1]} : vector<16x128xf32> to vector<16x64xf32>
    %98 = arith.truncf %97 : vector<16x64xf32> to vector<16x64xbf16>
    %99 = vector.extract_strided_slice %43 {offsets = [0, 64], sizes = [16, 64], strides = [1, 1]} : vector<16x128xf32> to vector<16x64xf32>
    %100 = arith.truncf %99 : vector<16x64xf32> to vector<16x64xbf16>
    %101 = vector.extract_strided_slice %44 {offsets = [0, 64], sizes = [16, 64], strides = [1, 1]} : vector<16x128xf32> to vector<16x64xf32>
    %102 = arith.truncf %101 : vector<16x64xf32> to vector<16x64xbf16>
    %103 = vector.extract_strided_slice %98 {offsets = [0, 0], sizes = [8, 64], strides = [1, 1]} : vector<16x64xbf16> to vector<8x64xbf16>
    %104 = vector.extract_strided_slice %100 {offsets = [0, 0], sizes = [8, 64], strides = [1, 1]} : vector<16x64xbf16> to vector<8x64xbf16>
    %cst_35 = arith.constant dense<0.000000e+00> : vector<8x8xf32>
    %105 = tpu.matmul %103, %104, %cst_35 {dimension_numbers = #tpu.dot_dimension_numbers<[1], [1], [0], [0], [0, 0, 1, 0], [], []>} : vector<8x64xbf16>, vector<8x64xbf16>, vector<8x8xf32> -> vector<8x8xf32>
    %cst_36 = arith.constant 1.250000e-01 : f32
    %106 = vector.broadcast %cst_36 : f32 to vector<8x8xf32>
    %107 = arith.mulf %105, %106 : vector<8x8xf32>
    %108 = vector.extract_strided_slice %31 {offsets = [0, 0], sizes = [1, 8], strides = [1, 1]} : vector<2x8xf32> to vector<1x8xf32>
    %109 = vector.broadcast %108 : vector<1x8xf32> to vector<8x8xf32>
    %110 = arith.addf %107, %109 : vector<8x8xf32>
    %cst_37 = arith.constant dense<0xFF800000> : vector<8xf32>
    %111 = vector.multi_reduction <maximumf>, %110, %cst_37 [1] : vector<8x8xf32> to vector<8xf32>
    %112 = vector.shape_cast %111 : vector<8xf32> to vector<8x1xf32>
    %113 = vector.broadcast %112 : vector<8x1xf32> to vector<8x8xf32>
    %114 = arith.subf %110, %113 : vector<8x8xf32>
    %115 = math.exp %114 : vector<8x8xf32>
    %cst_38 = arith.constant dense<0.000000e+00> : vector<8xf32>
    %116 = vector.multi_reduction <add>, %115, %cst_38 [1] : vector<8x8xf32> to vector<8xf32>
    %117 = vector.shape_cast %116 : vector<8xf32> to vector<8x1xf32>
    %118 = tpu.reciprocal %117 {approx = true} : vector<8x1xf32> -> vector<8x1xf32>
    %119 = vector.broadcast %118 : vector<8x1xf32> to vector<8x8xf32>
    %120 = arith.mulf %115, %119 : vector<8x8xf32>
    %121 = arith.truncf %120 : vector<8x8xf32> to vector<8x8xbf16>
    %122 = vector.extract_strided_slice %102 {offsets = [0, 0], sizes = [8, 64], strides = [1, 1]} : vector<16x64xbf16> to vector<8x64xbf16>
    %cst_39 = arith.constant dense<0.000000e+00> : vector<8x64xf32>
    %123 = tpu.matmul %121, %122, %cst_39 {dimension_numbers = #tpu.dot_dimension_numbers<[1], [0], [0], [1], [0, 0, 1, 1], [], []>} : vector<8x8xbf16>, vector<8x64xbf16>, vector<8x64xf32> -> vector<8x64xf32>
    %124 = vector.extract_strided_slice %98 {offsets = [8, 0], sizes = [8, 64], strides = [1, 1]} : vector<16x64xbf16> to vector<8x64xbf16>
    %125 = vector.extract_strided_slice %100 {offsets = [8, 0], sizes = [8, 64], strides = [1, 1]} : vector<16x64xbf16> to vector<8x64xbf16>
    %cst_40 = arith.constant dense<0.000000e+00> : vector<8x8xf32>
    %126 = tpu.matmul %124, %125, %cst_40 {dimension_numbers = #tpu.dot_dimension_numbers<[1], [1], [0], [0], [0, 0, 1, 0], [], []>} : vector<8x64xbf16>, vector<8x64xbf16>, vector<8x8xf32> -> vector<8x8xf32>
    %cst_41 = arith.constant 1.250000e-01 : f32
    %127 = vector.broadcast %cst_41 : f32 to vector<8x8xf32>
    %128 = arith.mulf %126, %127 : vector<8x8xf32>
    %129 = vector.extract_strided_slice %31 {offsets = [1, 0], sizes = [1, 8], strides = [1, 1]} : vector<2x8xf32> to vector<1x8xf32>
    %130 = vector.broadcast %129 : vector<1x8xf32> to vector<8x8xf32>
    %131 = arith.addf %128, %130 : vector<8x8xf32>
    %cst_42 = arith.constant dense<0xFF800000> : vector<8xf32>
    %132 = vector.multi_reduction <maximumf>, %131, %cst_42 [1] : vector<8x8xf32> to vector<8xf32>
    %133 = vector.shape_cast %132 : vector<8xf32> to vector<8x1xf32>
    %134 = vector.broadcast %133 : vector<8x1xf32> to vector<8x8xf32>
    %135 = arith.subf %131, %134 : vector<8x8xf32>
    %136 = math.exp %135 : vector<8x8xf32>
    %cst_43 = arith.constant dense<0.000000e+00> : vector<8xf32>
    %137 = vector.multi_reduction <add>, %136, %cst_43 [1] : vector<8x8xf32> to vector<8xf32>
    %138 = vector.shape_cast %137 : vector<8xf32> to vector<8x1xf32>
    %139 = tpu.reciprocal %138 {approx = true} : vector<8x1xf32> -> vector<8x1xf32>
    %140 = vector.broadcast %139 : vector<8x1xf32> to vector<8x8xf32>
    %141 = arith.mulf %136, %140 : vector<8x8xf32>
    %142 = arith.truncf %141 : vector<8x8xf32> to vector<8x8xbf16>
    %143 = vector.extract_strided_slice %102 {offsets = [8, 0], sizes = [8, 64], strides = [1, 1]} : vector<16x64xbf16> to vector<8x64xbf16>
    %cst_44 = arith.constant dense<0.000000e+00> : vector<8x64xf32>
    %144 = tpu.matmul %142, %143, %cst_44 {dimension_numbers = #tpu.dot_dimension_numbers<[1], [0], [0], [1], [0, 0, 1, 1], [], []>} : vector<8x8xbf16>, vector<8x64xbf16>, vector<8x64xf32> -> vector<8x64xf32>
    %145 = tpu.concatenate %123, %144 in 0 : vector<8x64xf32>, vector<8x64xf32> -> vector<16x64xf32>
    %146 = arith.truncf %145 : vector<16x64xf32> to vector<16x64xbf16>
    %147 = vector.extract_strided_slice %35 {offsets = [64, 0], sizes = [64, 128], strides = [1, 1]} : vector<128x128xbf16> to vector<64x128xbf16>
    %cst_45 = arith.constant dense<0.000000e+00> : vector<16x128xf32>
    %148 = tpu.matmul %146, %147, %cst_45 {dimension_numbers = #tpu.dot_dimension_numbers<[1], [0], [0], [1], [0, 0, 1, 1], [], []>} : vector<16x64xbf16>, vector<64x128xbf16>, vector<16x128xf32> -> vector<16x128xf32>
    %149 = arith.addf %96, %148 : vector<16x128xf32>
    %c0_46 = arith.constant 0 : index
    %c0_47 = arith.constant 0 : index
    %c0_48 = arith.constant 0 : index
    %150 = vector.load %arg8[%c0_46, %c0_47, %c0_48] : memref<2x1x128xf32, #tpu.memory_space<vmem>>, vector<1x1x128xf32>
    %151 = vector.shape_cast %150 : vector<1x1x128xf32> to vector<1x128xf32>
    %152 = vector.broadcast %151 : vector<1x128xf32> to vector<16x128xf32>
    %153 = arith.addf %149, %152 : vector<16x128xf32>
    %154 = arith.addf %153, %24 : vector<16x128xf32>
    %c0_49 = arith.constant 0 : index
    %c0_50 = arith.constant 0 : index
    %c0_51 = arith.constant 0 : index
    %155 = vector.load %arg9[%c0_49, %c0_50, %c0_51] : memref<2x1x128xf32, #tpu.memory_space<vmem>>, vector<1x1x128xf32>
    %156 = vector.shape_cast %155 : vector<1x1x128xf32> to vector<1x128xf32>
    %c0_52 = arith.constant 0 : index
    %c0_53 = arith.constant 0 : index
    %c0_54 = arith.constant 0 : index
    %157 = vector.load %arg10[%c0_52, %c0_53, %c0_54] : memref<2x1x128xf32, #tpu.memory_space<vmem>>, vector<1x1x128xf32>
    %158 = vector.shape_cast %157 : vector<1x1x128xf32> to vector<1x128xf32>
    %cst_55 = arith.constant dense<0.000000e+00> : vector<16xf32>
    %159 = vector.multi_reduction <add>, %154, %cst_55 [1] : vector<16x128xf32> to vector<16xf32>
    %160 = vector.shape_cast %159 : vector<16xf32> to vector<16x1xf32>
    %cst_56 = arith.constant 1.280000e+02 : f32
    %161 = vector.broadcast %cst_56 : f32 to vector<16x1xf32>
    %162 = arith.divf %160, %161 : vector<16x1xf32>
    %163 = vector.broadcast %162 : vector<16x1xf32> to vector<16x128xf32>
    %164 = arith.subf %154, %163 : vector<16x128xf32>
    %165 = arith.mulf %164, %164 : vector<16x128xf32>
    %cst_57 = arith.constant dense<0.000000e+00> : vector<16xf32>
    %166 = vector.multi_reduction <add>, %165, %cst_57 [1] : vector<16x128xf32> to vector<16xf32>
    %167 = vector.shape_cast %166 : vector<16xf32> to vector<16x1xf32>
    %cst_58 = arith.constant 1.280000e+02 : f32
    %168 = vector.broadcast %cst_58 : f32 to vector<16x1xf32>
    %169 = arith.divf %167, %168 : vector<16x1xf32>
    %170 = vector.broadcast %162 : vector<16x1xf32> to vector<16x128xf32>
    %171 = arith.subf %154, %170 : vector<16x128xf32>
    %cst_59 = arith.constant 9.99999996E-13 : f32
    %172 = vector.broadcast %cst_59 : f32 to vector<16x1xf32>
    %173 = arith.addf %169, %172 : vector<16x1xf32>
    %174 = math.rsqrt %173 : vector<16x1xf32>
    %175 = vector.broadcast %174 : vector<16x1xf32> to vector<16x128xf32>
    %176 = arith.mulf %171, %175 : vector<16x128xf32>
    %177 = vector.broadcast %156 : vector<1x128xf32> to vector<16x128xf32>
    %178 = arith.mulf %176, %177 : vector<16x128xf32>
    %179 = vector.broadcast %158 : vector<1x128xf32> to vector<16x128xf32>
    %180 = arith.addf %178, %179 : vector<16x128xf32>
    %181 = arith.truncf %180 : vector<16x128xf32> to vector<16x128xbf16>
    %c0_60 = arith.constant 0 : index
    %c0_61 = arith.constant 0 : index
    %c0_62 = arith.constant 0 : index
    %182 = vector.load %arg11[%c0_60, %c0_61, %c0_62] : memref<2x128x256xbf16, #tpu.memory_space<vmem>>, vector<1x128x256xbf16>
    %183 = vector.shape_cast %182 : vector<1x128x256xbf16> to vector<128x256xbf16>
    %cst_63 = arith.constant dense<0.000000e+00> : vector<16x256xf32>
    %184 = tpu.matmul %181, %183, %cst_63 {dimension_numbers = #tpu.dot_dimension_numbers<[1], [0], [0], [1], [0, 0, 1, 1], [], []>} : vector<16x128xbf16>, vector<128x256xbf16>, vector<16x256xf32> -> vector<16x256xf32>
    %c0_64 = arith.constant 0 : index
    %c0_65 = arith.constant 0 : index
    %c0_66 = arith.constant 0 : index
    %185 = vector.load %arg12[%c0_64, %c0_65, %c0_66] : memref<2x1x256xf32, #tpu.memory_space<vmem>>, vector<1x1x256xf32>
    %186 = vector.shape_cast %185 : vector<1x1x256xf32> to vector<1x256xf32>
    %187 = vector.broadcast %186 : vector<1x256xf32> to vector<16x256xf32>
    %188 = arith.addf %184, %187 : vector<16x256xf32>
    %189 = arith.mulf %188, %188 : vector<16x256xf32>
    %190 = arith.mulf %188, %189 : vector<16x256xf32>
    %cst_67 = arith.constant 4.471500e-02 : f32
    %191 = vector.broadcast %cst_67 : f32 to vector<16x256xf32>
    %192 = arith.mulf %191, %190 : vector<16x256xf32>
    %193 = arith.addf %188, %192 : vector<16x256xf32>
    %cst_68 = arith.constant 0.797884583 : f32
    %194 = vector.broadcast %cst_68 : f32 to vector<16x256xf32>
    %195 = arith.mulf %194, %193 : vector<16x256xf32>
    %196 = math.tanh %195 : vector<16x256xf32>
    %cst_69 = arith.constant 1.000000e+00 : f32
    %197 = vector.broadcast %cst_69 : f32 to vector<16x256xf32>
    %198 = arith.addf %197, %196 : vector<16x256xf32>
    %cst_70 = arith.constant 5.000000e-01 : f32
    %199 = vector.broadcast %cst_70 : f32 to vector<16x256xf32>
    %200 = arith.mulf %199, %198 : vector<16x256xf32>
    %201 = arith.mulf %188, %200 : vector<16x256xf32>
    %202 = arith.truncf %201 : vector<16x256xf32> to vector<16x256xbf16>
    %c0_71 = arith.constant 0 : index
    %c0_72 = arith.constant 0 : index
    %c0_73 = arith.constant 0 : index
    %203 = vector.load %arg13[%c0_71, %c0_72, %c0_73] : memref<2x256x128xbf16, #tpu.memory_space<vmem>>, vector<1x256x128xbf16>
    %204 = vector.shape_cast %203 : vector<1x256x128xbf16> to vector<256x128xbf16>
    %cst_74 = arith.constant dense<0.000000e+00> : vector<16x128xf32>
    %205 = tpu.matmul %202, %204, %cst_74 {dimension_numbers = #tpu.dot_dimension_numbers<[1], [0], [0], [1], [0, 0, 1, 1], [], []>} : vector<16x256xbf16>, vector<256x128xbf16>, vector<16x128xf32> -> vector<16x128xf32>
    %c0_75 = arith.constant 0 : index
    %c0_76 = arith.constant 0 : index
    %c0_77 = arith.constant 0 : index
    %206 = vector.load %arg14[%c0_75, %c0_76, %c0_77] : memref<2x1x128xf32, #tpu.memory_space<vmem>>, vector<1x1x128xf32>
    %207 = vector.shape_cast %206 : vector<1x1x128xf32> to vector<1x128xf32>
    %208 = vector.broadcast %207 : vector<1x128xf32> to vector<16x128xf32>
    %209 = arith.addf %205, %208 : vector<16x128xf32>
    %210 = arith.addf %209, %180 : vector<16x128xf32>
    %c0_78 = arith.constant 0 : index
    %c0_79 = arith.constant 0 : index
    %c0_80 = arith.constant 0 : index
    %211 = vector.load %arg15[%c0_78, %c0_79, %c0_80] : memref<2x1x128xf32, #tpu.memory_space<vmem>>, vector<1x1x128xf32>
    %212 = vector.shape_cast %211 : vector<1x1x128xf32> to vector<1x128xf32>
    %c0_81 = arith.constant 0 : index
    %c0_82 = arith.constant 0 : index
    %c0_83 = arith.constant 0 : index
    %213 = vector.load %arg16[%c0_81, %c0_82, %c0_83] : memref<2x1x128xf32, #tpu.memory_space<vmem>>, vector<1x1x128xf32>
    %214 = vector.shape_cast %213 : vector<1x1x128xf32> to vector<1x128xf32>
    %cst_84 = arith.constant dense<0.000000e+00> : vector<16xf32>
    %215 = vector.multi_reduction <add>, %210, %cst_84 [1] : vector<16x128xf32> to vector<16xf32>
    %216 = vector.shape_cast %215 : vector<16xf32> to vector<16x1xf32>
    %cst_85 = arith.constant 1.280000e+02 : f32
    %217 = vector.broadcast %cst_85 : f32 to vector<16x1xf32>
    %218 = arith.divf %216, %217 : vector<16x1xf32>
    %219 = vector.broadcast %218 : vector<16x1xf32> to vector<16x128xf32>
    %220 = arith.subf %210, %219 : vector<16x128xf32>
    %221 = arith.mulf %220, %220 : vector<16x128xf32>
    %cst_86 = arith.constant dense<0.000000e+00> : vector<16xf32>
    %222 = vector.multi_reduction <add>, %221, %cst_86 [1] : vector<16x128xf32> to vector<16xf32>
    %223 = vector.shape_cast %222 : vector<16xf32> to vector<16x1xf32>
    %cst_87 = arith.constant 1.280000e+02 : f32
    %224 = vector.broadcast %cst_87 : f32 to vector<16x1xf32>
    %225 = arith.divf %223, %224 : vector<16x1xf32>
    %226 = vector.broadcast %218 : vector<16x1xf32> to vector<16x128xf32>
    %227 = arith.subf %210, %226 : vector<16x128xf32>
    %cst_88 = arith.constant 9.99999996E-13 : f32
    %228 = vector.broadcast %cst_88 : f32 to vector<16x1xf32>
    %229 = arith.addf %225, %228 : vector<16x1xf32>
    %230 = math.rsqrt %229 : vector<16x1xf32>
    %231 = vector.broadcast %230 : vector<16x1xf32> to vector<16x128xf32>
    %232 = arith.mulf %227, %231 : vector<16x128xf32>
    %233 = vector.broadcast %212 : vector<1x128xf32> to vector<16x128xf32>
    %234 = arith.mulf %232, %233 : vector<16x128xf32>
    %235 = vector.broadcast %214 : vector<1x128xf32> to vector<16x128xf32>
    %236 = arith.addf %234, %235 : vector<16x128xf32>
    %c1 = arith.constant 1 : index
    %c0_89 = arith.constant 0 : index
    %c0_90 = arith.constant 0 : index
    %237 = vector.load %arg5[%c1, %c0_89, %c0_90] : memref<2x128x384xbf16, #tpu.memory_space<vmem>>, vector<1x128x384xbf16>
    %238 = vector.shape_cast %237 : vector<1x128x384xbf16> to vector<128x384xbf16>
    %c1_91 = arith.constant 1 : index
    %c0_92 = arith.constant 0 : index
    %c0_93 = arith.constant 0 : index
    %239 = vector.load %arg7[%c1_91, %c0_92, %c0_93] : memref<2x128x128xbf16, #tpu.memory_space<vmem>>, vector<1x128x128xbf16>
    %240 = vector.shape_cast %239 : vector<1x128x128xbf16> to vector<128x128xbf16>
    %241 = arith.truncf %236 : vector<16x128xf32> to vector<16x128xbf16>
    %cst_94 = arith.constant dense<0.000000e+00> : vector<16x384xf32>
    %242 = tpu.matmul %241, %238, %cst_94 {dimension_numbers = #tpu.dot_dimension_numbers<[1], [0], [0], [1], [0, 0, 1, 1], [], []>} : vector<16x128xbf16>, vector<128x384xbf16>, vector<16x384xf32> -> vector<16x384xf32>
    %c1_95 = arith.constant 1 : index
    %c0_96 = arith.constant 0 : index
    %c0_97 = arith.constant 0 : index
    %243 = vector.load %arg6[%c1_95, %c0_96, %c0_97] : memref<2x1x384xf32, #tpu.memory_space<vmem>>, vector<1x1x384xf32>
    %244 = vector.shape_cast %243 : vector<1x1x384xf32> to vector<1x384xf32>
    %245 = vector.broadcast %244 : vector<1x384xf32> to vector<16x384xf32>
    %246 = arith.addf %242, %245 : vector<16x384xf32>
    %247 = vector.extract_strided_slice %246 {offsets = [0, 0], sizes = [16, 128], strides = [1, 1]} : vector<16x384xf32> to vector<16x128xf32>
    %248 = vector.extract_strided_slice %246 {offsets = [0, 128], sizes = [16, 128], strides = [1, 1]} : vector<16x384xf32> to vector<16x128xf32>
    %249 = vector.extract_strided_slice %246 {offsets = [0, 256], sizes = [16, 128], strides = [1, 1]} : vector<16x384xf32> to vector<16x128xf32>
    %250 = vector.extract_strided_slice %247 {offsets = [0, 0], sizes = [16, 64], strides = [1, 1]} : vector<16x128xf32> to vector<16x64xf32>
    %251 = arith.truncf %250 : vector<16x64xf32> to vector<16x64xbf16>
    %252 = vector.extract_strided_slice %248 {offsets = [0, 0], sizes = [16, 64], strides = [1, 1]} : vector<16x128xf32> to vector<16x64xf32>
    %253 = arith.truncf %252 : vector<16x64xf32> to vector<16x64xbf16>
    %254 = vector.extract_strided_slice %249 {offsets = [0, 0], sizes = [16, 64], strides = [1, 1]} : vector<16x128xf32> to vector<16x64xf32>
    %255 = arith.truncf %254 : vector<16x64xf32> to vector<16x64xbf16>
    %256 = vector.extract_strided_slice %251 {offsets = [0, 0], sizes = [8, 64], strides = [1, 1]} : vector<16x64xbf16> to vector<8x64xbf16>
    %257 = vector.extract_strided_slice %253 {offsets = [0, 0], sizes = [8, 64], strides = [1, 1]} : vector<16x64xbf16> to vector<8x64xbf16>
    %cst_98 = arith.constant dense<0.000000e+00> : vector<8x8xf32>
    %258 = tpu.matmul %256, %257, %cst_98 {dimension_numbers = #tpu.dot_dimension_numbers<[1], [1], [0], [0], [0, 0, 1, 0], [], []>} : vector<8x64xbf16>, vector<8x64xbf16>, vector<8x8xf32> -> vector<8x8xf32>
    %cst_99 = arith.constant 1.250000e-01 : f32
    %259 = vector.broadcast %cst_99 : f32 to vector<8x8xf32>
    %260 = arith.mulf %258, %259 : vector<8x8xf32>
    %261 = vector.extract_strided_slice %31 {offsets = [0, 0], sizes = [1, 8], strides = [1, 1]} : vector<2x8xf32> to vector<1x8xf32>
    %262 = vector.broadcast %261 : vector<1x8xf32> to vector<8x8xf32>
    %263 = arith.addf %260, %262 : vector<8x8xf32>
    %cst_100 = arith.constant dense<0xFF800000> : vector<8xf32>
    %264 = vector.multi_reduction <maximumf>, %263, %cst_100 [1] : vector<8x8xf32> to vector<8xf32>
    %265 = vector.shape_cast %264 : vector<8xf32> to vector<8x1xf32>
    %266 = vector.broadcast %265 : vector<8x1xf32> to vector<8x8xf32>
    %267 = arith.subf %263, %266 : vector<8x8xf32>
    %268 = math.exp %267 : vector<8x8xf32>
    %cst_101 = arith.constant dense<0.000000e+00> : vector<8xf32>
    %269 = vector.multi_reduction <add>, %268, %cst_101 [1] : vector<8x8xf32> to vector<8xf32>
    %270 = vector.shape_cast %269 : vector<8xf32> to vector<8x1xf32>
    %271 = tpu.reciprocal %270 {approx = true} : vector<8x1xf32> -> vector<8x1xf32>
    %272 = vector.broadcast %271 : vector<8x1xf32> to vector<8x8xf32>
    %273 = arith.mulf %268, %272 : vector<8x8xf32>
    %274 = arith.truncf %273 : vector<8x8xf32> to vector<8x8xbf16>
    %275 = vector.extract_strided_slice %255 {offsets = [0, 0], sizes = [8, 64], strides = [1, 1]} : vector<16x64xbf16> to vector<8x64xbf16>
    %cst_102 = arith.constant dense<0.000000e+00> : vector<8x64xf32>
    %276 = tpu.matmul %274, %275, %cst_102 {dimension_numbers = #tpu.dot_dimension_numbers<[1], [0], [0], [1], [0, 0, 1, 1], [], []>} : vector<8x8xbf16>, vector<8x64xbf16>, vector<8x64xf32> -> vector<8x64xf32>
    %277 = vector.extract_strided_slice %251 {offsets = [8, 0], sizes = [8, 64], strides = [1, 1]} : vector<16x64xbf16> to vector<8x64xbf16>
    %278 = vector.extract_strided_slice %253 {offsets = [8, 0], sizes = [8, 64], strides = [1, 1]} : vector<16x64xbf16> to vector<8x64xbf16>
    %cst_103 = arith.constant dense<0.000000e+00> : vector<8x8xf32>
    %279 = tpu.matmul %277, %278, %cst_103 {dimension_numbers = #tpu.dot_dimension_numbers<[1], [1], [0], [0], [0, 0, 1, 0], [], []>} : vector<8x64xbf16>, vector<8x64xbf16>, vector<8x8xf32> -> vector<8x8xf32>
    %cst_104 = arith.constant 1.250000e-01 : f32
    %280 = vector.broadcast %cst_104 : f32 to vector<8x8xf32>
    %281 = arith.mulf %279, %280 : vector<8x8xf32>
    %282 = vector.extract_strided_slice %31 {offsets = [1, 0], sizes = [1, 8], strides = [1, 1]} : vector<2x8xf32> to vector<1x8xf32>
    %283 = vector.broadcast %282 : vector<1x8xf32> to vector<8x8xf32>
    %284 = arith.addf %281, %283 : vector<8x8xf32>
    %cst_105 = arith.constant dense<0xFF800000> : vector<8xf32>
    %285 = vector.multi_reduction <maximumf>, %284, %cst_105 [1] : vector<8x8xf32> to vector<8xf32>
    %286 = vector.shape_cast %285 : vector<8xf32> to vector<8x1xf32>
    %287 = vector.broadcast %286 : vector<8x1xf32> to vector<8x8xf32>
    %288 = arith.subf %284, %287 : vector<8x8xf32>
    %289 = math.exp %288 : vector<8x8xf32>
    %cst_106 = arith.constant dense<0.000000e+00> : vector<8xf32>
    %290 = vector.multi_reduction <add>, %289, %cst_106 [1] : vector<8x8xf32> to vector<8xf32>
    %291 = vector.shape_cast %290 : vector<8xf32> to vector<8x1xf32>
    %292 = tpu.reciprocal %291 {approx = true} : vector<8x1xf32> -> vector<8x1xf32>
    %293 = vector.broadcast %292 : vector<8x1xf32> to vector<8x8xf32>
    %294 = arith.mulf %289, %293 : vector<8x8xf32>
    %295 = arith.truncf %294 : vector<8x8xf32> to vector<8x8xbf16>
    %296 = vector.extract_strided_slice %255 {offsets = [8, 0], sizes = [8, 64], strides = [1, 1]} : vector<16x64xbf16> to vector<8x64xbf16>
    %cst_107 = arith.constant dense<0.000000e+00> : vector<8x64xf32>
    %297 = tpu.matmul %295, %296, %cst_107 {dimension_numbers = #tpu.dot_dimension_numbers<[1], [0], [0], [1], [0, 0, 1, 1], [], []>} : vector<8x8xbf16>, vector<8x64xbf16>, vector<8x64xf32> -> vector<8x64xf32>
    %298 = tpu.concatenate %276, %297 in 0 : vector<8x64xf32>, vector<8x64xf32> -> vector<16x64xf32>
    %299 = arith.truncf %298 : vector<16x64xf32> to vector<16x64xbf16>
    %300 = vector.extract_strided_slice %240 {offsets = [0, 0], sizes = [64, 128], strides = [1, 1]} : vector<128x128xbf16> to vector<64x128xbf16>
    %cst_108 = arith.constant dense<0.000000e+00> : vector<16x128xf32>
    %301 = tpu.matmul %299, %300, %cst_108 {dimension_numbers = #tpu.dot_dimension_numbers<[1], [0], [0], [1], [0, 0, 1, 1], [], []>} : vector<16x64xbf16>, vector<64x128xbf16>, vector<16x128xf32> -> vector<16x128xf32>
    %302 = vector.extract_strided_slice %247 {offsets = [0, 64], sizes = [16, 64], strides = [1, 1]} : vector<16x128xf32> to vector<16x64xf32>
    %303 = arith.truncf %302 : vector<16x64xf32> to vector<16x64xbf16>
    %304 = vector.extract_strided_slice %248 {offsets = [0, 64], sizes = [16, 64], strides = [1, 1]} : vector<16x128xf32> to vector<16x64xf32>
    %305 = arith.truncf %304 : vector<16x64xf32> to vector<16x64xbf16>
    %306 = vector.extract_strided_slice %249 {offsets = [0, 64], sizes = [16, 64], strides = [1, 1]} : vector<16x128xf32> to vector<16x64xf32>
    %307 = arith.truncf %306 : vector<16x64xf32> to vector<16x64xbf16>
    %308 = vector.extract_strided_slice %303 {offsets = [0, 0], sizes = [8, 64], strides = [1, 1]} : vector<16x64xbf16> to vector<8x64xbf16>
    %309 = vector.extract_strided_slice %305 {offsets = [0, 0], sizes = [8, 64], strides = [1, 1]} : vector<16x64xbf16> to vector<8x64xbf16>
    %cst_109 = arith.constant dense<0.000000e+00> : vector<8x8xf32>
    %310 = tpu.matmul %308, %309, %cst_109 {dimension_numbers = #tpu.dot_dimension_numbers<[1], [1], [0], [0], [0, 0, 1, 0], [], []>} : vector<8x64xbf16>, vector<8x64xbf16>, vector<8x8xf32> -> vector<8x8xf32>
    %cst_110 = arith.constant 1.250000e-01 : f32
    %311 = vector.broadcast %cst_110 : f32 to vector<8x8xf32>
    %312 = arith.mulf %310, %311 : vector<8x8xf32>
    %313 = vector.extract_strided_slice %31 {offsets = [0, 0], sizes = [1, 8], strides = [1, 1]} : vector<2x8xf32> to vector<1x8xf32>
    %314 = vector.broadcast %313 : vector<1x8xf32> to vector<8x8xf32>
    %315 = arith.addf %312, %314 : vector<8x8xf32>
    %cst_111 = arith.constant dense<0xFF800000> : vector<8xf32>
    %316 = vector.multi_reduction <maximumf>, %315, %cst_111 [1] : vector<8x8xf32> to vector<8xf32>
    %317 = vector.shape_cast %316 : vector<8xf32> to vector<8x1xf32>
    %318 = vector.broadcast %317 : vector<8x1xf32> to vector<8x8xf32>
    %319 = arith.subf %315, %318 : vector<8x8xf32>
    %320 = math.exp %319 : vector<8x8xf32>
    %cst_112 = arith.constant dense<0.000000e+00> : vector<8xf32>
    %321 = vector.multi_reduction <add>, %320, %cst_112 [1] : vector<8x8xf32> to vector<8xf32>
    %322 = vector.shape_cast %321 : vector<8xf32> to vector<8x1xf32>
    %323 = tpu.reciprocal %322 {approx = true} : vector<8x1xf32> -> vector<8x1xf32>
    %324 = vector.broadcast %323 : vector<8x1xf32> to vector<8x8xf32>
    %325 = arith.mulf %320, %324 : vector<8x8xf32>
    %326 = arith.truncf %325 : vector<8x8xf32> to vector<8x8xbf16>
    %327 = vector.extract_strided_slice %307 {offsets = [0, 0], sizes = [8, 64], strides = [1, 1]} : vector<16x64xbf16> to vector<8x64xbf16>
    %cst_113 = arith.constant dense<0.000000e+00> : vector<8x64xf32>
    %328 = tpu.matmul %326, %327, %cst_113 {dimension_numbers = #tpu.dot_dimension_numbers<[1], [0], [0], [1], [0, 0, 1, 1], [], []>} : vector<8x8xbf16>, vector<8x64xbf16>, vector<8x64xf32> -> vector<8x64xf32>
    %329 = vector.extract_strided_slice %303 {offsets = [8, 0], sizes = [8, 64], strides = [1, 1]} : vector<16x64xbf16> to vector<8x64xbf16>
    %330 = vector.extract_strided_slice %305 {offsets = [8, 0], sizes = [8, 64], strides = [1, 1]} : vector<16x64xbf16> to vector<8x64xbf16>
    %cst_114 = arith.constant dense<0.000000e+00> : vector<8x8xf32>
    %331 = tpu.matmul %329, %330, %cst_114 {dimension_numbers = #tpu.dot_dimension_numbers<[1], [1], [0], [0], [0, 0, 1, 0], [], []>} : vector<8x64xbf16>, vector<8x64xbf16>, vector<8x8xf32> -> vector<8x8xf32>
    %cst_115 = arith.constant 1.250000e-01 : f32
    %332 = vector.broadcast %cst_115 : f32 to vector<8x8xf32>
    %333 = arith.mulf %331, %332 : vector<8x8xf32>
    %334 = vector.extract_strided_slice %31 {offsets = [1, 0], sizes = [1, 8], strides = [1, 1]} : vector<2x8xf32> to vector<1x8xf32>
    %335 = vector.broadcast %334 : vector<1x8xf32> to vector<8x8xf32>
    %336 = arith.addf %333, %335 : vector<8x8xf32>
    %cst_116 = arith.constant dense<0xFF800000> : vector<8xf32>
    %337 = vector.multi_reduction <maximumf>, %336, %cst_116 [1] : vector<8x8xf32> to vector<8xf32>
    %338 = vector.shape_cast %337 : vector<8xf32> to vector<8x1xf32>
    %339 = vector.broadcast %338 : vector<8x1xf32> to vector<8x8xf32>
    %340 = arith.subf %336, %339 : vector<8x8xf32>
    %341 = math.exp %340 : vector<8x8xf32>
    %cst_117 = arith.constant dense<0.000000e+00> : vector<8xf32>
    %342 = vector.multi_reduction <add>, %341, %cst_117 [1] : vector<8x8xf32> to vector<8xf32>
    %343 = vector.shape_cast %342 : vector<8xf32> to vector<8x1xf32>
    %344 = tpu.reciprocal %343 {approx = true} : vector<8x1xf32> -> vector<8x1xf32>
    %345 = vector.broadcast %344 : vector<8x1xf32> to vector<8x8xf32>
    %346 = arith.mulf %341, %345 : vector<8x8xf32>
    %347 = arith.truncf %346 : vector<8x8xf32> to vector<8x8xbf16>
    %348 = vector.extract_strided_slice %307 {offsets = [8, 0], sizes = [8, 64], strides = [1, 1]} : vector<16x64xbf16> to vector<8x64xbf16>
    %cst_118 = arith.constant dense<0.000000e+00> : vector<8x64xf32>
    %349 = tpu.matmul %347, %348, %cst_118 {dimension_numbers = #tpu.dot_dimension_numbers<[1], [0], [0], [1], [0, 0, 1, 1], [], []>} : vector<8x8xbf16>, vector<8x64xbf16>, vector<8x64xf32> -> vector<8x64xf32>
    %350 = tpu.concatenate %328, %349 in 0 : vector<8x64xf32>, vector<8x64xf32> -> vector<16x64xf32>
    %351 = arith.truncf %350 : vector<16x64xf32> to vector<16x64xbf16>
    %352 = vector.extract_strided_slice %240 {offsets = [64, 0], sizes = [64, 128], strides = [1, 1]} : vector<128x128xbf16> to vector<64x128xbf16>
    %cst_119 = arith.constant dense<0.000000e+00> : vector<16x128xf32>
    %353 = tpu.matmul %351, %352, %cst_119 {dimension_numbers = #tpu.dot_dimension_numbers<[1], [0], [0], [1], [0, 0, 1, 1], [], []>} : vector<16x64xbf16>, vector<64x128xbf16>, vector<16x128xf32> -> vector<16x128xf32>
    %354 = arith.addf %301, %353 : vector<16x128xf32>
    %c1_120 = arith.constant 1 : index
    %c0_121 = arith.constant 0 : index
    %c0_122 = arith.constant 0 : index
    %355 = vector.load %arg8[%c1_120, %c0_121, %c0_122] : memref<2x1x128xf32, #tpu.memory_space<vmem>>, vector<1x1x128xf32>
    %356 = vector.shape_cast %355 : vector<1x1x128xf32> to vector<1x128xf32>
    %357 = vector.broadcast %356 : vector<1x128xf32> to vector<16x128xf32>
    %358 = arith.addf %354, %357 : vector<16x128xf32>
    %359 = arith.addf %358, %236 : vector<16x128xf32>
    %c1_123 = arith.constant 1 : index
    %c0_124 = arith.constant 0 : index
    %c0_125 = arith.constant 0 : index
    %360 = vector.load %arg9[%c1_123, %c0_124, %c0_125] : memref<2x1x128xf32, #tpu.memory_space<vmem>>, vector<1x1x128xf32>
    %361 = vector.shape_cast %360 : vector<1x1x128xf32> to vector<1x128xf32>
    %c1_126 = arith.constant 1 : index
    %c0_127 = arith.constant 0 : index
    %c0_128 = arith.constant 0 : index
    %362 = vector.load %arg10[%c1_126, %c0_127, %c0_128] : memref<2x1x128xf32, #tpu.memory_space<vmem>>, vector<1x1x128xf32>
    %363 = vector.shape_cast %362 : vector<1x1x128xf32> to vector<1x128xf32>
    %cst_129 = arith.constant dense<0.000000e+00> : vector<16xf32>
    %364 = vector.multi_reduction <add>, %359, %cst_129 [1] : vector<16x128xf32> to vector<16xf32>
    %365 = vector.shape_cast %364 : vector<16xf32> to vector<16x1xf32>
    %cst_130 = arith.constant 1.280000e+02 : f32
    %366 = vector.broadcast %cst_130 : f32 to vector<16x1xf32>
    %367 = arith.divf %365, %366 : vector<16x1xf32>
    %368 = vector.broadcast %367 : vector<16x1xf32> to vector<16x128xf32>
    %369 = arith.subf %359, %368 : vector<16x128xf32>
    %370 = arith.mulf %369, %369 : vector<16x128xf32>
    %cst_131 = arith.constant dense<0.000000e+00> : vector<16xf32>
    %371 = vector.multi_reduction <add>, %370, %cst_131 [1] : vector<16x128xf32> to vector<16xf32>
    %372 = vector.shape_cast %371 : vector<16xf32> to vector<16x1xf32>
    %cst_132 = arith.constant 1.280000e+02 : f32
    %373 = vector.broadcast %cst_132 : f32 to vector<16x1xf32>
    %374 = arith.divf %372, %373 : vector<16x1xf32>
    %375 = vector.broadcast %367 : vector<16x1xf32> to vector<16x128xf32>
    %376 = arith.subf %359, %375 : vector<16x128xf32>
    %cst_133 = arith.constant 9.99999996E-13 : f32
    %377 = vector.broadcast %cst_133 : f32 to vector<16x1xf32>
    %378 = arith.addf %374, %377 : vector<16x1xf32>
    %379 = math.rsqrt %378 : vector<16x1xf32>
    %380 = vector.broadcast %379 : vector<16x1xf32> to vector<16x128xf32>
    %381 = arith.mulf %376, %380 : vector<16x128xf32>
    %382 = vector.broadcast %361 : vector<1x128xf32> to vector<16x128xf32>
    %383 = arith.mulf %381, %382 : vector<16x128xf32>
    %384 = vector.broadcast %363 : vector<1x128xf32> to vector<16x128xf32>
    %385 = arith.addf %383, %384 : vector<16x128xf32>
    %386 = arith.truncf %385 : vector<16x128xf32> to vector<16x128xbf16>
    %c1_134 = arith.constant 1 : index
    %c0_135 = arith.constant 0 : index
    %c0_136 = arith.constant 0 : index
    %387 = vector.load %arg11[%c1_134, %c0_135, %c0_136] : memref<2x128x256xbf16, #tpu.memory_space<vmem>>, vector<1x128x256xbf16>
    %388 = vector.shape_cast %387 : vector<1x128x256xbf16> to vector<128x256xbf16>
    %cst_137 = arith.constant dense<0.000000e+00> : vector<16x256xf32>
    %389 = tpu.matmul %386, %388, %cst_137 {dimension_numbers = #tpu.dot_dimension_numbers<[1], [0], [0], [1], [0, 0, 1, 1], [], []>} : vector<16x128xbf16>, vector<128x256xbf16>, vector<16x256xf32> -> vector<16x256xf32>
    %c1_138 = arith.constant 1 : index
    %c0_139 = arith.constant 0 : index
    %c0_140 = arith.constant 0 : index
    %390 = vector.load %arg12[%c1_138, %c0_139, %c0_140] : memref<2x1x256xf32, #tpu.memory_space<vmem>>, vector<1x1x256xf32>
    %391 = vector.shape_cast %390 : vector<1x1x256xf32> to vector<1x256xf32>
    %392 = vector.broadcast %391 : vector<1x256xf32> to vector<16x256xf32>
    %393 = arith.addf %389, %392 : vector<16x256xf32>
    %394 = arith.mulf %393, %393 : vector<16x256xf32>
    %395 = arith.mulf %393, %394 : vector<16x256xf32>
    %cst_141 = arith.constant 4.471500e-02 : f32
    %396 = vector.broadcast %cst_141 : f32 to vector<16x256xf32>
    %397 = arith.mulf %396, %395 : vector<16x256xf32>
    %398 = arith.addf %393, %397 : vector<16x256xf32>
    %cst_142 = arith.constant 0.797884583 : f32
    %399 = vector.broadcast %cst_142 : f32 to vector<16x256xf32>
    %400 = arith.mulf %399, %398 : vector<16x256xf32>
    %401 = math.tanh %400 : vector<16x256xf32>
    %cst_143 = arith.constant 1.000000e+00 : f32
    %402 = vector.broadcast %cst_143 : f32 to vector<16x256xf32>
    %403 = arith.addf %402, %401 : vector<16x256xf32>
    %cst_144 = arith.constant 5.000000e-01 : f32
    %404 = vector.broadcast %cst_144 : f32 to vector<16x256xf32>
    %405 = arith.mulf %404, %403 : vector<16x256xf32>
    %406 = arith.mulf %393, %405 : vector<16x256xf32>
    %407 = arith.truncf %406 : vector<16x256xf32> to vector<16x256xbf16>
    %c1_145 = arith.constant 1 : index
    %c0_146 = arith.constant 0 : index
    %c0_147 = arith.constant 0 : index
    %408 = vector.load %arg13[%c1_145, %c0_146, %c0_147] : memref<2x256x128xbf16, #tpu.memory_space<vmem>>, vector<1x256x128xbf16>
    %409 = vector.shape_cast %408 : vector<1x256x128xbf16> to vector<256x128xbf16>
    %cst_148 = arith.constant dense<0.000000e+00> : vector<16x128xf32>
    %410 = tpu.matmul %407, %409, %cst_148 {dimension_numbers = #tpu.dot_dimension_numbers<[1], [0], [0], [1], [0, 0, 1, 1], [], []>} : vector<16x256xbf16>, vector<256x128xbf16>, vector<16x128xf32> -> vector<16x128xf32>
    %c1_149 = arith.constant 1 : index
    %c0_150 = arith.constant 0 : index
    %c0_151 = arith.constant 0 : index
    %411 = vector.load %arg14[%c1_149, %c0_150, %c0_151] : memref<2x1x128xf32, #tpu.memory_space<vmem>>, vector<1x1x128xf32>
    %412 = vector.shape_cast %411 : vector<1x1x128xf32> to vector<1x128xf32>
    %413 = vector.broadcast %412 : vector<1x128xf32> to vector<16x128xf32>
    %414 = arith.addf %410, %413 : vector<16x128xf32>
    %415 = arith.addf %414, %385 : vector<16x128xf32>
    %c1_152 = arith.constant 1 : index
    %c0_153 = arith.constant 0 : index
    %c0_154 = arith.constant 0 : index
    %416 = vector.load %arg15[%c1_152, %c0_153, %c0_154] : memref<2x1x128xf32, #tpu.memory_space<vmem>>, vector<1x1x128xf32>
    %417 = vector.shape_cast %416 : vector<1x1x128xf32> to vector<1x128xf32>
    %c1_155 = arith.constant 1 : index
    %c0_156 = arith.constant 0 : index
    %c0_157 = arith.constant 0 : index
    %418 = vector.load %arg16[%c1_155, %c0_156, %c0_157] : memref<2x1x128xf32, #tpu.memory_space<vmem>>, vector<1x1x128xf32>
    %419 = vector.shape_cast %418 : vector<1x1x128xf32> to vector<1x128xf32>
    %cst_158 = arith.constant dense<0.000000e+00> : vector<16xf32>
    %420 = vector.multi_reduction <add>, %415, %cst_158 [1] : vector<16x128xf32> to vector<16xf32>
    %421 = vector.shape_cast %420 : vector<16xf32> to vector<16x1xf32>
    %cst_159 = arith.constant 1.280000e+02 : f32
    %422 = vector.broadcast %cst_159 : f32 to vector<16x1xf32>
    %423 = arith.divf %421, %422 : vector<16x1xf32>
    %424 = vector.broadcast %423 : vector<16x1xf32> to vector<16x128xf32>
    %425 = arith.subf %415, %424 : vector<16x128xf32>
    %426 = arith.mulf %425, %425 : vector<16x128xf32>
    %cst_160 = arith.constant dense<0.000000e+00> : vector<16xf32>
    %427 = vector.multi_reduction <add>, %426, %cst_160 [1] : vector<16x128xf32> to vector<16xf32>
    %428 = vector.shape_cast %427 : vector<16xf32> to vector<16x1xf32>
    %cst_161 = arith.constant 1.280000e+02 : f32
    %429 = vector.broadcast %cst_161 : f32 to vector<16x1xf32>
    %430 = arith.divf %428, %429 : vector<16x1xf32>
    %431 = vector.broadcast %423 : vector<16x1xf32> to vector<16x128xf32>
    %432 = arith.subf %415, %431 : vector<16x128xf32>
    %cst_162 = arith.constant 9.99999996E-13 : f32
    %433 = vector.broadcast %cst_162 : f32 to vector<16x1xf32>
    %434 = arith.addf %430, %433 : vector<16x1xf32>
    %435 = math.rsqrt %434 : vector<16x1xf32>
    %436 = vector.broadcast %435 : vector<16x1xf32> to vector<16x128xf32>
    %437 = arith.mulf %432, %436 : vector<16x128xf32>
    %438 = vector.broadcast %417 : vector<1x128xf32> to vector<16x128xf32>
    %439 = arith.mulf %437, %438 : vector<16x128xf32>
    %440 = vector.broadcast %419 : vector<1x128xf32> to vector<16x128xf32>
    %441 = arith.addf %439, %440 : vector<16x128xf32>
    %442 = vector.extract_strided_slice %441 {offsets = [0, 0], sizes = [1, 128], strides = [1, 1]} : vector<16x128xf32> to vector<1x128xf32>
    %443 = vector.extract_strided_slice %441 {offsets = [8, 0], sizes = [1, 128], strides = [1, 1]} : vector<16x128xf32> to vector<1x128xf32>
    %444 = tpu.concatenate %442, %443 in 0 : vector<1x128xf32>, vector<1x128xf32> -> vector<2x128xf32>
    %445 = arith.truncf %444 : vector<2x128xf32> to vector<2x128xbf16>
    %c0_163 = arith.constant 0 : index
    %c0_164 = arith.constant 0 : index
    %446 = vector.load %arg17[%c0_163, %c0_164] : memref<128x128xbf16, #tpu.memory_space<vmem>>, vector<128x128xbf16>
    %cst_165 = arith.constant dense<0.000000e+00> : vector<2x128xf32>
    %447 = tpu.matmul %445, %446, %cst_165 {dimension_numbers = #tpu.dot_dimension_numbers<[1], [0], [0], [1], [0, 0, 1, 1], [], []>} : vector<2x128xbf16>, vector<128x128xbf16>, vector<2x128xf32> -> vector<2x128xf32>
    %c0_166 = arith.constant 0 : index
    %c0_167 = arith.constant 0 : index
    %448 = vector.load %arg18[%c0_166, %c0_167] : memref<1x128xf32, #tpu.memory_space<vmem>>, vector<1x128xf32>
    %449 = vector.broadcast %448 : vector<1x128xf32> to vector<2x128xf32>
    %450 = arith.addf %447, %449 : vector<2x128xf32>
    %451 = math.tanh %450 : vector<2x128xf32>
    %452 = vector.extract_strided_slice %451 {offsets = [0, 0], sizes = [1, 128], strides = [1, 1]} : vector<2x128xf32> to vector<1x128xf32>
    %453 = vector.extract_strided_slice %451 {offsets = [1, 0], sizes = [1, 128], strides = [1, 1]} : vector<2x128xf32> to vector<1x128xf32>
    %454 = arith.subf %452, %453 : vector<1x128xf32>
    %455 = math.absf %454 : vector<1x128xf32>
    %456 = arith.truncf %452 : vector<1x128xf32> to vector<1x128xbf16>
    %c0_168 = arith.constant 0 : index
    %c0_169 = arith.constant 0 : index
    %457 = vector.load %arg19[%c0_168, %c0_169] : memref<128x128xbf16, #tpu.memory_space<vmem>>, vector<128x128xbf16>
    %cst_170 = arith.constant dense<0.000000e+00> : vector<1x128xf32>
    %458 = tpu.matmul %456, %457, %cst_170 {dimension_numbers = #tpu.dot_dimension_numbers<[1], [0], [0], [1], [0, 0, 1, 1], [], []>} : vector<1x128xbf16>, vector<128x128xbf16>, vector<1x128xf32> -> vector<1x128xf32>
    %459 = arith.truncf %453 : vector<1x128xf32> to vector<1x128xbf16>
    %c0_171 = arith.constant 0 : index
    %c0_172 = arith.constant 0 : index
    %460 = vector.load %arg20[%c0_171, %c0_172] : memref<128x128xbf16, #tpu.memory_space<vmem>>, vector<128x128xbf16>
    %cst_173 = arith.constant dense<0.000000e+00> : vector<1x128xf32>
    %461 = tpu.matmul %459, %460, %cst_173 {dimension_numbers = #tpu.dot_dimension_numbers<[1], [0], [0], [1], [0, 0, 1, 1], [], []>} : vector<1x128xbf16>, vector<128x128xbf16>, vector<1x128xf32> -> vector<1x128xf32>
    %462 = arith.addf %458, %461 : vector<1x128xf32>
    %463 = arith.truncf %455 : vector<1x128xf32> to vector<1x128xbf16>
    %c0_174 = arith.constant 0 : index
    %c0_175 = arith.constant 0 : index
    %464 = vector.load %arg21[%c0_174, %c0_175] : memref<128x128xbf16, #tpu.memory_space<vmem>>, vector<128x128xbf16>
    %cst_176 = arith.constant dense<0.000000e+00> : vector<1x128xf32>
    %465 = tpu.matmul %463, %464, %cst_176 {dimension_numbers = #tpu.dot_dimension_numbers<[1], [0], [0], [1], [0, 0, 1, 1], [], []>} : vector<1x128xbf16>, vector<128x128xbf16>, vector<1x128xf32> -> vector<1x128xf32>
    %466 = arith.addf %462, %465 : vector<1x128xf32>
    %c0_177 = arith.constant 0 : index
    %c0_178 = arith.constant 0 : index
    %467 = vector.load %arg22[%c0_177, %c0_178] : memref<1x128xf32, #tpu.memory_space<vmem>>, vector<1x128xf32>
    %468 = arith.addf %466, %467 : vector<1x128xf32>
    %cst_179 = arith.constant 0.000000e+00 : f32
    %469 = vector.broadcast %cst_179 : f32 to vector<1x128xf32>
    %470 = arith.maximumf %468, %469 : vector<1x128xf32>
    %471 = arith.truncf %470 : vector<1x128xf32> to vector<1x128xbf16>
    %c0_180 = arith.constant 0 : index
    %c0_181 = arith.constant 0 : index
    %472 = vector.load %arg23[%c0_180, %c0_181] : memref<128x2xbf16, #tpu.memory_space<vmem>>, vector<128x2xbf16>
    %cst_182 = arith.constant dense<0.000000e+00> : vector<1x2xf32>
    %473 = tpu.matmul %471, %472, %cst_182 {dimension_numbers = #tpu.dot_dimension_numbers<[1], [0], [0], [1], [0, 0, 1, 1], [], []>} : vector<1x128xbf16>, vector<128x2xbf16>, vector<1x2xf32> -> vector<1x2xf32>
    %c0_183 = arith.constant 0 : index
    %c0_184 = arith.constant 0 : index
    %474 = vector.load %arg24[%c0_183, %c0_184] : memref<1x2xf32, #tpu.memory_space<vmem>>, vector<1x2xf32>
    %475 = arith.addf %473, %474 : vector<1x2xf32>
    %476 = vector.shape_cast %475 : vector<1x2xf32> to vector<1x1x2xf32>
    %c0_185 = arith.constant 0 : index
    %c0_186 = arith.constant 0 : index
    %c0_187 = arith.constant 0 : index
    %477 = vector.load %arg26[%c0_185, %c0_186, %c0_187] : memref<1x1x2xf32, #tpu.memory_space<vmem>>, vector<1x1x2xf32>
    tpu.vector_store %arg26[%c0_185, %c0_186, %c0_187], %476 {strides = array<i32>} : memref<1x1x2xf32, #tpu.memory_space<vmem>>, vector<1x1x2xf32>,
    %c0_188 = arith.constant 0 : index
    %c0_189 = arith.constant 0 : index
    %c0_190 = arith.constant 0 : index
    %478 = vector.load %arg25[%c0_188, %c0_189, %c0_190] : memref<1x1x2xf32, #tpu.memory_space<vmem>>, vector<1x1x2xf32>
    %479 = vector.shape_cast %478 : vector<1x1x2xf32> to vector<1x2xf32>
    %cst_191 = arith.constant dense<0xFF800000> : vector<1xf32>
    %480 = vector.multi_reduction <maximumf>, %475, %cst_191 [1] : vector<1x2xf32> to vector<1xf32>
    %481 = vector.shape_cast %480 : vector<1xf32> to vector<1x1xf32>
    %482 = vector.broadcast %481 : vector<1x1xf32> to vector<1x2xf32>
    %483 = arith.subf %475, %482 : vector<1x2xf32>
    %484 = math.exp %483 : vector<1x2xf32>
    %cst_192 = arith.constant dense<0.000000e+00> : vector<1xf32>
    %485 = vector.multi_reduction <add>, %484, %cst_192 [1] : vector<1x2xf32> to vector<1xf32>
    %486 = vector.shape_cast %485 : vector<1xf32> to vector<1x1xf32>
    %487 = math.log %486 : vector<1x1xf32>
    %488 = arith.addf %481, %487 : vector<1x1xf32>
    %489 = arith.mulf %475, %479 : vector<1x2xf32>
    %cst_193 = arith.constant dense<0.000000e+00> : vector<1xf32>
    %490 = vector.multi_reduction <add>, %489, %cst_193 [1] : vector<1x2xf32> to vector<1xf32>
    %491 = vector.shape_cast %490 : vector<1xf32> to vector<1x1xf32>
    %492 = arith.subf %488, %491 : vector<1x1xf32>
    %493 = vector.shape_cast %492 : vector<1x1xf32> to vector<1x1x1xf32>
    %c0_194 = arith.constant 0 : index
    %c0_195 = arith.constant 0 : index
    %c0_196 = arith.constant 0 : index
    %494 = vector.load %arg27[%c0_194, %c0_195, %c0_196] : memref<1x1x1xf32, #tpu.memory_space<vmem>>, vector<1x1x1xf32>
    tpu.vector_store %arg27[%c0_194, %c0_195, %c0_196], %493 {strides = array<i32>} : memref<1x1x1xf32, #tpu.memory_space<vmem>>, vector<1x1x1xf32>,
    return
  }
  func.func @transform_0(%arg0: i32) -> (i32, i32) {
    %c0_i32 = arith.constant 0 : i32
    %c0_i32_0 = arith.constant 0 : i32
    return %arg0, %c0_i32 : i32, i32
  }
  func.func @transform_1(%arg0: i32) -> (i32, i32, i32) {
    %c0_i32 = arith.constant 0 : i32
    %c0_i32_0 = arith.constant 0 : i32
    %c0_i32_1 = arith.constant 0 : i32
    return %arg0, %c0_i32, %c0_i32_0 : i32, i32, i32
  }
  func.func @transform_2(%arg0: i32) -> (i32, i32) {
    %c0_i32 = arith.constant 0 : i32
    %c0_i32_0 = arith.constant 0 : i32
    %c0_i32_1 = arith.constant 0 : i32
    return %c0_i32, %c0_i32_0 : i32, i32
  }
  func.func @transform_3(%arg0: i32) -> (i32, i32) {
    %c0_i32 = arith.constant 0 : i32
    %c0_i32_0 = arith.constant 0 : i32
    %c0_i32_1 = arith.constant 0 : i32
    return %c0_i32, %c0_i32_0 : i32, i32
  }
  func.func @transform_4(%arg0: i32) -> (i32, i32, i32) {
    %c0_i32 = arith.constant 0 : i32
    %c0_i32_0 = arith.constant 0 : i32
    %c0_i32_1 = arith.constant 0 : i32
    %c0_i32_2 = arith.constant 0 : i32
    return %c0_i32, %c0_i32_0, %c0_i32_1 : i32, i32, i32
  }
  func.func @transform_5(%arg0: i32) -> (i32, i32, i32) {
    %c0_i32 = arith.constant 0 : i32
    %c0_i32_0 = arith.constant 0 : i32
    %c0_i32_1 = arith.constant 0 : i32
    %c0_i32_2 = arith.constant 0 : i32
    return %c0_i32, %c0_i32_0, %c0_i32_1 : i32, i32, i32
  }
  func.func @transform_6(%arg0: i32) -> (i32, i32, i32) {
    %c0_i32 = arith.constant 0 : i32
    %c0_i32_0 = arith.constant 0 : i32
    %c0_i32_1 = arith.constant 0 : i32
    %c0_i32_2 = arith.constant 0 : i32
    return %c0_i32, %c0_i32_0, %c0_i32_1 : i32, i32, i32
  }
  func.func @transform_7(%arg0: i32) -> (i32, i32, i32) {
    %c0_i32 = arith.constant 0 : i32
    %c0_i32_0 = arith.constant 0 : i32
    %c0_i32_1 = arith.constant 0 : i32
    %c0_i32_2 = arith.constant 0 : i32
    return %c0_i32, %c0_i32_0, %c0_i32_1 : i32, i32, i32
  }
  func.func @transform_8(%arg0: i32) -> (i32, i32, i32) {
    %c0_i32 = arith.constant 0 : i32
    %c0_i32_0 = arith.constant 0 : i32
    %c0_i32_1 = arith.constant 0 : i32
    %c0_i32_2 = arith.constant 0 : i32
    return %c0_i32, %c0_i32_0, %c0_i32_1 : i32, i32, i32
  }
  func.func @transform_9(%arg0: i32) -> (i32, i32, i32) {
    %c0_i32 = arith.constant 0 : i32
    %c0_i32_0 = arith.constant 0 : i32
    %c0_i32_1 = arith.constant 0 : i32
    %c0_i32_2 = arith.constant 0 : i32
    return %c0_i32, %c0_i32_0, %c0_i32_1 : i32, i32, i32
  }
  func.func @transform_10(%arg0: i32) -> (i32, i32, i32) {
    %c0_i32 = arith.constant 0 : i32
    %c0_i32_0 = arith.constant 0 : i32
    %c0_i32_1 = arith.constant 0 : i32
    %c0_i32_2 = arith.constant 0 : i32
    return %c0_i32, %c0_i32_0, %c0_i32_1 : i32, i32, i32
  }
  func.func @transform_11(%arg0: i32) -> (i32, i32, i32) {
    %c0_i32 = arith.constant 0 : i32
    %c0_i32_0 = arith.constant 0 : i32
    %c0_i32_1 = arith.constant 0 : i32
    %c0_i32_2 = arith.constant 0 : i32
    return %c0_i32, %c0_i32_0, %c0_i32_1 : i32, i32, i32
  }
  func.func @transform_12(%arg0: i32) -> (i32, i32, i32) {
    %c0_i32 = arith.constant 0 : i32
    %c0_i32_0 = arith.constant 0 : i32
    %c0_i32_1 = arith.constant 0 : i32
    %c0_i32_2 = arith.constant 0 : i32
    return %c0_i32, %c0_i32_0, %c0_i32_1 : i32, i32, i32
  }
  func.func @transform_13(%arg0: i32) -> (i32, i32, i32) {
    %c0_i32 = arith.constant 0 : i32
    %c0_i32_0 = arith.constant 0 : i32
    %c0_i32_1 = arith.constant 0 : i32
    %c0_i32_2 = arith.constant 0 : i32
    return %c0_i32, %c0_i32_0, %c0_i32_1 : i32, i32, i32
  }
  func.func @transform_14(%arg0: i32) -> (i32, i32, i32) {
    %c0_i32 = arith.constant 0 : i32
    %c0_i32_0 = arith.constant 0 : i32
    %c0_i32_1 = arith.constant 0 : i32
    %c0_i32_2 = arith.constant 0 : i32
    return %c0_i32, %c0_i32_0, %c0_i32_1 : i32, i32, i32
  }
  func.func @transform_15(%arg0: i32) -> (i32, i32, i32) {
    %c0_i32 = arith.constant 0 : i32
    %c0_i32_0 = arith.constant 0 : i32
    %c0_i32_1 = arith.constant 0 : i32
    %c0_i32_2 = arith.constant 0 : i32
    return %c0_i32, %c0_i32_0, %c0_i32_1 : i32, i32, i32
  }
  func.func @transform_16(%arg0: i32) -> (i32, i32) {
    %c0_i32 = arith.constant 0 : i32
    %c0_i32_0 = arith.constant 0 : i32
    %c0_i32_1 = arith.constant 0 : i32
    return %c0_i32, %c0_i32_0 : i32, i32
  }
  func.func @transform_17(%arg0: i32) -> (i32, i32) {
    %c0_i32 = arith.constant 0 : i32
    %c0_i32_0 = arith.constant 0 : i32
    %c0_i32_1 = arith.constant 0 : i32
    return %c0_i32, %c0_i32_0 : i32, i32
  }
  func.func @transform_18(%arg0: i32) -> (i32, i32) {
    %c0_i32 = arith.constant 0 : i32
    %c0_i32_0 = arith.constant 0 : i32
    %c0_i32_1 = arith.constant 0 : i32
    return %c0_i32, %c0_i32_0 : i32, i32
  }
  func.func @transform_19(%arg0: i32) -> (i32, i32) {
    %c0_i32 = arith.constant 0 : i32
    %c0_i32_0 = arith.constant 0 : i32
    %c0_i32_1 = arith.constant 0 : i32
    return %c0_i32, %c0_i32_0 : i32, i32
  }
  func.func @transform_20(%arg0: i32) -> (i32, i32) {
    %c0_i32 = arith.constant 0 : i32
    %c0_i32_0 = arith.constant 0 : i32
    %c0_i32_1 = arith.constant 0 : i32
    return %c0_i32, %c0_i32_0 : i32, i32
  }
  func.func @transform_21(%arg0: i32) -> (i32, i32) {
    %c0_i32 = arith.constant 0 : i32
    %c0_i32_0 = arith.constant 0 : i32
    %c0_i32_1 = arith.constant 0 : i32
    return %c0_i32, %c0_i32_0 : i32, i32
  }
  func.func @transform_22(%arg0: i32) -> (i32, i32) {
    %c0_i32 = arith.constant 0 : i32
    %c0_i32_0 = arith.constant 0 : i32
    %c0_i32_1 = arith.constant 0 : i32
    return %c0_i32, %c0_i32_0 : i32, i32
  }
  func.func @transform_23(%arg0: i32) -> (i32, i32) {
    %c0_i32 = arith.constant 0 : i32
    %c0_i32_0 = arith.constant 0 : i32
    %c0_i32_1 = arith.constant 0 : i32
    return %c0_i32, %c0_i32_0 : i32, i32
  }
  func.func @transform_24(%arg0: i32) -> (i32, i32, i32) {
    %c0_i32 = arith.constant 0 : i32
    %c0_i32_0 = arith.constant 0 : i32
    %c0_i32_1 = arith.constant 0 : i32
    return %arg0, %c0_i32, %c0_i32_0 : i32, i32, i32
  }
  func.func @transform_25(%arg0: i32) -> (i32, i32, i32) {
    %c0_i32 = arith.constant 0 : i32
    %c0_i32_0 = arith.constant 0 : i32
    %c0_i32_1 = arith.constant 0 : i32
    return %arg0, %c0_i32, %c0_i32_0 : i32, i32, i32
  }
  func.func @transform_26(%arg0: i32) -> (i32, i32, i32) {
    %c0_i32 = arith.constant 0 : i32
    %c0_i32_0 = arith.constant 0 : i32
    %c0_i32_1 = arith.constant 0 : i32
    return %arg0, %c0_i32, %c0_i32_0 : i32, i32, i32
  }
}

</mosaic_0001>

<llo_original>
// kernel: bert_classification_forward.1
$region0: #{bert_classification_forward.1}
  #allocation0 [shape = 'u32[]', space=smem, size = 0x4, offset = 0x4, fixed_abs, tag = 'smem constant byte address 0x4 - core index']
  #allocation1 [shape = 'u32[72,128]{1,0:T(1,128)}', space=vmem, size = 0x9000, scoped, tag = 'internal scratch']
  %s0 = inlined_call_operand.vmem [shape: f32[32,128], index: 0, kind: input, shape index: {}]
  %s1 = inlined_call_operand.vmem [shape: s32[2,2,8], index: 1, kind: input, shape index: {}]
  %s2 = inlined_call_operand.vmem [shape: f32[1,128], index: 2, kind: input, shape index: {}]
  %s3 = inlined_call_operand.vmem [shape: f32[1,128], index: 3, kind: input, shape index: {}]
  %s4 = inlined_call_operand.hbm [shape: bf16[2,128,384], index: 4, kind: input, shape index: {}]
  %s5 = inlined_call_operand.vmem [shape: f32[2,1,384], index: 5, kind: input, shape index: {}]
  %s6 = inlined_call_operand.vmem [shape: bf16[2,128,128], index: 6, kind: input, shape index: {}]
  %s7 = inlined_call_operand.vmem [shape: f32[2,1,128], index: 7, kind: input, shape index: {}]
  %s8 = inlined_call_operand.vmem [shape: f32[2,1,128], index: 8, kind: input, shape index: {}]
  %s9 = inlined_call_operand.vmem [shape: f32[2,1,128], index: 9, kind: input, shape index: {}]
  %s10 = inlined_call_operand.vmem [shape: bf16[2,128,256], index: 10, kind: input, shape index: {}]
  %s11 = inlined_call_operand.vmem [shape: f32[2,1,256], index: 11, kind: input, shape index: {}]
  %s12 = inlined_call_operand.hbm [shape: bf16[2,256,128], index: 12, kind: input, shape index: {}]
  %s13 = inlined_call_operand.vmem [shape: f32[2,1,128], index: 13, kind: input, shape index: {}]
  %s14 = inlined_call_operand.vmem [shape: f32[2,1,128], index: 14, kind: input, shape index: {}]
  %s15 = inlined_call_operand.vmem [shape: f32[2,1,128], index: 15, kind: input, shape index: {}]
  %s16 = inlined_call_operand.vmem [shape: bf16[128,128], index: 16, kind: input, shape index: {}]
  %s17 = inlined_call_operand.vmem [shape: f32[1,128], index: 17, kind: input, shape index: {}]
  %s18 = inlined_call_operand.vmem [shape: bf16[128,128], index: 18, kind: input, shape index: {}]
  %s19 = inlined_call_operand.vmem [shape: bf16[128,128], index: 19, kind: input, shape index: {}]
  %s20 = inlined_call_operand.vmem [shape: bf16[128,128], index: 20, kind: input, shape index: {}]
  %s21 = inlined_call_operand.vmem [shape: f32[1,128], index: 21, kind: input, shape index: {}]
  %s22 = inlined_call_operand.vmem [shape: bf16[128,2], index: 22, kind: input, shape index: {}]
  %s23 = inlined_call_operand.vmem [shape: f32[1,2], index: 23, kind: input, shape index: {}]
  %s24 = inlined_call_operand.vmem [shape: f32[2,1,2], index: 24, kind: input, shape index: {}]
  %s25 = inlined_call_operand.hbm [shape: f32[2,1,2], index: 25, kind: output, shape index: {0}]
  %s26 = inlined_call_operand.vmem [shape: f32[2,1,1], index: 26, kind: output, shape index: {1}]
  %27 = xla_tuple %s25, %s26
  %s28 = sld [smem:[#allocation0]]
  $region149: #{bert_classification_forward.1} parent=0
    _
  %s30 = ssub.s32 1, %s28
  %s31 = scalar_select 0, %s30, %s28
  $region1: #{bert_classification_forward.1} parent=0
    #allocation2 [shape = 'u8[196608]{0}', space=vmem, size = 0x30000, scoped, tag = 'input window, operand 4, single buffered']
    #allocation3 [shape = 's32[2]{0}', space=sflag, size = 0x8, scoped, tag = 'scoped memory for bert_classification_forward.1']
    #allocation4 [shape = 's32[2]{0}', space=sflag, size = 0x8, scoped, tag = 'scoped memory for bert_classification_forward.1']
    #allocation5 [shape = 'u8[131072]{0}', space=vmem, size = 0x20000, scoped, tag = 'input window, operand 12, single buffered']
    #allocation6 [shape = 's32[1]{0}', space=sflag, size = 0x4, scoped, tag = 'scoped memory for bert_classification_forward.1']
    #allocation7 [shape = 'u8[1024]{0}', space=vmem, size = 0x400, scoped, tag = 'output window, operand 0']
    %32 = vsyncpa [#allocation3], 0
    %33 = vsyncpa [#allocation6], 0
    %34 = vsyncpa [#allocation4], 0
    %s35 = scalar_lea.sflag [#allocation4], 1
    %36 = vsyncpa %s35, 0
    loop: start=0, step=1, limit=4
    $region2: #{bert_classification_forward.1} parent=1 // loop_pre_header
      _
    $region3: #{bert_classification_forward.1} parent=1 // loop_header
      %s38 = sphi 0, %s42
      %p39 = scmp.ge.s32.totalorder %s38, 4
      %s48 = sphi 0, %s50
      %s51 = sphi 0, %s48
      %s52 = sphi 0, %s51
      %s68 = sphi 0, %s52
      %s74 = sphi 0, %s76
      %s77 = sphi 0, %s74
      %s78 = sphi 0, %s77
      %s94 = sphi 0, %s78
      %s98 = sphi 0, %s98
      %s100 = sphi 0, %s98
      %s101 = sphi 0, %s100
      %s115 = sphi 0, %s101
      %s119 = sphi 0, %s119
      %s121 = sphi 0, %s119
      %s122 = sphi 0, %s121
      %s136 = sphi 0, %s122
      %s140 = sphi 0, %s140
      %s142 = sphi 0, %s140
      %s143 = sphi 0, %s142
      %s157 = sphi 0, %s143
      %s161 = sphi 0, %s161
      %s163 = sphi 0, %s161
      %s164 = sphi 0, %s163
      %s178 = sphi 0, %s164
      %s182 = sphi 0, %s182
      %s184 = sphi 0, %s182
      %s185 = sphi 0, %s184
      %s199 = sphi 0, %s185
      %s203 = sphi 0, %s203
      %s205 = sphi 0, %s203
      %s206 = sphi 0, %s205
      %s220 = sphi 0, %s206
      %s224 = sphi 0, %s224
      %s226 = sphi 0, %s224
      %s227 = sphi 0, %s226
      %s241 = sphi 0, %s227
      %s245 = sphi 0, %s245
      %s247 = sphi 0, %s245
      %s248 = sphi 0, %s247
      %s262 = sphi 0, %s248
      %s266 = sphi 0, %s266
      %s268 = sphi 0, %s266
      %s269 = sphi 0, %s268
      %s283 = sphi 0, %s269
      %s287 = sphi 0, %s287
      %s289 = sphi 0, %s287
      %s290 = sphi 0, %s289
      %s304 = sphi 0, %s290
      %s308 = sphi 0, %s308
      %s310 = sphi 0, %s308
      %s311 = sphi 0, %s310
      %s325 = sphi 0, %s311
      %s329 = sphi 0, %s329
      %s331 = sphi 0, %s329
      %s332 = sphi 0, %s331
      %s346 = sphi 0, %s332
      %s350 = sphi 0, %s350
      %s352 = sphi 0, %s350
      %s353 = sphi 0, %s352
      %s367 = sphi 0, %s353
      %s371 = sphi 0, %s371
      %s373 = sphi 0, %s371
      %s374 = sphi 0, %s373
      %s388 = sphi 0, %s374
      %s392 = sphi 0, %s392
      %s394 = sphi 0, %s392
      %s395 = sphi 0, %s394
      %s409 = sphi 0, %s395
      %s413 = sphi 0, %s413
      %s415 = sphi 0, %s413
      %s416 = sphi 0, %s415
      %s430 = sphi 0, %s416
      %s434 = sphi 0, %s434
      %s436 = sphi 0, %s434
      %s437 = sphi 0, %s436
      %s451 = sphi 0, %s437
      %s455 = sphi 0, %s455
      %s457 = sphi 0, %s455
      %s458 = sphi 0, %s457
      %s472 = sphi 0, %s458
      %s476 = sphi 0, %s476
      %s478 = sphi 0, %s476
      %s479 = sphi 0, %s478
      %s493 = sphi 0, %s479
      %s497 = sphi 0, %s497
      %s499 = sphi 0, %s497
      %s500 = sphi 0, %s499
      %s514 = sphi 0, %s500
      %s518 = sphi 0, %s518
      %s520 = sphi 0, %s518
      %s521 = sphi 0, %s520
      %s535 = sphi 0, %s521
      %s539 = sphi 0, %s539
      %s541 = sphi 0, %s539
      %s542 = sphi 0, %s541
      %s556 = sphi 0, %s542
      %s562 = sphi 0, %s564
      %s565 = sphi 0, %s562
      %s566 = sphi 0, %s565
      %s582 = sphi 0, %s566
      %s588 = sphi 0, %s590
      %s591 = sphi 0, %s588
      %s592 = sphi 0, %s591
      %s608 = sphi 0, %s592
      %s614 = sphi 0, %s616
      %s617 = sphi 0, %s614
      %s618 = sphi 0, %s617
      %s634 = sphi 0, %s618
    $region4: #{bert_classification_forward.1} parent=1 // loop_header_branch
      %41 = sbr.rel (%p39) target = $region8
    $region5: #{bert_classification_forward.1} parent=1 // loop_body
      %s43 = ssub.s32 %s38, 1
      %s44 = ssub.s32 %s38, 2
      %s45 = sadd.s32 %s38, 1
      %s46 = ssub.s32 %s38, %s45
      %p47 = scmp.eq.s32.totalorder %s46, 0
      %s49 = sadd.s32 %s48, 1
      %s50 = scalar_select %p47, %s48, %s49
      %p53 = pneg %p47
      %p54 = scmp.eq.s32.totalorder %s38, 1
      %p55 = por %p53, %p54
      %p56 = scmp.ne.s32.totalorder %s48, %s51
      %p57 = scmp.eq.s32.totalorder %s38, 0
      %p58 = por %p56, %p57
      %p59 = scmp.ne.s32.totalorder %s48, %s51
      %p60 = scmp.eq.s32.totalorder %s43, 1
      %p61 = por %p59, %p60
      %p62 = scmp.ne.s32.totalorder %s51, %s52
      %p63 = scmp.eq.s32.totalorder %s43, 0
      %p64 = por %p62, %p63
      %p65 = scmp.ne.s32.totalorder %s51, %s52
      %p66 = scmp.eq.s32.totalorder %s44, 1
      %p67 = por %p65, %p66
      %p69 = scmp.ne.s32.totalorder %s52, %s68
      %p70 = scmp.eq.s32.totalorder %s44, 0
      %p71 = por %p69, %p70
      %s72 = ssub.s32 %s38, %s45
      %p73 = scmp.eq.s32.totalorder %s72, 0
      %s75 = sadd.s32 %s74, 1
      %s76 = scalar_select %p73, %s74, %s75
      %p79 = pneg %p73
      %p80 = scmp.eq.s32.totalorder %s38, 1
      %p81 = por %p79, %p80
      %p82 = scmp.ne.s32.totalorder %s74, %s77
      %p83 = scmp.eq.s32.totalorder %s38, 0
      %p84 = por %p82, %p83
      %p85 = scmp.ne.s32.totalorder %s74, %s77
      %p86 = scmp.eq.s32.totalorder %s43, 1
      %p87 = por %p85, %p86
      %p88 = scmp.ne.s32.totalorder %s77, %s78
      %p89 = scmp.eq.s32.totalorder %s43, 0
      %p90 = por %p88, %p89
      %p91 = scmp.ne.s32.totalorder %s77, %s78
      %p92 = scmp.eq.s32.totalorder %s44, 1
      %p93 = por %p91, %p92
      %p95 = scmp.ne.s32.totalorder %s78, %s94
      %p96 = scmp.eq.s32.totalorder %s44, 0
      %p97 = por %p95, %p96
      %s99 = sadd.s32 %s98, 1
      %p102 = scmp.eq.s32.totalorder %s38, 1
      %p103 = scmp.ne.s32.totalorder %s98, %s100
      %p104 = scmp.eq.s32.totalorder %s38, 0
      %p105 = por %p103, %p104
      %p106 = scmp.ne.s32.totalorder %s98, %s100
      %p107 = scmp.eq.s32.totalorder %s43, 1
      %p108 = por %p106, %p107
      %p109 = scmp.ne.s32.totalorder %s100, %s101
      %p110 = scmp.eq.s32.totalorder %s43, 0
      %p111 = por %p109, %p110
      %p112 = scmp.ne.s32.totalorder %s100, %s101
      %p113 = scmp.eq.s32.totalorder %s44, 1
      %p114 = por %p112, %p113
      %p116 = scmp.ne.s32.totalorder %s101, %s115
      %p117 = scmp.eq.s32.totalorder %s44, 0
      %p118 = por %p116, %p117
      %s120 = sadd.s32 %s119, 1
      %p123 = scmp.eq.s32.totalorder %s38, 1
      %p124 = scmp.ne.s32.totalorder %s119, %s121
      %p125 = scmp.eq.s32.totalorder %s38, 0
      %p126 = por %p124, %p125
      %p127 = scmp.ne.s32.totalorder %s119, %s121
      %p128 = scmp.eq.s32.totalorder %s43, 1
      %p129 = por %p127, %p128
      %p130 = scmp.ne.s32.totalorder %s121, %s122
      %p131 = scmp.eq.s32.totalorder %s43, 0
      %p132 = por %p130, %p131
      %p133 = scmp.ne.s32.totalorder %s121, %s122
      %p134 = scmp.eq.s32.totalorder %s44, 1
      %p135 = por %p133, %p134
      %p137 = scmp.ne.s32.totalorder %s122, %s136
      %p138 = scmp.eq.s32.totalorder %s44, 0
      %p139 = por %p137, %p138
      %s141 = sadd.s32 %s140, 1
      %p144 = scmp.eq.s32.totalorder %s38, 1
      %p145 = scmp.ne.s32.totalorder %s140, %s142
      %p146 = scmp.eq.s32.totalorder %s38, 0
      %p147 = por %p145, %p146
      %p148 = scmp.ne.s32.totalorder %s140, %s142
      %p149 = scmp.eq.s32.totalorder %s43, 1
      %p150 = por %p148, %p149
      %p151 = scmp.ne.s32.totalorder %s142, %s143
      %p152 = scmp.eq.s32.totalorder %s43, 0
      %p153 = por %p151, %p152
      %p154 = scmp.ne.s32.totalorder %s142, %s143
      %p155 = scmp.eq.s32.totalorder %s44, 1
      %p156 = por %p154, %p155
      %p158 = scmp.ne.s32.totalorder %s143, %s157
      %p159 = scmp.eq.s32.totalorder %s44, 0
      %p160 = por %p158, %p159
      %s162 = sadd.s32 %s161, 1
      %p165 = scmp.eq.s32.totalorder %s38, 1
      %p166 = scmp.ne.s32.totalorder %s161, %s163
      %p167 = scmp.eq.s32.totalorder %s38, 0
      %p168 = por %p166, %p167
      %p169 = scmp.ne.s32.totalorder %s161, %s163
      %p170 = scmp.eq.s32.totalorder %s43, 1
      %p171 = por %p169, %p170
      %p172 = scmp.ne.s32.totalorder %s163, %s164
      %p173 = scmp.eq.s32.totalorder %s43, 0
      %p174 = por %p172, %p173
      %p175 = scmp.ne.s32.totalorder %s163, %s164
      %p176 = scmp.eq.s32.totalorder %s44, 1
      %p177 = por %p175, %p176
      %p179 = scmp.ne.s32.totalorder %s164, %s178
      %p180 = scmp.eq.s32.totalorder %s44, 0
      %p181 = por %p179, %p180
      %s183 = sadd.s32 %s182, 1
      %p186 = scmp.eq.s32.totalorder %s38, 1
      %p187 = scmp.ne.s32.totalorder %s182, %s184
      %p188 = scmp.eq.s32.totalorder %s38, 0
      %p189 = por %p187, %p188
      %p190 = scmp.ne.s32.totalorder %s182, %s184
      %p191 = scmp.eq.s32.totalorder %s43, 1
      %p192 = por %p190, %p191
      %p193 = scmp.ne.s32.totalorder %s184, %s185
      %p194 = scmp.eq.s32.totalorder %s43, 0
      %p195 = por %p193, %p194
      %p196 = scmp.ne.s32.totalorder %s184, %s185
      %p197 = scmp.eq.s32.totalorder %s44, 1
      %p198 = por %p196, %p197
      %p200 = scmp.ne.s32.totalorder %s185, %s199
      %p201 = scmp.eq.s32.totalorder %s44, 0
      %p202 = por %p200, %p201
      %s204 = sadd.s32 %s203, 1
      %p207 = scmp.eq.s32.totalorder %s38, 1
      %p208 = scmp.ne.s32.totalorder %s203, %s205
      %p209 = scmp.eq.s32.totalorder %s38, 0
      %p210 = por %p208, %p209
      %p211 = scmp.ne.s32.totalorder %s203, %s205
      %p212 = scmp.eq.s32.totalorder %s43, 1
      %p213 = por %p211, %p212
      %p214 = scmp.ne.s32.totalorder %s205, %s206
      %p215 = scmp.eq.s32.totalorder %s43, 0
      %p216 = por %p214, %p215
      %p217 = scmp.ne.s32.totalorder %s205, %s206
      %p218 = scmp.eq.s32.totalorder %s44, 1
      %p219 = por %p217, %p218
      %p221 = scmp.ne.s32.totalorder %s206, %s220
      %p222 = scmp.eq.s32.totalorder %s44, 0
      %p223 = por %p221, %p222
      %s225 = sadd.s32 %s224, 1
      %p228 = scmp.eq.s32.totalorder %s38, 1
      %p229 = scmp.ne.s32.totalorder %s224, %s226
      %p230 = scmp.eq.s32.totalorder %s38, 0
      %p231 = por %p229, %p230
      %p232 = scmp.ne.s32.totalorder %s224, %s226
      %p233 = scmp.eq.s32.totalorder %s43, 1
      %p234 = por %p232, %p233
      %p235 = scmp.ne.s32.totalorder %s226, %s227
      %p236 = scmp.eq.s32.totalorder %s43, 0
      %p237 = por %p235, %p236
      %p238 = scmp.ne.s32.totalorder %s226, %s227
      %p239 = scmp.eq.s32.totalorder %s44, 1
      %p240 = por %p238, %p239
      %p242 = scmp.ne.s32.totalorder %s227, %s241
      %p243 = scmp.eq.s32.totalorder %s44, 0
      %p244 = por %p242, %p243
      %s246 = sadd.s32 %s245, 1
      %p249 = scmp.eq.s32.totalorder %s38, 1
      %p250 = scmp.ne.s32.totalorder %s245, %s247
      %p251 = scmp.eq.s32.totalorder %s38, 0
      %p252 = por %p250, %p251
      %p253 = scmp.ne.s32.totalorder %s245, %s247
      %p254 = scmp.eq.s32.totalorder %s43, 1
      %p255 = por %p253, %p254
      %p256 = scmp.ne.s32.totalorder %s247, %s248
      %p257 = scmp.eq.s32.totalorder %s43, 0
      %p258 = por %p256, %p257
      %p259 = scmp.ne.s32.totalorder %s247, %s248
      %p260 = scmp.eq.s32.totalorder %s44, 1
      %p261 = por %p259, %p260
      %p263 = scmp.ne.s32.totalorder %s248, %s262
      %p264 = scmp.eq.s32.totalorder %s44, 0
      %p265 = por %p263, %p264
      %s267 = sadd.s32 %s266, 1
      %p270 = scmp.eq.s32.totalorder %s38, 1
      %p271 = scmp.ne.s32.totalorder %s266, %s268
      %p272 = scmp.eq.s32.totalorder %s38, 0
      %p273 = por %p271, %p272
      %p274 = scmp.ne.s32.totalorder %s266, %s268
      %p275 = scmp.eq.s32.totalorder %s43, 1
      %p276 = por %p274, %p275
      %p277 = scmp.ne.s32.totalorder %s268, %s269
      %p278 = scmp.eq.s32.totalorder %s43, 0
      %p279 = por %p277, %p278
      %p280 = scmp.ne.s32.totalorder %s268, %s269
      %p281 = scmp.eq.s32.totalorder %s44, 1
      %p282 = por %p280, %p281
      %p284 = scmp.ne.s32.totalorder %s269, %s283
      %p285 = scmp.eq.s32.totalorder %s44, 0
      %p286 = por %p284, %p285
      %s288 = sadd.s32 %s287, 1
      %p291 = scmp.eq.s32.totalorder %s38, 1
      %p292 = scmp.ne.s32.totalorder %s287, %s289
      %p293 = scmp.eq.s32.totalorder %s38, 0
      %p294 = por %p292, %p293
      %p295 = scmp.ne.s32.totalorder %s287, %s289
      %p296 = scmp.eq.s32.totalorder %s43, 1
      %p297 = por %p295, %p296
      %p298 = scmp.ne.s32.totalorder %s289, %s290
      %p299 = scmp.eq.s32.totalorder %s43, 0
      %p300 = por %p298, %p299
      %p301 = scmp.ne.s32.totalorder %s289, %s290
      %p302 = scmp.eq.s32.totalorder %s44, 1
      %p303 = por %p301, %p302
      %p305 = scmp.ne.s32.totalorder %s290, %s304
      %p306 = scmp.eq.s32.totalorder %s44, 0
      %p307 = por %p305, %p306
      %s309 = sadd.s32 %s308, 1
      %p312 = scmp.eq.s32.totalorder %s38, 1
      %p313 = scmp.ne.s32.totalorder %s308, %s310
      %p314 = scmp.eq.s32.totalorder %s38, 0
      %p315 = por %p313, %p314
      %p316 = scmp.ne.s32.totalorder %s308, %s310
      %p317 = scmp.eq.s32.totalorder %s43, 1
      %p318 = por %p316, %p317
      %p319 = scmp.ne.s32.totalorder %s310, %s311
      %p320 = scmp.eq.s32.totalorder %s43, 0
      %p321 = por %p319, %p320
      %p322 = scmp.ne.s32.totalorder %s310, %s311
      %p323 = scmp.eq.s32.totalorder %s44, 1
      %p324 = por %p322, %p323
      %p326 = scmp.ne.s32.totalorder %s311, %s325
      %p327 = scmp.eq.s32.totalorder %s44, 0
      %p328 = por %p326, %p327
      %s330 = sadd.s32 %s329, 1
      %p333 = scmp.eq.s32.totalorder %s38, 1
      %p334 = scmp.ne.s32.totalorder %s329, %s331
      %p335 = scmp.eq.s32.totalorder %s38, 0
      %p336 = por %p334, %p335
      %p337 = scmp.ne.s32.totalorder %s329, %s331
      %p338 = scmp.eq.s32.totalorder %s43, 1
      %p339 = por %p337, %p338
      %p340 = scmp.ne.s32.totalorder %s331, %s332
      %p341 = scmp.eq.s32.totalorder %s43, 0
      %p342 = por %p340, %p341
      %p343 = scmp.ne.s32.totalorder %s331, %s332
      %p344 = scmp.eq.s32.totalorder %s44, 1
      %p345 = por %p343, %p344
      %p347 = scmp.ne.s32.totalorder %s332, %s346
      %p348 = scmp.eq.s32.totalorder %s44, 0
      %p349 = por %p347, %p348
      %s351 = sadd.s32 %s350, 1
      %p354 = scmp.eq.s32.totalorder %s38, 1
      %p355 = scmp.ne.s32.totalorder %s350, %s352
      %p356 = scmp.eq.s32.totalorder %s38, 0
      %p357 = por %p355, %p356
      %p358 = scmp.ne.s32.totalorder %s350, %s352
      %p359 = scmp.eq.s32.totalorder %s43, 1
      %p360 = por %p358, %p359
      %p361 = scmp.ne.s32.totalorder %s352, %s353
      %p362 = scmp.eq.s32.totalorder %s43, 0
      %p363 = por %p361, %p362
      %p364 = scmp.ne.s32.totalorder %s352, %s353
      %p365 = scmp.eq.s32.totalorder %s44, 1
      %p366 = por %p364, %p365
      %p368 = scmp.ne.s32.totalorder %s353, %s367
      %p369 = scmp.eq.s32.totalorder %s44, 0
      %p370 = por %p368, %p369
      %s372 = sadd.s32 %s371, 1
      %p375 = scmp.eq.s32.totalorder %s38, 1
      %p376 = scmp.ne.s32.totalorder %s371, %s373
      %p377 = scmp.eq.s32.totalorder %s38, 0
      %p378 = por %p376, %p377
      %p379 = scmp.ne.s32.totalorder %s371, %s373
      %p380 = scmp.eq.s32.totalorder %s43, 1
      %p381 = por %p379, %p380
      %p382 = scmp.ne.s32.totalorder %s373, %s374
      %p383 = scmp.eq.s32.totalorder %s43, 0
      %p384 = por %p382, %p383
      %p385 = scmp.ne.s32.totalorder %s373, %s374
      %p386 = scmp.eq.s32.totalorder %s44, 1
      %p387 = por %p385, %p386
      %p389 = scmp.ne.s32.totalorder %s374, %s388
      %p390 = scmp.eq.s32.totalorder %s44, 0
      %p391 = por %p389, %p390
      %s393 = sadd.s32 %s392, 1
      %p396 = scmp.eq.s32.totalorder %s38, 1
      %p397 = scmp.ne.s32.totalorder %s392, %s394
      %p398 = scmp.eq.s32.totalorder %s38, 0
      %p399 = por %p397, %p398
      %p400 = scmp.ne.s32.totalorder %s392, %s394
      %p401 = scmp.eq.s32.totalorder %s43, 1
      %p402 = por %p400, %p401
      %p403 = scmp.ne.s32.totalorder %s394, %s395
      %p404 = scmp.eq.s32.totalorder %s43, 0
      %p405 = por %p403, %p404
      %p406 = scmp.ne.s32.totalorder %s394, %s395
      %p407 = scmp.eq.s32.totalorder %s44, 1
      %p408 = por %p406, %p407
      %p410 = scmp.ne.s32.totalorder %s395, %s409
      %p411 = scmp.eq.s32.totalorder %s44, 0
      %p412 = por %p410, %p411
      %s414 = sadd.s32 %s413, 1
      %p417 = scmp.eq.s32.totalorder %s38, 1
      %p418 = scmp.ne.s32.totalorder %s413, %s415
      %p419 = scmp.eq.s32.totalorder %s38, 0
      %p420 = por %p418, %p419
      %p421 = scmp.ne.s32.totalorder %s413, %s415
      %p422 = scmp.eq.s32.totalorder %s43, 1
      %p423 = por %p421, %p422
      %p424 = scmp.ne.s32.totalorder %s415, %s416
      %p425 = scmp.eq.s32.totalorder %s43, 0
      %p426 = por %p424, %p425
      %p427 = scmp.ne.s32.totalorder %s415, %s416
      %p428 = scmp.eq.s32.totalorder %s44, 1
      %p429 = por %p427, %p428
      %p431 = scmp.ne.s32.totalorder %s416, %s430
      %p432 = scmp.eq.s32.totalorder %s44, 0
      %p433 = por %p431, %p432
      %s435 = sadd.s32 %s434, 1
      %p438 = scmp.eq.s32.totalorder %s38, 1
      %p439 = scmp.ne.s32.totalorder %s434, %s436
      %p440 = scmp.eq.s32.totalorder %s38, 0
      %p441 = por %p439, %p440
      %p442 = scmp.ne.s32.totalorder %s434, %s436
      %p443 = scmp.eq.s32.totalorder %s43, 1
      %p444 = por %p442, %p443
      %p445 = scmp.ne.s32.totalorder %s436, %s437
      %p446 = scmp.eq.s32.totalorder %s43, 0
      %p447 = por %p445, %p446
      %p448 = scmp.ne.s32.totalorder %s436, %s437
      %p449 = scmp.eq.s32.totalorder %s44, 1
      %p450 = por %p448, %p449
      %p452 = scmp.ne.s32.totalorder %s437, %s451
      %p453 = scmp.eq.s32.totalorder %s44, 0
      %p454 = por %p452, %p453
      %s456 = sadd.s32 %s455, 1
      %p459 = scmp.eq.s32.totalorder %s38, 1
      %p460 = scmp.ne.s32.totalorder %s455, %s457
      %p461 = scmp.eq.s32.totalorder %s38, 0
      %p462 = por %p460, %p461
      %p463 = scmp.ne.s32.totalorder %s455, %s457
      %p464 = scmp.eq.s32.totalorder %s43, 1
      %p465 = por %p463, %p464
      %p466 = scmp.ne.s32.totalorder %s457, %s458
      %p467 = scmp.eq.s32.totalorder %s43, 0
      %p468 = por %p466, %p467
      %p469 = scmp.ne.s32.totalorder %s457, %s458
      %p470 = scmp.eq.s32.totalorder %s44, 1
      %p471 = por %p469, %p470
      %p473 = scmp.ne.s32.totalorder %s458, %s472
      %p474 = scmp.eq.s32.totalorder %s44, 0
      %p475 = por %p473, %p474
      %s477 = sadd.s32 %s476, 1
      %p480 = scmp.eq.s32.totalorder %s38, 1
      %p481 = scmp.ne.s32.totalorder %s476, %s478
      %p482 = scmp.eq.s32.totalorder %s38, 0
      %p483 = por %p481, %p482
      %p484 = scmp.ne.s32.totalorder %s476, %s478
      %p485 = scmp.eq.s32.totalorder %s43, 1
      %p486 = por %p484, %p485
      %p487 = scmp.ne.s32.totalorder %s478, %s479
      %p488 = scmp.eq.s32.totalorder %s43, 0
      %p489 = por %p487, %p488
      %p490 = scmp.ne.s32.totalorder %s478, %s479
      %p491 = scmp.eq.s32.totalorder %s44, 1
      %p492 = por %p490, %p491
      %p494 = scmp.ne.s32.totalorder %s479, %s493
      %p495 = scmp.eq.s32.totalorder %s44, 0
      %p496 = por %p494, %p495
      %s498 = sadd.s32 %s497, 1
      %p501 = scmp.eq.s32.totalorder %s38, 1
      %p502 = scmp.ne.s32.totalorder %s497, %s499
      %p503 = scmp.eq.s32.totalorder %s38, 0
      %p504 = por %p502, %p503
      %p505 = scmp.ne.s32.totalorder %s497, %s499
      %p506 = scmp.eq.s32.totalorder %s43, 1
      %p507 = por %p505, %p506
      %p508 = scmp.ne.s32.totalorder %s499, %s500
      %p509 = scmp.eq.s32.totalorder %s43, 0
      %p510 = por %p508, %p509
      %p511 = scmp.ne.s32.totalorder %s499, %s500
      %p512 = scmp.eq.s32.totalorder %s44, 1
      %p513 = por %p511, %p512
      %p515 = scmp.ne.s32.totalorder %s500, %s514
      %p516 = scmp.eq.s32.totalorder %s44, 0
      %p517 = por %p515, %p516
      %s519 = sadd.s32 %s518, 1
      %p522 = scmp.eq.s32.totalorder %s38, 1
      %p523 = scmp.ne.s32.totalorder %s518, %s520
      %p524 = scmp.eq.s32.totalorder %s38, 0
      %p525 = por %p523, %p524
      %p526 = scmp.ne.s32.totalorder %s518, %s520
      %p527 = scmp.eq.s32.totalorder %s43, 1
      %p528 = por %p526, %p527
      %p529 = scmp.ne.s32.totalorder %s520, %s521
      %p530 = scmp.eq.s32.totalorder %s43, 0
      %p531 = por %p529, %p530
      %p532 = scmp.ne.s32.totalorder %s520, %s521
      %p533 = scmp.eq.s32.totalorder %s44, 1
      %p534 = por %p532, %p533
      %p536 = scmp.ne.s32.totalorder %s521, %s535
      %p537 = scmp.eq.s32.totalorder %s44, 0
      %p538 = por %p536, %p537
      %s540 = sadd.s32 %s539, 1
      %p543 = scmp.eq.s32.totalorder %s38, 1
      %p544 = scmp.ne.s32.totalorder %s539, %s541
      %p545 = scmp.eq.s32.totalorder %s38, 0
      %p546 = por %p544, %p545
      %p547 = scmp.ne.s32.totalorder %s539, %s541
      %p548 = scmp.eq.s32.totalorder %s43, 1
      %p549 = por %p547, %p548
      %p550 = scmp.ne.s32.totalorder %s541, %s542
      %p551 = scmp.eq.s32.totalorder %s43, 0
      %p552 = por %p550, %p551
      %p553 = scmp.ne.s32.totalorder %s541, %s542
      %p554 = scmp.eq.s32.totalorder %s44, 1
      %p555 = por %p553, %p554
      %p557 = scmp.ne.s32.totalorder %s542, %s556
      %p558 = scmp.eq.s32.totalorder %s44, 0
      %p559 = por %p557, %p558
      %s560 = ssub.s32 %s38, %s45
      %p561 = scmp.eq.s32.totalorder %s560, 0
      %s563 = sadd.s32 %s562, 1
      %s564 = scalar_select %p561, %s562, %s563
      %p567 = pneg %p561
      %p568 = scmp.eq.s32.totalorder %s38, 1
      %p569 = por %p567, %p568
      %p570 = scmp.ne.s32.totalorder %s562, %s565
      %p571 = scmp.eq.s32.totalorder %s38, 0
      %p572 = por %p570, %p571
      %p573 = scmp.ne.s32.totalorder %s562, %s565
      %p574 = scmp.eq.s32.totalorder %s43, 1
      %p575 = por %p573, %p574
      %p576 = scmp.ne.s32.totalorder %s565, %s566
      %p577 = scmp.eq.s32.totalorder %s43, 0
      %p578 = por %p576, %p577
      %p579 = scmp.ne.s32.totalorder %s565, %s566
      %p580 = scmp.eq.s32.totalorder %s44, 1
      %p581 = por %p579, %p580
      %p583 = scmp.ne.s32.totalorder %s566, %s582
      %p584 = scmp.eq.s32.totalorder %s44, 0
      %p585 = por %p583, %p584
      %s586 = ssub.s32 %s38, %s45
      %p587 = scmp.eq.s32.totalorder %s586, 0
      %s589 = sadd.s32 %s588, 1
      %s590 = scalar_select %p587, %s588, %s589
      %p593 = pneg %p587
      %p594 = scmp.eq.s32.totalorder %s38, 1
      %p595 = por %p593, %p594
      %p596 = scmp.ne.s32.totalorder %s588, %s591
      %p597 = scmp.eq.s32.totalorder %s38, 0
      %p598 = por %p596, %p597
      %p599 = scmp.ne.s32.totalorder %s588, %s591
      %p600 = scmp.eq.s32.totalorder %s43, 1
      %p601 = por %p599, %p600
      %p602 = scmp.ne.s32.totalorder %s591, %s592
      %p603 = scmp.eq.s32.totalorder %s43, 0
      %p604 = por %p602, %p603
      %p605 = scmp.ne.s32.totalorder %s591, %s592
      %p606 = scmp.eq.s32.totalorder %s44, 1
      %p607 = por %p605, %p606
      %p609 = scmp.ne.s32.totalorder %s592, %s608
      %p610 = scmp.eq.s32.totalorder %s44, 0
      %p611 = por %p609, %p610
      %s612 = ssub.s32 %s38, %s45
      %p613 = scmp.eq.s32.totalorder %s612, 0
      %s615 = sadd.s32 %s614, 1
      %s616 = scalar_select %p613, %s614, %s615
      %p619 = pneg %p613
      %p620 = scmp.eq.s32.totalorder %s38, 1
      %p621 = por %p619, %p620
      %p622 = scmp.ne.s32.totalorder %s614, %s617
      %p623 = scmp.eq.s32.totalorder %s38, 0
      %p624 = por %p622, %p623
      %p625 = scmp.ne.s32.totalorder %s614, %s617
      %p626 = scmp.eq.s32.totalorder %s43, 1
      %p627 = por %p625, %p626
      %p628 = scmp.ne.s32.totalorder %s617, %s618
      %p629 = scmp.eq.s32.totalorder %s43, 0
      %p630 = por %p628, %p629
      %p631 = scmp.ne.s32.totalorder %s617, %s618
      %p632 = scmp.eq.s32.totalorder %s44, 1
      %p633 = por %p631, %p632
      %p635 = scmp.ne.s32.totalorder %s618, %s634
      %p636 = scmp.eq.s32.totalorder %s44, 0
      %p637 = por %p635, %p636
      %p638 = scmp.le.s32.totalorder 1, %s38
      %p639 = scmp.lt.s32.totalorder %s38, 3
      %p640 = pnand %p638, %p639
      %p641 = pneg %p640
      // Predicated region
      $region9: #{bert_classification_forward.1} parent=5 // pred_check
        _
      $region10: #{bert_classification_forward.1} parent=5 // pred_check_branch
        %643 = sbr.rel (%p640) target = $region12
      $region11: #{bert_classification_forward.1} parent=5 // pred_region
        %s644 = ssub.s32 %s38, 1
        // Predicated region
        $region13: #{bert_classification_forward.1} parent=11 // pred_check
          %p645 = pneg %p111
        $region14: #{bert_classification_forward.1} parent=11 // pred_check_branch
          %647 = sbr.rel (%p645) target = $region16
        $region15: #{bert_classification_forward.1} parent=11 // pred_region
          _
        $region16: #{bert_classification_forward.1} parent=11 // pred_fallthru
          _
        // Predicated region
        $region17: #{bert_classification_forward.1} parent=11 // pred_check
          %p648 = pneg %p132
        $region18: #{bert_classification_forward.1} parent=11 // pred_check_branch
          %650 = sbr.rel (%p648) target = $region20
        $region19: #{bert_classification_forward.1} parent=11 // pred_region
          _
        $region20: #{bert_classification_forward.1} parent=11 // pred_fallthru
          _
        // Predicated region
        $region21: #{bert_classification_forward.1} parent=11 // pred_check
          %p651 = pneg %p153
        $region22: #{bert_classification_forward.1} parent=11 // pred_check_branch
          %653 = sbr.rel (%p651) target = $region24
        $region23: #{bert_classification_forward.1} parent=11 // pred_region
          %655 = vsyncadd [#allocation3], 0
          %s656 = sshll.u32 %s4, 4
          %s657 = int_to_ptr.hbm [resolvable:$true] %s656
          %s658 = sshll.u32 [#allocation2], 4
          %s659 = int_to_ptr.vmem [resolvable:$true] %s658
          %664 = dma.hbm_to_vmem [thread:$0]  %s657, 6144, %s659, [#allocation3], 192, 192, 12
        $region24: #{bert_classification_forward.1} parent=11 // pred_fallthru
          _
        // Predicated region
        $region25: #{bert_classification_forward.1} parent=11 // pred_check
          %p665 = pneg %p174
        $region26: #{bert_classification_forward.1} parent=11 // pred_check_branch
          %667 = sbr.rel (%p665) target = $region28
        $region27: #{bert_classification_forward.1} parent=11 // pred_region
          _
        $region28: #{bert_classification_forward.1} parent=11 // pred_fallthru
          _
        // Predicated region
        $region29: #{bert_classification_forward.1} parent=11 // pred_check
          %p668 = pneg %p195
        $region30: #{bert_classification_forward.1} parent=11 // pred_check_branch
          %670 = sbr.rel (%p668) target = $region32
        $region31: #{bert_classification_forward.1} parent=11 // pred_region
          _
        $region32: #{bert_classification_forward.1} parent=11 // pred_fallthru
          _
        // Predicated region
        $region33: #{bert_classification_forward.1} parent=11 // pred_check
          %p671 = pneg %p216
        $region34: #{bert_classification_forward.1} parent=11 // pred_check_branch
          %673 = sbr.rel (%p671) target = $region36
        $region35: #{bert_classification_forward.1} parent=11 // pred_region
          _
        $region36: #{bert_classification_forward.1} parent=11 // pred_fallthru
          _
        // Predicated region
        $region37: #{bert_classification_forward.1} parent=11 // pred_check
          %p674 = pneg %p237
        $region38: #{bert_classification_forward.1} parent=11 // pred_check_branch
          %676 = sbr.rel (%p674) target = $region40
        $region39: #{bert_classification_forward.1} parent=11 // pred_region
          _
        $region40: #{bert_classification_forward.1} parent=11 // pred_fallthru
          _
        // Predicated region
        $region41: #{bert_classification_forward.1} parent=11 // pred_check
          %p677 = pneg %p258
        $region42: #{bert_classification_forward.1} parent=11 // pred_check_branch
          %679 = sbr.rel (%p677) target = $region44
        $region43: #{bert_classification_forward.1} parent=11 // pred_region
          _
        $region44: #{bert_classification_forward.1} parent=11 // pred_fallthru
          _
        // Predicated region
        $region45: #{bert_classification_forward.1} parent=11 // pred_check
          %p680 = pneg %p279
        $region46: #{bert_classification_forward.1} parent=11 // pred_check_branch
          %682 = sbr.rel (%p680) target = $region48
        $region47: #{bert_classification_forward.1} parent=11 // pred_region
          _
        $region48: #{bert_classification_forward.1} parent=11 // pred_fallthru
          _
        // Predicated region
        $region49: #{bert_classification_forward.1} parent=11 // pred_check
          %p683 = pneg %p300
        $region50: #{bert_classification_forward.1} parent=11 // pred_check_branch
          %685 = sbr.rel (%p683) target = $region52
        $region51: #{bert_classification_forward.1} parent=11 // pred_region
          _
        $region52: #{bert_classification_forward.1} parent=11 // pred_fallthru
          _
        // Predicated region
        $region53: #{bert_classification_forward.1} parent=11 // pred_check
          %p686 = pneg %p321
        $region54: #{bert_classification_forward.1} parent=11 // pred_check_branch
          %688 = sbr.rel (%p686) target = $region56
        $region55: #{bert_classification_forward.1} parent=11 // pred_region
          %690 = vsyncadd [#allocation6], 0
          %s691 = sshll.u32 %s12, 4
          %s692 = int_to_ptr.hbm [resolvable:$true] %s691
          %s693 = sshll.u32 [#allocation5], 4
          %s694 = int_to_ptr.vmem [resolvable:$true] %s693
          %699 = dma.hbm_to_vmem [thread:$0]  %s692, 4096, %s694, [#allocation6], 64, 64, 4
        $region56: #{bert_classification_forward.1} parent=11 // pred_fallthru
          _
        // Predicated region
        $region57: #{bert_classification_forward.1} parent=11 // pred_check
          %p700 = pneg %p342
        $region58: #{bert_classification_forward.1} parent=11 // pred_check_branch
          %702 = sbr.rel (%p700) target = $region60
        $region59: #{bert_classification_forward.1} parent=11 // pred_region
          _
        $region60: #{bert_classification_forward.1} parent=11 // pred_fallthru
          _
        // Predicated region
        $region61: #{bert_classification_forward.1} parent=11 // pred_check
          %p703 = pneg %p363
        $region62: #{bert_classification_forward.1} parent=11 // pred_check_branch
          %705 = sbr.rel (%p703) target = $region64
        $region63: #{bert_classification_forward.1} parent=11 // pred_region
          _
        $region64: #{bert_classification_forward.1} parent=11 // pred_fallthru
          _
        // Predicated region
        $region65: #{bert_classification_forward.1} parent=11 // pred_check
          %p706 = pneg %p384
        $region66: #{bert_classification_forward.1} parent=11 // pred_check_branch
          %708 = sbr.rel (%p706) target = $region68
        $region67: #{bert_classification_forward.1} parent=11 // pred_region
          _
        $region68: #{bert_classification_forward.1} parent=11 // pred_fallthru
          _
        // Predicated region
        $region69: #{bert_classification_forward.1} parent=11 // pred_check
          %p709 = pneg %p405
        $region70: #{bert_classification_forward.1} parent=11 // pred_check_branch
          %711 = sbr.rel (%p709) target = $region72
        $region71: #{bert_classification_forward.1} parent=11 // pred_region
          _
        $region72: #{bert_classification_forward.1} parent=11 // pred_fallthru
          _
        // Predicated region
        $region73: #{bert_classification_forward.1} parent=11 // pred_check
          %p712 = pneg %p426
        $region74: #{bert_classification_forward.1} parent=11 // pred_check_branch
          %714 = sbr.rel (%p712) target = $region76
        $region75: #{bert_classification_forward.1} parent=11 // pred_region
          _
        $region76: #{bert_classification_forward.1} parent=11 // pred_fallthru
          _
        // Predicated region
        $region77: #{bert_classification_forward.1} parent=11 // pred_check
          %p715 = pneg %p447
        $region78: #{bert_classification_forward.1} parent=11 // pred_check_branch
          %717 = sbr.rel (%p715) target = $region80
        $region79: #{bert_classification_forward.1} parent=11 // pred_region
          _
        $region80: #{bert_classification_forward.1} parent=11 // pred_fallthru
          _
        // Predicated region
        $region81: #{bert_classification_forward.1} parent=11 // pred_check
          %p718 = pneg %p468
        $region82: #{bert_classification_forward.1} parent=11 // pred_check_branch
          %720 = sbr.rel (%p718) target = $region84
        $region83: #{bert_classification_forward.1} parent=11 // pred_region
          _
        $region84: #{bert_classification_forward.1} parent=11 // pred_fallthru
          _
        // Predicated region
        $region85: #{bert_classification_forward.1} parent=11 // pred_check
          %p721 = pneg %p489
        $region86: #{bert_classification_forward.1} parent=11 // pred_check_branch
          %723 = sbr.rel (%p721) target = $region88
        $region87: #{bert_classification_forward.1} parent=11 // pred_region
          _
        $region88: #{bert_classification_forward.1} parent=11 // pred_fallthru
          _
        // Predicated region
        $region89: #{bert_classification_forward.1} parent=11 // pred_check
          %p724 = pneg %p510
        $region90: #{bert_classification_forward.1} parent=11 // pred_check_branch
          %726 = sbr.rel (%p724) target = $region92
        $region91: #{bert_classification_forward.1} parent=11 // pred_region
          _
        $region92: #{bert_classification_forward.1} parent=11 // pred_fallthru
          _
        // Predicated region
        $region93: #{bert_classification_forward.1} parent=11 // pred_check
          %p727 = pneg %p531
        $region94: #{bert_classification_forward.1} parent=11 // pred_check_branch
          %729 = sbr.rel (%p727) target = $region96
        $region95: #{bert_classification_forward.1} parent=11 // pred_region
          _
        $region96: #{bert_classification_forward.1} parent=11 // pred_fallthru
          _
        // Predicated region
        $region97: #{bert_classification_forward.1} parent=11 // pred_check
          %p730 = pneg %p552
        $region98: #{bert_classification_forward.1} parent=11 // pred_check_branch
          %732 = sbr.rel (%p730) target = $region100
        $region99: #{bert_classification_forward.1} parent=11 // pred_region
          _
        $region100: #{bert_classification_forward.1} parent=11 // pred_fallthru
          _
      $region12: #{bert_classification_forward.1} parent=5 // pred_fallthru
        _
      %p733 = scmp.lt.s32.totalorder %s38, 2
      // Predicated region
      $region101: #{bert_classification_forward.1} parent=5 // pred_check
        %p734 = pneg %p733
      $region102: #{bert_classification_forward.1} parent=5 // pred_check_branch
        %736 = sbr.rel (%p734) target = $region104
      $region103: #{bert_classification_forward.1} parent=5 // pred_region
        // Predicated region
        $region105: #{bert_classification_forward.1} parent=103 // pred_check
          %p737 = pneg %p58
        $region106: #{bert_classification_forward.1} parent=103 // pred_check_branch
          %739 = sbr.rel (%p737) target = $region108
        $region107: #{bert_classification_forward.1} parent=103 // pred_region
          %s740 = smul.u32 2, %s38
          %p741 = scmp.lt.s32.totalorder %s740, 3
          %s742 = scalar_select %p741, %s740, 3
          %s743 = smul.addr %s742, 8
          %s744 = scalar_lea.vmem %s0, %s743
          %s745 = smul.u32 2, %s38
        $region108: #{bert_classification_forward.1} parent=103 // pred_fallthru
          _
        // Predicated region
        $region109: #{bert_classification_forward.1} parent=103 // pred_check
          %p746 = pneg %p84
        $region110: #{bert_classification_forward.1} parent=103 // pred_check_branch
          %748 = sbr.rel (%p746) target = $region112
        $region111: #{bert_classification_forward.1} parent=103 // pred_region
          %p749 = scmp.lt.s32.totalorder %s38, 1
          %s750 = scalar_select %p749, %s38, 1
          %s751 = smul.addr %s750, 2
          %s752 = scalar_lea.vmem %s1, %s751
        $region112: #{bert_classification_forward.1} parent=103 // pred_fallthru
          _
        // Predicated region
        $region113: #{bert_classification_forward.1} parent=103 // pred_check
          %p753 = pneg %p572
        $region114: #{bert_classification_forward.1} parent=103 // pred_check_branch
          %755 = sbr.rel (%p753) target = $region116
        $region115: #{bert_classification_forward.1} parent=103 // pred_region
          %p756 = scmp.lt.s32.totalorder %s38, 1
          %s757 = scalar_select %p756, %s38, 1
          %s758 = scalar_lea.vmem %s24, %s757
        $region116: #{bert_classification_forward.1} parent=103 // pred_fallthru
          _
      $region104: #{bert_classification_forward.1} parent=5 // pred_fallthru
        _
      %p759 = scmp.le.s32.totalorder 1, %s38
      %p760 = scmp.lt.s32.totalorder %s38, 3
      %p761 = pnand %p759, %p760
      %p762 = pneg %p761
      // Predicated region
      $region117: #{bert_classification_forward.1} parent=5 // pred_check
        _
      $region118: #{bert_classification_forward.1} parent=5 // pred_check_branch
        %764 = sbr.rel (%p761) target = $region120
      $region119: #{bert_classification_forward.1} parent=5 // pred_region
        %s765 = ssub.s32 %s38, 1
        // Predicated region
        $region121: #{bert_classification_forward.1} parent=119 // pred_check
          %p766 = pneg %p153
        $region122: #{bert_classification_forward.1} parent=119 // pred_check_branch
          %768 = sbr.rel (%p766) target = $region124
        $region123: #{bert_classification_forward.1} parent=119 // pred_region
          %770 = dma.done [#allocation3], 6144
        $region124: #{bert_classification_forward.1} parent=119 // pred_fallthru
          _
        // Predicated region
        $region125: #{bert_classification_forward.1} parent=119 // pred_check
          %p771 = pneg %p321
        $region126: #{bert_classification_forward.1} parent=119 // pred_check_branch
          %773 = sbr.rel (%p771) target = $region128
        $region127: #{bert_classification_forward.1} parent=119 // pred_region
          %775 = dma.done [#allocation6], 4096
        $region128: #{bert_classification_forward.1} parent=119 // pred_fallthru
          _
        %s776 = smul.u32 2, %s43
        %p777 = scmp.lt.s32.totalorder %s776, 3
        %s778 = scalar_select %p777, %s776, 3
        %s779 = smul.addr %s778, 8
        %s780 = scalar_lea.vmem %s0, %s779
        %p781 = pneg %p64
        %p782 = pneg %p61
        %p783 = scmp.lt.s32.totalorder %s43, 1
        %s784 = scalar_select %p783, %s43, 1
        %s785 = smul.addr %s784, 2
        %s786 = scalar_lea.vmem %s1, %s785
        %p787 = pneg %p90
        %p788 = pneg %p87
        %p789 = pneg %p111
        %p790 = pneg %p108
        %p791 = pneg %p132
        %p792 = pneg %p129
        %p793 = pneg %p153
        %p794 = pneg %p150
        %p795 = pneg %p174
        %p796 = pneg %p171
        %p797 = pneg %p195
        %p798 = pneg %p192
        %p799 = pneg %p216
        %p800 = pneg %p213
        %p801 = pneg %p237
        %p802 = pneg %p234
        %p803 = pneg %p258
        %p804 = pneg %p255
        %p805 = pneg %p279
        %p806 = pneg %p276
        %p807 = pneg %p300
        %p808 = pneg %p297
        %p809 = pneg %p321
        %p810 = pneg %p318
        %p811 = pneg %p342
        %p812 = pneg %p339
        %p813 = pneg %p363
        %p814 = pneg %p360
        %p815 = pneg %p384
        %p816 = pneg %p381
        %p817 = pneg %p405
        %p818 = pneg %p402
        %p819 = pneg %p426
        %p820 = pneg %p423
        %p821 = pneg %p447
        %p822 = pneg %p444
        %p823 = pneg %p468
        %p824 = pneg %p465
        %p825 = pneg %p489
        %p826 = pneg %p486
        %p827 = pneg %p510
        %p828 = pneg %p507
        %p829 = pneg %p531
        %p830 = pneg %p528
        %p831 = pneg %p552
        %p832 = pneg %p549
        %p833 = scmp.lt.s32.totalorder %s43, 1
        %s834 = scalar_select %p833, %s43, 1
        %s835 = scalar_lea.vmem %s24, %s834
        %p836 = pneg %p578
        %p837 = pneg %p575
        %p838 = pneg %p604
        %p839 = pneg %p601
        %s840 = sand.u32 %s591, 1
        %s841 = scalar_lea.sflag [#allocation4], %s840
        %s842 = sand.u32 %s591, 1
        %s843 = scalar_lea.vmem [#allocation7], %s842
        %p844 = pneg %p630
        %p845 = pneg %p627
        %p846 = scmp.lt.s32.totalorder %s43, 1
        %s847 = scalar_select %p846, %s43, 1
        %s848 = scalar_lea.vmem %s26, %s847
        %s849 = smul.u32 2, %s43
        %p850 = scmp.lt.s32.totalorder %s849, 3
        %s851 = scalar_select %p850, %s849, 3
        %s852 = smul.addr %s851, 8
        %s853 = scalar_lea.vmem %s0, %s852
        %s854 = smul.u32 2, %s43
        %p855 = scmp.lt.s32.totalorder %s43, 1
        %s856 = scalar_select %p855, %s43, 1
        %s857 = smul.addr %s856, 2
        %s858 = scalar_lea.vmem %s1, %s857
        %p859 = scmp.lt.s32.totalorder %s43, 1
        %s860 = scalar_select %p859, %s43, 1
        %s861 = scalar_lea.vmem %s24, %s860
        %p862 = scmp.lt.s32.totalorder %s43, 1
        %s863 = scalar_select %p862, %s43, 1
        %s864 = scalar_lea.vmem %s26, %s863
        %v866 = vld [vmem:[%s853] sm:$0xff]
        %v867 = vld [vmem:[%s853 + $0x8] sm:$0xff]
        %v868 = vld [vmem:[%s2] sm:$0x1]
        %v869 = vld [vmem:[%s3] sm:$0x1]
        %870 = vadd.xlane.f32.xlu0 %v866
        %v871 = vpop.xlane.xlu0 %870
        %872 = vadd.xlane.f32.xlu0 %v867
        %v873 = vpop.xlane.xlu0 %872
        %v874 = vrcp.pop 128.0
        %v875 = vmul.f32 128.0, %v874
        %v876 = vsub.f32 1.0, %v875
        %v877 = vmul.f32 %v874, %v876
        %v878 = vadd.f32 %v874, %v877
        %vm879 = vweird.f32 %v874
        %v880 = vsel %vm879, %v874, %v878
        %v881 = vmul.f32 %v871, %v880
        %v882 = vmul.f32 %v873, %v880
        %v883 = vsub.f32 %v866, %v881
        %v884 = vsub.f32 %v867, %v882
        %v885 = vmul.f32 %v883, %v883
        %v886 = vmul.f32 %v884, %v884
        %887 = vadd.xlane.f32.xlu0 %v885
        %v888 = vpop.xlane.xlu0 %887
        %889 = vadd.xlane.f32.xlu0 %v886
        %v890 = vpop.xlane.xlu0 %889
        %v891 = vmul.f32 %v888, %v880
        %v892 = vmul.f32 %v890, %v880
        %v893 = vadd.f32 %v891, 1e-12
        %v894 = vadd.f32 %v892, 1e-12
        %v895 = vrsqrt.pop %v893
        %v896 = vmul.f32 %v895, %v893
        %v897 = vmul.f32 %v896, %v895
        %v898 = vmul.f32 0.5, %v897
        %v899 = vsub.f32 1.5, %v898
        %v900 = vmul.f32 %v895, %v899
        %vm901 = vweird.f32 %v893
        %vm902 = vweird.f32 %v895
        %vm903 = vmor %vm901, %vm902
        %v904 = vsel %vm903, %v895, %v900
        %v905 = vrsqrt.pop %v894
        %v906 = vmul.f32 %v905, %v894
        %v907 = vmul.f32 %v906, %v905
        %v908 = vmul.f32 0.5, %v907
        %v909 = vsub.f32 1.5, %v908
        %v910 = vmul.f32 %v905, %v909
        %vm911 = vweird.f32 %v894
        %vm912 = vweird.f32 %v905
        %vm913 = vmor %vm911, %vm912
        %v914 = vsel %vm913, %v905, %v910
        %v915 = vmul.f32 %v883, %v904
        %v916 = vmul.f32 %v884, %v914
        %v918 = vperm.slane %v868, 0
        %v920 = vmul.f32 %v915, %v918
        %v921 = vmul.f32 %v916, %v918
        %v923 = vperm.slane %v869, 0
        %v925 = vadd.f32 %v920, %v923
        %v926 = vadd.f32 %v921, %v923
        %v927 = vld [vmem:[%s858] sm:$0x3]
        %v928 = vcvt.s32.f32 %v927
        %v929 = vsub.f32 1.0, %v928
        %v930 = vmul.f32 %v929, -1e+09
        %v931 = vld [vmem:[#allocation2] sm:$0xff]
        %v932 = vld [vmem:[#allocation2 + $0x8] sm:$0xf]
        %v933 = vld [vmem:[#allocation2 + $0xc] sm:$0xff]
        %v934 = vld [vmem:[#allocation2 + $0x14] sm:$0xf]
        %v935 = vld [vmem:[#allocation2 + $0x18] sm:$0xff]
        %v936 = vld [vmem:[#allocation2 + $0x20] sm:$0xf]
        %v937 = vld [vmem:[#allocation2 + $0x24] sm:$0xff]
        %v938 = vld [vmem:[#allocation2 + $0x2c] sm:$0xf]
        %v939 = vld [vmem:[#allocation2 + $0x30] sm:$0xff]
        %v940 = vld [vmem:[#allocation2 + $0x38] sm:$0xf]
        %v941 = vld [vmem:[#allocation2 + $0x3c] sm:$0xff]
        %v942 = vld [vmem:[#allocation2 + $0x44] sm:$0xf]
        %v943 = vld [vmem:[#allocation2 + $0x48] sm:$0xff]
        %v944 = vld [vmem:[#allocation2 + $0x50] sm:$0xf]
        %v945 = vld [vmem:[#allocation2 + $0x54] sm:$0xff]
        %v946 = vld [vmem:[#allocation2 + $0x5c] sm:$0xf]
        %v947 = vld [vmem:[#allocation2 + $0x60] sm:$0xff]
        %v948 = vld [vmem:[#allocation2 + $0x68] sm:$0xf]
        %v949 = vld [vmem:[#allocation2 + $0x6c] sm:$0xff]
        %v950 = vld [vmem:[#allocation2 + $0x74] sm:$0xf]
        %v951 = vld [vmem:[#allocation2 + $0x78] sm:$0xff]
        %v952 = vld [vmem:[#allocation2 + $0x80] sm:$0xf]
        %v953 = vld [vmem:[#allocation2 + $0x84] sm:$0xff]
        %v954 = vld [vmem:[#allocation2 + $0x8c] sm:$0xf]
        %v955 = vld [vmem:[#allocation2 + $0x90] sm:$0xff]
        %v956 = vld [vmem:[#allocation2 + $0x98] sm:$0xf]
        %v957 = vld [vmem:[#allocation2 + $0x9c] sm:$0xff]
        %v958 = vld [vmem:[#allocation2 + $0xa4] sm:$0xf]
        %v959 = vld [vmem:[#allocation2 + $0xa8] sm:$0xff]
        %v960 = vld [vmem:[#allocation2 + $0xb0] sm:$0xf]
        %v961 = vld [vmem:[#allocation2 + $0xb4] sm:$0xff]
        %v962 = vld [vmem:[#allocation2 + $0xbc] sm:$0xf]
        %v963 = vld [vmem:[%s6] sm:$0xf]
        %v964 = vld [vmem:[%s6 + $0x4] sm:$0xf]
        %v965 = vld [vmem:[%s6 + $0x8] sm:$0xf]
        %v966 = vld [vmem:[%s6 + $0xc] sm:$0xf]
        %v967 = vld [vmem:[%s6 + $0x10] sm:$0xf]
        %v968 = vld [vmem:[%s6 + $0x14] sm:$0xf]
        %v969 = vld [vmem:[%s6 + $0x18] sm:$0xf]
        %v970 = vld [vmem:[%s6 + $0x1c] sm:$0xf]
        %v971 = vld [vmem:[%s6 + $0x20] sm:$0xf]
        %v972 = vld [vmem:[%s6 + $0x24] sm:$0xf]
        %v973 = vld [vmem:[%s6 + $0x28] sm:$0xf]
        %v974 = vld [vmem:[%s6 + $0x2c] sm:$0xf]
        %v975 = vld [vmem:[%s6 + $0x30] sm:$0xf]
        %v976 = vld [vmem:[%s6 + $0x34] sm:$0xf]
        %v977 = vld [vmem:[%s6 + $0x38] sm:$0xf]
        %v978 = vld [vmem:[%s6 + $0x3c] sm:$0xf]
        %v979 = vpack.c.bf16 %v926, %v925
        %v980 = vld [vmem:[%s5] sm:$0x7]
        %v982 = vperm.slane %v980, 0
        %v983 = vperm.slane %v980, 1
        %v984 = vperm.slane %v980, 2
        %v1020 = vunpack.c.l.b16 %v931
        %v1021 = vunpack.c.h.b16 %v931
        %v1022 = vunpack.c.l.b16 %v932
        %v1023 = vunpack.c.l.b16 %v933
        %v1024 = vunpack.c.h.b16 %v933
        %v1025 = vunpack.c.l.b16 %v934
        %v1026 = vunpack.c.l.b16 %v935
        %v1027 = vunpack.c.h.b16 %v935
        %v1028 = vunpack.c.l.b16 %v936
        %v1029 = vunpack.c.l.b16 %v937
        %v1030 = vunpack.c.h.b16 %v937
        %v1031 = vunpack.c.l.b16 %v938
        %v1032 = vunpack.c.l.b16 %v939
        %v1033 = vunpack.c.h.b16 %v939
        %v1034 = vunpack.c.l.b16 %v940
        %v1035 = vunpack.c.l.b16 %v941
        %v1036 = vunpack.c.h.b16 %v941
        %v1037 = vunpack.c.l.b16 %v942
        %v1038 = vunpack.c.l.b16 %v943
        %v1039 = vunpack.c.h.b16 %v943
        %v1040 = vunpack.c.l.b16 %v944
        %v1041 = vunpack.c.l.b16 %v945
        %v1042 = vunpack.c.h.b16 %v945
        %v1043 = vunpack.c.l.b16 %v946
        %v1044 = vunpack.c.l.b16 %v947
        %v1045 = vunpack.c.h.b16 %v947
        %v1046 = vunpack.c.l.b16 %v948
        %v1047 = vunpack.c.l.b16 %v949
        %v1048 = vunpack.c.h.b16 %v949
        %v1049 = vunpack.c.l.b16 %v950
        %v1050 = vunpack.c.l.b16 %v951
        %v1051 = vunpack.c.h.b16 %v951
        %v1052 = vunpack.c.l.b16 %v952
        %v1053 = vunpack.c.l.b16 %v953
        %v1054 = vunpack.c.h.b16 %v953
        %v1055 = vunpack.c.l.b16 %v954
        %v1056 = vunpack.c.l.b16 %v955
        %v1057 = vunpack.c.h.b16 %v955
        %v1058 = vunpack.c.l.b16 %v956
        %v1059 = vunpack.c.l.b16 %v957
        %v1060 = vunpack.c.h.b16 %v957
        %v1061 = vunpack.c.l.b16 %v958
        %v1062 = vunpack.c.l.b16 %v959
        %v1063 = vunpack.c.h.b16 %v959
        %v1064 = vunpack.c.l.b16 %v960
        %v1065 = vunpack.c.l.b16 %v961
        %v1066 = vunpack.c.h.b16 %v961
        %v1067 = vunpack.c.l.b16 %v962
        %v1068 = vpack.c.b16 %v1023, %v1020
        %v1069 = vpack.c.b16 %v1024, %v1021
        %v1070 = vpack.c.b16 %v1025, %v1022
        %v1071 = vpack.c.b16 %v1029, %v1026
        %v1072 = vpack.c.b16 %v1030, %v1027
        %v1073 = vpack.c.b16 %v1031, %v1028
        %v1074 = vpack.c.b16 %v1035, %v1032
        %v1075 = vpack.c.b16 %v1036, %v1033
        %v1076 = vpack.c.b16 %v1037, %v1034
        %v1077 = vpack.c.b16 %v1041, %v1038
        %v1078 = vpack.c.b16 %v1042, %v1039
        %v1079 = vpack.c.b16 %v1043, %v1040
        %v1080 = vpack.c.b16 %v1047, %v1044
        %v1081 = vpack.c.b16 %v1048, %v1045
        %v1082 = vpack.c.b16 %v1049, %v1046
        %v1083 = vpack.c.b16 %v1053, %v1050
        %v1084 = vpack.c.b16 %v1054, %v1051
        %v1085 = vpack.c.b16 %v1055, %v1052
        %v1086 = vpack.c.b16 %v1059, %v1056
        %v1087 = vpack.c.b16 %v1060, %v1057
        %v1088 = vpack.c.b16 %v1061, %v1058
        %v1089 = vpack.c.b16 %v1065, %v1062
        %v1090 = vpack.c.b16 %v1066, %v1063
        %v1091 = vpack.c.b16 %v1067, %v1064
        %1116 = vmatpush.bf16.msra.mxu0 %v1089
        %1117 = vmatpush.bf16.msra.mxu0 %v1086
        %1118 = vmatpush.bf16.msra.mxu0 %v1083
        %1119 = vmatpush.bf16.msra.mxu0 %v1080
        %1120 = vmatpush.bf16.msra.mxu0 %v1077
        %1121 = vmatpush.bf16.msra.mxu0 %v1074
        %1122 = vmatpush.bf16.msra.mxu0 %v1071
        %1123 = vmatpush.bf16.msra.mxu0 %v1068
        %1124 = vmatmul.bf16.gmra.mxu0 %v979
        %v1125 = vpop.f32.mrf.mxu0
        %v1126 = vadd.f32 %v982, %v1125
        %v1127 = vpop.f32.mrf.mxu0
        %v1128 = vadd.f32 %v982, %v1127
        %1129 = vdwg.mxu0
        %1130 = vmatpush.bf16.msra.mxu0 %v1090
        %1131 = vmatpush.bf16.msra.mxu0 %v1087
        %1132 = vmatpush.bf16.msra.mxu0 %v1084
        %1133 = vmatpush.bf16.msra.mxu0 %v1081
        %1134 = vmatpush.bf16.msra.mxu0 %v1078
        %1135 = vmatpush.bf16.msra.mxu0 %v1075
        %1136 = vmatpush.bf16.msra.mxu0 %v1072
        %1137 = vmatpush.bf16.msra.mxu0 %v1069
        %1138 = vmatmul.bf16.gmra.mxu0 %v979
        %v1139 = vpop.f32.mrf.mxu0
        %v1140 = vadd.f32 %v983, %v1139
        %v1141 = vpop.f32.mrf.mxu0
        %v1142 = vadd.f32 %v983, %v1141
        %1143 = vdwg.mxu0
        %1144 = vmatpush.bf16.msra.mxu0 %v1091
        %1145 = vmatpush.bf16.msra.mxu0 %v1088
        %1146 = vmatpush.bf16.msra.mxu0 %v1085
        %1147 = vmatpush.bf16.msra.mxu0 %v1082
        %1148 = vmatpush.bf16.msra.mxu0 %v1079
        %1149 = vmatpush.bf16.msra.mxu0 %v1076
        %1150 = vmatpush.bf16.msra.mxu0 %v1073
        %1151 = vmatpush.bf16.msra.mxu0 %v1070
        %1152 = vmatmul.bf16.gmra.mxu0 %v979
        %v1153 = vpop.f32.mrf.mxu0
        %v1154 = vadd.f32 %v984, %v1153
        %v1155 = vpop.f32.mrf.mxu0
        %v1156 = vadd.f32 %v984, %v1155
        %1157 = vdwg.mxu0
        %v1158 = vpack.c.bf16 %v1126, %v1126
        %v1159 = vpack.c.bf16 %v1128, %v1128
        %v1160 = vpack.c.bf16 %v1140, %v1140
        %v1161 = vpack.c.bf16 %v1142, %v1142
        %v1162 = vpack.c.bf16 %v1154, %v1154
        %v1163 = vpack.c.bf16 %v1156, %v1156
        %vm1164 = vcmask 523264
        %v1166 = vsel %vm1164, %v1158, 0
        %v1169 = vsel %vm1164, %v1160, 0
        %1171 = vmatpush.bf16.xpose.msra.mxu0 0
        %1172 = vmatpush.bf16.xpose.msra.mxu0 0
        %1173 = vmatpush.bf16.xpose.msra.mxu0 0
        %1174 = vmatpush.bf16.xpose.msra.mxu0 0
        %1175 = vmatpush.bf16.xpose.msra.mxu0 0
        %1176 = vmatpush.bf16.xpose.msra.mxu0 0
        %1177 = vmatpush.bf16.xpose.msra.mxu0 0
        %1178 = vmatpush.bf16.xpose.msra.mxu0 %v1169
        %1179 = vmatmul.bf16.gmra.mxu0 %v1166
        %v1180 = vpop.f32.mrf.mxu0
        %v1181 = vadd.f32 0.0, %v1180
        %v1182 = vpop.f32.mrf.mxu0
        %1183 = vdwg.mxu0
        %v1184 = vmul.f32 %v1181, 0.125
        %v1185 = vperm.slane %v930, 0
        %v1186 = vadd.f32 %v1184, %v1185
        %vm1187 = vcmask 64512
        %v1188 = vsel %vm1187, %v1186, -inf
        %1189 = vmax.xlane.f32.xlu0 %v1188
        %v1190 = vpop.xlane.xlu0 %1189
        %v1191 = vsub.f32 %v1186, %v1190
        %v1192 = vmul.f32 %v1191, 1.442695
        %v1193 = vpow.pop %v1192
        %v1194 = vsel %vm1187, %v1193, 0.0
        %1195 = vadd.xlane.f32.xlu0 %v1194
        %v1196 = vpop.xlane.xlu0 %1195
        %v1197 = vrcp.pop %v1196
        %v1198 = vmul.f32 %v1193, %v1197
        %v1199 = vpack.c.bf16 %v1198, %v1198
        %v1201 = vsel %vm1187, %v1199, 0
        %vm1203 = vcmask 1043456
        %v1205 = vsel %vm1203, %v1162, 0
        %1207 = vmatpush.bf16.msra.mxu0 0
        %1208 = vmatpush.bf16.msra.mxu0 0
        %1209 = vmatpush.bf16.msra.mxu0 0
        %1210 = vmatpush.bf16.msra.mxu0 0
        %1211 = vmatpush.bf16.msra.mxu0 0
        %1212 = vmatpush.bf16.msra.mxu0 0
        %1213 = vmatpush.bf16.msra.mxu0 0
        %1214 = vmatpush.bf16.msra.mxu0 %v1205
        %1215 = vmatmul.bf16.gmra.mxu0 %v1201
        %v1216 = vpop.f32.mrf.mxu0
        %v1217 = vadd.f32 0.0, %v1216
        %v1218 = vpop.f32.mrf.mxu0
        %1219 = vdwg.mxu0
        %v1221 = vsel %vm1164, %v1159, 0
        %v1224 = vsel %vm1164, %v1161, 0
        %1226 = vmatpush.bf16.xpose.msra.mxu0 0
        %1227 = vmatpush.bf16.xpose.msra.mxu0 0
        %1228 = vmatpush.bf16.xpose.msra.mxu0 0
        %1229 = vmatpush.bf16.xpose.msra.mxu0 0
        %1230 = vmatpush.bf16.xpose.msra.mxu0 0
        %1231 = vmatpush.bf16.xpose.msra.mxu0 0
        %1232 = vmatpush.bf16.xpose.msra.mxu0 0
        %1233 = vmatpush.bf16.xpose.msra.mxu0 %v1224
        %1234 = vmatmul.bf16.gmra.mxu0 %v1221
        %v1235 = vpop.f32.mrf.mxu0
        %v1236 = vadd.f32 0.0, %v1235
        %v1237 = vpop.f32.mrf.mxu0
        %1238 = vdwg.mxu0
        %v1239 = vmul.f32 %v1236, 0.125
        %v1240 = vperm.slane %v930, 1
        %v1241 = vadd.f32 %v1239, %v1240
        %v1242 = vsel %vm1187, %v1241, -inf
        %1243 = vmax.xlane.f32.xlu0 %v1242
        %v1244 = vpop.xlane.xlu0 %1243
        %v1245 = vsub.f32 %v1241, %v1244
        %v1246 = vmul.f32 %v1245, 1.442695
        %v1247 = vpow.pop %v1246
        %v1248 = vsel %vm1187, %v1247, 0.0
        %1249 = vadd.xlane.f32.xlu0 %v1248
        %v1250 = vpop.xlane.xlu0 %1249
        %v1251 = vrcp.pop %v1250
        %v1252 = vmul.f32 %v1247, %v1251
        %v1253 = vpack.c.bf16 %v1252, %v1252
        %v1255 = vsel %vm1187, %v1253, 0
        %v1258 = vsel %vm1203, %v1163, 0
        %1260 = vmatpush.bf16.msra.mxu0 0
        %1261 = vmatpush.bf16.msra.mxu0 0
        %1262 = vmatpush.bf16.msra.mxu0 0
        %1263 = vmatpush.bf16.msra.mxu0 0
        %1264 = vmatpush.bf16.msra.mxu0 0
        %1265 = vmatpush.bf16.msra.mxu0 0
        %1266 = vmatpush.bf16.msra.mxu0 0
        %1267 = vmatpush.bf16.msra.mxu0 %v1258
        %1268 = vmatmul.bf16.gmra.mxu0 %v1255
        %v1269 = vpop.f32.mrf.mxu0
        %v1270 = vadd.f32 0.0, %v1269
        %v1271 = vpop.f32.mrf.mxu0
        %1272 = vdwg.mxu0
        %v1273 = vpack.c.bf16 %v1270, %v1217
        %v1275 = vunpack.c.l.b16 %v1158
        %v1276 = vpack.c.b16 %v1275, %v1275
        %1277 = vrot.lane.b32.xlu0 %v1276, 64
        %v1278 = vpop.permute.xlu0 %1277
        %v1280 = vunpack.c.l.b16 %v1160
        %v1281 = vpack.c.b16 %v1280, %v1280
        %1282 = vrot.lane.b32.xlu0 %v1281, 64
        %v1283 = vpop.permute.xlu0 %1282
        %v1285 = vsel %vm1164, %v1278, 0
        %v1288 = vsel %vm1164, %v1283, 0
        %1290 = vmatpush.bf16.xpose.msra.mxu0 0
        %1291 = vmatpush.bf16.xpose.msra.mxu0 0
        %1292 = vmatpush.bf16.xpose.msra.mxu0 0
        %1293 = vmatpush.bf16.xpose.msra.mxu0 0
        %1294 = vmatpush.bf16.xpose.msra.mxu0 0
        %1295 = vmatpush.bf16.xpose.msra.mxu0 0
        %1296 = vmatpush.bf16.xpose.msra.mxu0 0
        %1297 = vmatpush.bf16.xpose.msra.mxu0 %v1288
        %1298 = vmatmul.bf16.gmra.mxu0 %v1285
        %v1299 = vpop.f32.mrf.mxu0
        %v1300 = vadd.f32 0.0, %v1299
        %v1301 = vpop.f32.mrf.mxu0
        %1302 = vdwg.mxu0
        %v1303 = vmul.f32 %v1300, 0.125
        %v1304 = vadd.f32 %v1303, %v1185
        %v1305 = vsel %vm1187, %v1304, -inf
        %1306 = vmax.xlane.f32.xlu0 %v1305
        %v1307 = vpop.xlane.xlu0 %1306
        %v1308 = vsub.f32 %v1304, %v1307
        %v1309 = vmul.f32 %v1308, 1.442695
        %v1310 = vpow.pop %v1309
        %v1311 = vsel %vm1187, %v1310, 0.0
        %1312 = vadd.xlane.f32.xlu0 %v1311
        %v1313 = vpop.xlane.xlu0 %1312
        %v1314 = vrcp.pop %v1313
        %v1315 = vmul.f32 %v1310, %v1314
        %v1316 = vpack.c.bf16 %v1315, %v1315
        %v1318 = vunpack.c.l.b16 %v1162
        %v1319 = vpack.c.b16 %v1318, %v1318
        %1320 = vrot.lane.b32.xlu0 %v1319, 64
        %v1321 = vpop.permute.xlu0 %1320
        %v1323 = vsel %vm1187, %v1316, 0
        %v1326 = vsel %vm1203, %v1321, 0
        %1328 = vmatpush.bf16.msra.mxu0 0
        %1329 = vmatpush.bf16.msra.mxu0 0
        %1330 = vmatpush.bf16.msra.mxu0 0
        %1331 = vmatpush.bf16.msra.mxu0 0
        %1332 = vmatpush.bf16.msra.mxu0 0
        %1333 = vmatpush.bf16.msra.mxu0 0
        %1334 = vmatpush.bf16.msra.mxu0 0
        %1335 = vmatpush.bf16.msra.mxu0 %v1326
        %1336 = vmatmul.bf16.gmra.mxu0 %v1323
        %v1337 = vpop.f32.mrf.mxu0
        %v1338 = vadd.f32 0.0, %v1337
        %v1339 = vpop.f32.mrf.mxu0
        %1340 = vdwg.mxu0
        %v1342 = vunpack.c.l.b16 %v1159
        %v1343 = vpack.c.b16 %v1342, %v1342
        %1344 = vrot.lane.b32.xlu0 %v1343, 64
        %v1345 = vpop.permute.xlu0 %1344
        %v1347 = vunpack.c.l.b16 %v1161
        %v1348 = vpack.c.b16 %v1347, %v1347
        %1349 = vrot.lane.b32.xlu0 %v1348, 64
        %v1350 = vpop.permute.xlu0 %1349
        %v1352 = vsel %vm1164, %v1345, 0
        %v1355 = vsel %vm1164, %v1350, 0
        %1357 = vmatpush.bf16.xpose.msra.mxu0 0
        %1358 = vmatpush.bf16.xpose.msra.mxu0 0
        %1359 = vmatpush.bf16.xpose.msra.mxu0 0
        %1360 = vmatpush.bf16.xpose.msra.mxu0 0
        %1361 = vmatpush.bf16.xpose.msra.mxu0 0
        %1362 = vmatpush.bf16.xpose.msra.mxu0 0
        %1363 = vmatpush.bf16.xpose.msra.mxu0 0
        %1364 = vmatpush.bf16.xpose.msra.mxu0 %v1355
        %1365 = vmatmul.bf16.gmra.mxu0 %v1352
        %v1366 = vpop.f32.mrf.mxu0
        %v1367 = vadd.f32 0.0, %v1366
        %v1368 = vpop.f32.mrf.mxu0
        %1369 = vdwg.mxu0
        %v1370 = vmul.f32 %v1367, 0.125
        %v1371 = vadd.f32 %v1370, %v1240
        %v1372 = vsel %vm1187, %v1371, -inf
        %1373 = vmax.xlane.f32.xlu0 %v1372
        %v1374 = vpop.xlane.xlu0 %1373
        %v1375 = vsub.f32 %v1371, %v1374
        %v1376 = vmul.f32 %v1375, 1.442695
        %v1377 = vpow.pop %v1376
        %v1378 = vsel %vm1187, %v1377, 0.0
        %1379 = vadd.xlane.f32.xlu0 %v1378
        %v1380 = vpop.xlane.xlu0 %1379
        %v1381 = vrcp.pop %v1380
        %v1382 = vmul.f32 %v1377, %v1381
        %v1383 = vpack.c.bf16 %v1382, %v1382
        %v1385 = vunpack.c.l.b16 %v1163
        %v1386 = vpack.c.b16 %v1385, %v1385
        %1387 = vrot.lane.b32.xlu0 %v1386, 64
        %v1388 = vpop.permute.xlu0 %1387
        %v1390 = vsel %vm1187, %v1383, 0
        %v1393 = vsel %vm1203, %v1388, 0
        %1395 = vmatpush.bf16.msra.mxu0 0
        %1396 = vmatpush.bf16.msra.mxu0 0
        %1397 = vmatpush.bf16.msra.mxu0 0
        %1398 = vmatpush.bf16.msra.mxu0 0
        %1399 = vmatpush.bf16.msra.mxu0 0
        %1400 = vmatpush.bf16.msra.mxu0 0
        %1401 = vmatpush.bf16.msra.mxu0 0
        %1402 = vmatpush.bf16.msra.mxu0 %v1393
        %1403 = vmatmul.bf16.gmra.mxu0 %v1390
        %v1404 = vpop.f32.mrf.mxu0
        %v1405 = vadd.f32 0.0, %v1404
        %v1406 = vpop.f32.mrf.mxu0
        %1407 = vdwg.mxu0
        %v1408 = vpack.c.bf16 %v1405, %v1338
        %v1417 = vunpack.c.l.b16 %v971
        %v1418 = vunpack.c.l.b16 %v972
        %v1419 = vunpack.c.l.b16 %v973
        %v1420 = vunpack.c.l.b16 %v974
        %v1421 = vunpack.c.l.b16 %v975
        %v1422 = vunpack.c.l.b16 %v976
        %v1423 = vunpack.c.l.b16 %v977
        %v1424 = vunpack.c.l.b16 %v978
        %v1425 = vpack.c.b16 %v1418, %v1417
        %v1426 = vpack.c.b16 %v1420, %v1419
        %v1427 = vpack.c.b16 %v1422, %v1421
        %v1428 = vpack.c.b16 %v1424, %v1423
        %v1434 = vsel %vm1164, %v1408, 0
        %1436 = vmatpush.bf16.msra.mxu0 0
        %1437 = vmatpush.bf16.msra.mxu0 0
        %1438 = vmatpush.bf16.msra.mxu0 0
        %1439 = vmatpush.bf16.msra.mxu0 0
        %1440 = vmatpush.bf16.msra.mxu0 %v1428
        %1441 = vmatpush.bf16.msra.mxu0 %v1427
        %1442 = vmatpush.bf16.msra.mxu0 %v1426
        %1443 = vmatpush.bf16.msra.mxu0 %v1425
        %1444 = vmatmul.bf16.gmra.mxu0 %v1434
        %v1445 = vpop.f32.mrf.mxu0
        %v1446 = vadd.f32 0.0, %v1445
        %v1447 = vpop.f32.mrf.mxu0
        %v1448 = vadd.f32 0.0, %v1447
        %1449 = vdwg.mxu0
        %v1458 = vunpack.c.l.b16 %v963
        %v1459 = vunpack.c.l.b16 %v964
        %v1460 = vunpack.c.l.b16 %v965
        %v1461 = vunpack.c.l.b16 %v966
        %v1462 = vunpack.c.l.b16 %v967
        %v1463 = vunpack.c.l.b16 %v968
        %v1464 = vunpack.c.l.b16 %v969
        %v1465 = vunpack.c.l.b16 %v970
        %v1466 = vpack.c.b16 %v1459, %v1458
        %v1467 = vpack.c.b16 %v1461, %v1460
        %v1468 = vpack.c.b16 %v1463, %v1462
        %v1469 = vpack.c.b16 %v1465, %v1464
        %v1475 = vsel %vm1164, %v1273, 0
        %1477 = vmatpush.bf16.msra.mxu0 0
        %1478 = vmatpush.bf16.msra.mxu0 0
        %1479 = vmatpush.bf16.msra.mxu0 0
        %1480 = vmatpush.bf16.msra.mxu0 0
        %1481 = vmatpush.bf16.msra.mxu0 %v1469
        %1482 = vmatpush.bf16.msra.mxu0 %v1468
        %1483 = vmatpush.bf16.msra.mxu0 %v1467
        %1484 = vmatpush.bf16.msra.mxu0 %v1466
        %1485 = vmatmul.bf16.gmra.mxu0 %v1475
        %v1486 = vpop.f32.mrf.mxu0
        %v1487 = vadd.f32 %v1446, %v1486
        %v1488 = vpop.f32.mrf.mxu0
        %v1489 = vadd.f32 %v1448, %v1488
        %1490 = vdwg.mxu0
        %v1491 = vld [vmem:[%s7] sm:$0x1]
        %v1493 = vperm.slane %v1491, 0
        %v1495 = vadd.f32 %v1487, %v1493
        %v1496 = vadd.f32 %v1489, %v1493
        %v1497 = vadd.f32 %v1495, %v925
        %v1498 = vadd.f32 %v1496, %v926
        %v1499 = vld [vmem:[%s8] sm:$0x1]
        %v1500 = vld [vmem:[%s9] sm:$0x1]
        %1501 = vadd.xlane.f32.xlu0 %v1497
        %v1502 = vpop.xlane.xlu0 %1501
        %1503 = vadd.xlane.f32.xlu0 %v1498
        %v1504 = vpop.xlane.xlu0 %1503
        %v1505 = vmul.f32 %v1502, %v880
        %v1506 = vmul.f32 %v1504, %v880
        %v1507 = vsub.f32 %v1497, %v1505
        %v1508 = vsub.f32 %v1498, %v1506
        %v1509 = vmul.f32 %v1507, %v1507
        %v1510 = vmul.f32 %v1508, %v1508
        %1511 = vadd.xlane.f32.xlu0 %v1509
        %v1512 = vpop.xlane.xlu0 %1511
        %1513 = vadd.xlane.f32.xlu0 %v1510
        %v1514 = vpop.xlane.xlu0 %1513
        %v1515 = vmul.f32 %v1512, %v880
        %v1516 = vmul.f32 %v1514, %v880
        %v1517 = vadd.f32 %v1515, 1e-12
        %v1518 = vadd.f32 %v1516, 1e-12
        %v1519 = vrsqrt.pop %v1517
        %v1520 = vmul.f32 %v1519, %v1517
        %v1521 = vmul.f32 %v1520, %v1519
        %v1522 = vmul.f32 0.5, %v1521
        %v1523 = vsub.f32 1.5, %v1522
        %v1524 = vmul.f32 %v1519, %v1523
        %vm1525 = vweird.f32 %v1517
        %vm1526 = vweird.f32 %v1519
        %vm1527 = vmor %vm1525, %vm1526
        %v1528 = vsel %vm1527, %v1519, %v1524
        %v1529 = vrsqrt.pop %v1518
        %v1530 = vmul.f32 %v1529, %v1518
        %v1531 = vmul.f32 %v1530, %v1529
        %v1532 = vmul.f32 0.5, %v1531
        %v1533 = vsub.f32 1.5, %v1532
        %v1534 = vmul.f32 %v1529, %v1533
        %vm1535 = vweird.f32 %v1518
        %vm1536 = vweird.f32 %v1529
        %vm1537 = vmor %vm1535, %vm1536
        %v1538 = vsel %vm1537, %v1529, %v1534
        %v1539 = vmul.f32 %v1507, %v1528
        %v1540 = vmul.f32 %v1508, %v1538
        %v1542 = vperm.slane %v1499, 0
        %v1544 = vmul.f32 %v1539, %v1542
        %v1545 = vmul.f32 %v1540, %v1542
        %v1547 = vperm.slane %v1500, 0
        %v1549 = vadd.f32 %v1544, %v1547
        %v1550 = vadd.f32 %v1545, %v1547
        %v1551 = vpack.c.bf16 %v1550, %v1549
        %v1552 = vld [vmem:[%s10] sm:$0xff]
        %v1553 = vld [vmem:[%s10 + $0x8] sm:$0xff]
        %v1554 = vld [vmem:[%s10 + $0x10] sm:$0xff]
        %v1555 = vld [vmem:[%s10 + $0x18] sm:$0xff]
        %v1556 = vld [vmem:[%s10 + $0x20] sm:$0xff]
        %v1557 = vld [vmem:[%s10 + $0x28] sm:$0xff]
        %v1558 = vld [vmem:[%s10 + $0x30] sm:$0xff]
        %v1559 = vld [vmem:[%s10 + $0x38] sm:$0xff]
        %v1560 = vld [vmem:[%s10 + $0x40] sm:$0xff]
        %v1561 = vld [vmem:[%s10 + $0x48] sm:$0xff]
        %v1562 = vld [vmem:[%s10 + $0x50] sm:$0xff]
        %v1563 = vld [vmem:[%s10 + $0x58] sm:$0xff]
        %v1564 = vld [vmem:[%s10 + $0x60] sm:$0xff]
        %v1565 = vld [vmem:[%s10 + $0x68] sm:$0xff]
        %v1566 = vld [vmem:[%s10 + $0x70] sm:$0xff]
        %v1567 = vld [vmem:[%s10 + $0x78] sm:$0xff]
        %v1568 = vld [vmem:[%s11] sm:$0x3]
        %v1570 = vperm.slane %v1568, 0
        %v1571 = vperm.slane %v1568, 1
        %v1590 = vunpack.c.l.b16 %v1552
        %v1591 = vunpack.c.h.b16 %v1552
        %v1592 = vunpack.c.l.b16 %v1553
        %v1593 = vunpack.c.h.b16 %v1553
        %v1594 = vunpack.c.l.b16 %v1554
        %v1595 = vunpack.c.h.b16 %v1554
        %v1596 = vunpack.c.l.b16 %v1555
        %v1597 = vunpack.c.h.b16 %v1555
        %v1598 = vunpack.c.l.b16 %v1556
        %v1599 = vunpack.c.h.b16 %v1556
        %v1600 = vunpack.c.l.b16 %v1557
        %v1601 = vunpack.c.h.b16 %v1557
        %v1602 = vunpack.c.l.b16 %v1558
        %v1603 = vunpack.c.h.b16 %v1558
        %v1604 = vunpack.c.l.b16 %v1559
        %v1605 = vunpack.c.h.b16 %v1559
        %v1606 = vunpack.c.l.b16 %v1560
        %v1607 = vunpack.c.h.b16 %v1560
        %v1608 = vunpack.c.l.b16 %v1561
        %v1609 = vunpack.c.h.b16 %v1561
        %v1610 = vunpack.c.l.b16 %v1562
        %v1611 = vunpack.c.h.b16 %v1562
        %v1612 = vunpack.c.l.b16 %v1563
        %v1613 = vunpack.c.h.b16 %v1563
        %v1614 = vunpack.c.l.b16 %v1564
        %v1615 = vunpack.c.h.b16 %v1564
        %v1616 = vunpack.c.l.b16 %v1565
        %v1617 = vunpack.c.h.b16 %v1565
        %v1618 = vunpack.c.l.b16 %v1566
        %v1619 = vunpack.c.h.b16 %v1566
        %v1620 = vunpack.c.l.b16 %v1567
        %v1621 = vunpack.c.h.b16 %v1567
        %v1622 = vpack.c.b16 %v1592, %v1590
        %v1623 = vpack.c.b16 %v1593, %v1591
        %v1624 = vpack.c.b16 %v1596, %v1594
        %v1625 = vpack.c.b16 %v1597, %v1595
        %v1626 = vpack.c.b16 %v1600, %v1598
        %v1627 = vpack.c.b16 %v1601, %v1599
        %v1628 = vpack.c.b16 %v1604, %v1602
        %v1629 = vpack.c.b16 %v1605, %v1603
        %v1630 = vpack.c.b16 %v1608, %v1606
        %v1631 = vpack.c.b16 %v1609, %v1607
        %v1632 = vpack.c.b16 %v1612, %v1610
        %v1633 = vpack.c.b16 %v1613, %v1611
        %v1634 = vpack.c.b16 %v1616, %v1614
        %v1635 = vpack.c.b16 %v1617, %v1615
        %v1636 = vpack.c.b16 %v1620, %v1618
        %v1637 = vpack.c.b16 %v1621, %v1619
        %1654 = vmatpush.bf16.msra.mxu0 %v1636
        %1655 = vmatpush.bf16.msra.mxu0 %v1634
        %1656 = vmatpush.bf16.msra.mxu0 %v1632
        %1657 = vmatpush.bf16.msra.mxu0 %v1630
        %1658 = vmatpush.bf16.msra.mxu0 %v1628
        %1659 = vmatpush.bf16.msra.mxu0 %v1626
        %1660 = vmatpush.bf16.msra.mxu0 %v1624
        %1661 = vmatpush.bf16.msra.mxu0 %v1622
        %1662 = vmatmul.bf16.gmra.mxu0 %v1551
        %v1663 = vpop.f32.mrf.mxu0
        %v1664 = vadd.f32 %v1570, %v1663
        %v1665 = vpop.f32.mrf.mxu0
        %v1666 = vadd.f32 %v1570, %v1665
        %1667 = vdwg.mxu0
        %1668 = vmatpush.bf16.msra.mxu0 %v1637
        %1669 = vmatpush.bf16.msra.mxu0 %v1635
        %1670 = vmatpush.bf16.msra.mxu0 %v1633
        %1671 = vmatpush.bf16.msra.mxu0 %v1631
        %1672 = vmatpush.bf16.msra.mxu0 %v1629
        %1673 = vmatpush.bf16.msra.mxu0 %v1627
        %1674 = vmatpush.bf16.msra.mxu0 %v1625
        %1675 = vmatpush.bf16.msra.mxu0 %v1623
        %1676 = vmatmul.bf16.gmra.mxu0 %v1551
        %v1677 = vpop.f32.mrf.mxu0
        %v1678 = vadd.f32 %v1571, %v1677
        %v1679 = vpop.f32.mrf.mxu0
        %v1680 = vadd.f32 %v1571, %v1679
        %1681 = vdwg.mxu0
        %v1682 = vmul.f32 %v1664, %v1664
        %v1683 = vmul.f32 %v1678, %v1678
        %v1684 = vmul.f32 %v1666, %v1666
        %v1685 = vmul.f32 %v1680, %v1680
        %v1686 = vmul.f32 %v1664, %v1682
        %v1687 = vmul.f32 %v1678, %v1683
        %v1688 = vmul.f32 %v1666, %v1684
        %v1689 = vmul.f32 %v1680, %v1685
        %v1690 = vmul.f32 %v1686, 0.044715
        %v1691 = vmul.f32 %v1687, 0.044715
        %v1692 = vmul.f32 %v1688, 0.044715
        %v1693 = vmul.f32 %v1689, 0.044715
        %v1694 = vadd.f32 %v1664, %v1690
        %v1695 = vadd.f32 %v1678, %v1691
        %v1696 = vadd.f32 %v1666, %v1692
        %v1697 = vadd.f32 %v1680, %v1693
        %v1698 = vmul.f32 %v1694, 0.7978846
        %v1699 = vmul.f32 %v1695, 0.7978846
        %v1700 = vmul.f32 %v1696, 0.7978846
        %v1701 = vmul.f32 %v1697, 0.7978846
        %v1702 = vtanh.pop %v1698
        %v1703 = vtanh.pop %v1699
        %v1704 = vtanh.pop %v1700
        %v1705 = vtanh.pop %v1701
        %v1706 = vadd.f32 %v1702, 1.0
        %v1707 = vadd.f32 %v1703, 1.0
        %v1708 = vadd.f32 %v1704, 1.0
        %v1709 = vadd.f32 %v1705, 1.0
        %v1710 = vmul.f32 %v1706, 0.5
        %v1711 = vmul.f32 %v1707, 0.5
        %v1712 = vmul.f32 %v1708, 0.5
        %v1713 = vmul.f32 %v1709, 0.5
        %v1714 = vmul.f32 %v1664, %v1710
        %v1715 = vmul.f32 %v1678, %v1711
        %v1716 = vmul.f32 %v1666, %v1712
        %v1717 = vmul.f32 %v1680, %v1713
        %v1718 = vpack.c.bf16 %v1716, %v1714
        %v1719 = vpack.c.bf16 %v1717, %v1715
        %v1720 = vld [vmem:[#allocation5] sm:$0xf]
        %v1721 = vld [vmem:[#allocation5 + $0x4] sm:$0xf]
        %v1722 = vld [vmem:[#allocation5 + $0x8] sm:$0xf]
        %v1723 = vld [vmem:[#allocation5 + $0xc] sm:$0xf]
        %v1724 = vld [vmem:[#allocation5 + $0x10] sm:$0xf]
        %v1725 = vld [vmem:[#allocation5 + $0x14] sm:$0xf]
        %v1726 = vld [vmem:[#allocation5 + $0x18] sm:$0xf]
        %v1727 = vld [vmem:[#allocation5 + $0x1c] sm:$0xf]
        %v1728 = vld [vmem:[#allocation5 + $0x20] sm:$0xf]
        %v1729 = vld [vmem:[#allocation5 + $0x24] sm:$0xf]
        %v1730 = vld [vmem:[#allocation5 + $0x28] sm:$0xf]
        %v1731 = vld [vmem:[#allocation5 + $0x2c] sm:$0xf]
        %v1732 = vld [vmem:[#allocation5 + $0x30] sm:$0xf]
        %v1733 = vld [vmem:[#allocation5 + $0x34] sm:$0xf]
        %v1734 = vld [vmem:[#allocation5 + $0x38] sm:$0xf]
        %v1735 = vld [vmem:[#allocation5 + $0x3c] sm:$0xf]
        %v1736 = vld [vmem:[#allocation5 + $0x40] sm:$0xf]
        %v1737 = vld [vmem:[#allocation5 + $0x44] sm:$0xf]
        %v1738 = vld [vmem:[#allocation5 + $0x48] sm:$0xf]
        %v1739 = vld [vmem:[#allocation5 + $0x4c] sm:$0xf]
        %v1740 = vld [vmem:[#allocation5 + $0x50] sm:$0xf]
        %v1741 = vld [vmem:[#allocation5 + $0x54] sm:$0xf]
        %v1742 = vld [vmem:[#allocation5 + $0x58] sm:$0xf]
        %v1743 = vld [vmem:[#allocation5 + $0x5c] sm:$0xf]
        %v1744 = vld [vmem:[#allocation5 + $0x60] sm:$0xf]
        %v1745 = vld [vmem:[#allocation5 + $0x64] sm:$0xf]
        %v1746 = vld [vmem:[#allocation5 + $0x68] sm:$0xf]
        %v1747 = vld [vmem:[#allocation5 + $0x6c] sm:$0xf]
        %v1748 = vld [vmem:[#allocation5 + $0x70] sm:$0xf]
        %v1749 = vld [vmem:[#allocation5 + $0x74] sm:$0xf]
        %v1750 = vld [vmem:[#allocation5 + $0x78] sm:$0xf]
        %v1751 = vld [vmem:[#allocation5 + $0x7c] sm:$0xf]
        %v1752 = vld [vmem:[%s13] sm:$0x1]
        %v1754 = vperm.slane %v1752, 0
        %v1788 = vunpack.c.l.b16 %v1720
        %v1789 = vunpack.c.l.b16 %v1721
        %v1790 = vunpack.c.l.b16 %v1722
        %v1791 = vunpack.c.l.b16 %v1723
        %v1792 = vunpack.c.l.b16 %v1724
        %v1793 = vunpack.c.l.b16 %v1725
        %v1794 = vunpack.c.l.b16 %v1726
        %v1795 = vunpack.c.l.b16 %v1727
        %v1796 = vunpack.c.l.b16 %v1728
        %v1797 = vunpack.c.l.b16 %v1729
        %v1798 = vunpack.c.l.b16 %v1730
        %v1799 = vunpack.c.l.b16 %v1731
        %v1800 = vunpack.c.l.b16 %v1732
        %v1801 = vunpack.c.l.b16 %v1733
        %v1802 = vunpack.c.l.b16 %v1734
        %v1803 = vunpack.c.l.b16 %v1735
        %v1804 = vunpack.c.l.b16 %v1736
        %v1805 = vunpack.c.l.b16 %v1737
        %v1806 = vunpack.c.l.b16 %v1738
        %v1807 = vunpack.c.l.b16 %v1739
        %v1808 = vunpack.c.l.b16 %v1740
        %v1809 = vunpack.c.l.b16 %v1741
        %v1810 = vunpack.c.l.b16 %v1742
        %v1811 = vunpack.c.l.b16 %v1743
        %v1812 = vunpack.c.l.b16 %v1744
        %v1813 = vunpack.c.l.b16 %v1745
        %v1814 = vunpack.c.l.b16 %v1746
        %v1815 = vunpack.c.l.b16 %v1747
        %v1816 = vunpack.c.l.b16 %v1748
        %v1817 = vunpack.c.l.b16 %v1749
        %v1818 = vunpack.c.l.b16 %v1750
        %v1819 = vunpack.c.l.b16 %v1751
        %v1820 = vpack.c.b16 %v1789, %v1788
        %v1821 = vpack.c.b16 %v1791, %v1790
        %v1822 = vpack.c.b16 %v1793, %v1792
        %v1823 = vpack.c.b16 %v1795, %v1794
        %v1824 = vpack.c.b16 %v1797, %v1796
        %v1825 = vpack.c.b16 %v1799, %v1798
        %v1826 = vpack.c.b16 %v1801, %v1800
        %v1827 = vpack.c.b16 %v1803, %v1802
        %v1828 = vpack.c.b16 %v1805, %v1804
        %v1829 = vpack.c.b16 %v1807, %v1806
        %v1830 = vpack.c.b16 %v1809, %v1808
        %v1831 = vpack.c.b16 %v1811, %v1810
        %v1832 = vpack.c.b16 %v1813, %v1812
        %v1833 = vpack.c.b16 %v1815, %v1814
        %v1834 = vpack.c.b16 %v1817, %v1816
        %v1835 = vpack.c.b16 %v1819, %v1818
        %1852 = vmatpush.bf16.msra.mxu0 %v1827
        %1853 = vmatpush.bf16.msra.mxu0 %v1826
        %1854 = vmatpush.bf16.msra.mxu0 %v1825
        %1855 = vmatpush.bf16.msra.mxu0 %v1824
        %1856 = vmatpush.bf16.msra.mxu0 %v1823
        %1857 = vmatpush.bf16.msra.mxu0 %v1822
        %1858 = vmatpush.bf16.msra.mxu0 %v1821
        %1859 = vmatpush.bf16.msra.mxu0 %v1820
        %1860 = vmatmul.bf16.gmra.mxu0 %v1718
        %v1861 = vpop.f32.mrf.mxu0
        %v1862 = vadd.f32 %v1754, %v1861
        %v1863 = vpop.f32.mrf.mxu0
        %v1864 = vadd.f32 %v1754, %v1863
        %1865 = vdwg.mxu0
        %1866 = vmatpush.bf16.msra.mxu0 %v1835
        %1867 = vmatpush.bf16.msra.mxu0 %v1834
        %1868 = vmatpush.bf16.msra.mxu0 %v1833
        %1869 = vmatpush.bf16.msra.mxu0 %v1832
        %1870 = vmatpush.bf16.msra.mxu0 %v1831
        %1871 = vmatpush.bf16.msra.mxu0 %v1830
        %1872 = vmatpush.bf16.msra.mxu0 %v1829
        %1873 = vmatpush.bf16.msra.mxu0 %v1828
        %1874 = vmatmul.bf16.gmra.mxu0 %v1719
        %v1875 = vpop.f32.mrf.mxu0
        %v1876 = vadd.f32 %v1862, %v1875
        %v1877 = vpop.f32.mrf.mxu0
        %v1878 = vadd.f32 %v1864, %v1877
        %1879 = vdwg.mxu0
        %v1880 = vadd.f32 %v1876, %v1549
        %v1881 = vadd.f32 %v1878, %v1550
        %v1882 = vld [vmem:[%s14] sm:$0x1]
        %v1883 = vld [vmem:[%s15] sm:$0x1]
        %1884 = vadd.xlane.f32.xlu0 %v1880
        %v1885 = vpop.xlane.xlu0 %1884
        %1886 = vadd.xlane.f32.xlu0 %v1881
        %v1887 = vpop.xlane.xlu0 %1886
        %v1888 = vmul.f32 %v1885, %v880
        %v1889 = vmul.f32 %v1887, %v880
        %v1890 = vsub.f32 %v1880, %v1888
        %v1891 = vsub.f32 %v1881, %v1889
        %v1892 = vmul.f32 %v1890, %v1890
        %v1893 = vmul.f32 %v1891, %v1891
        %1894 = vadd.xlane.f32.xlu0 %v1892
        %v1895 = vpop.xlane.xlu0 %1894
        %1896 = vadd.xlane.f32.xlu0 %v1893
        %v1897 = vpop.xlane.xlu0 %1896
        %v1898 = vmul.f32 %v1895, %v880
        %v1899 = vmul.f32 %v1897, %v880
        %v1900 = vadd.f32 %v1898, 1e-12
        %v1901 = vadd.f32 %v1899, 1e-12
        %v1902 = vrsqrt.pop %v1900
        %v1903 = vmul.f32 %v1902, %v1900
        %v1904 = vmul.f32 %v1903, %v1902
        %v1905 = vmul.f32 0.5, %v1904
        %v1906 = vsub.f32 1.5, %v1905
        %v1907 = vmul.f32 %v1902, %v1906
        %vm1908 = vweird.f32 %v1900
        %vm1909 = vweird.f32 %v1902
        %vm1910 = vmor %vm1908, %vm1909
        %v1911 = vsel %vm1910, %v1902, %v1907
        %v1912 = vrsqrt.pop %v1901
        %v1913 = vmul.f32 %v1912, %v1901
        %v1914 = vmul.f32 %v1913, %v1912
        %v1915 = vmul.f32 0.5, %v1914
        %v1916 = vsub.f32 1.5, %v1915
        %v1917 = vmul.f32 %v1912, %v1916
        %vm1918 = vweird.f32 %v1901
        %vm1919 = vweird.f32 %v1912
        %vm1920 = vmor %vm1918, %vm1919
        %v1921 = vsel %vm1920, %v1912, %v1917
        %v1922 = vmul.f32 %v1890, %v1911
        %v1923 = vmul.f32 %v1891, %v1921
        %v1925 = vperm.slane %v1882, 0
        %v1927 = vmul.f32 %v1922, %v1925
        %v1928 = vmul.f32 %v1923, %v1925
        %v1930 = vperm.slane %v1883, 0
        %v1932 = vadd.f32 %v1927, %v1930
        %v1933 = vadd.f32 %v1928, %v1930
        %s1934 = scalar_lea.vmem [#allocation2], 192
        %v1935 = vld [vmem:[%s1934] sm:$0xff]
        %v1936 = vld [vmem:[%s1934 + $0x8] sm:$0xf]
        %v1937 = vld [vmem:[%s1934 + $0xc] sm:$0xff]
        %v1938 = vld [vmem:[%s1934 + $0x14] sm:$0xf]
        %v1939 = vld [vmem:[%s1934 + $0x18] sm:$0xff]
        %v1940 = vld [vmem:[%s1934 + $0x20] sm:$0xf]
        %v1941 = vld [vmem:[%s1934 + $0x24] sm:$0xff]
        %v1942 = vld [vmem:[%s1934 + $0x2c] sm:$0xf]
        %v1943 = vld [vmem:[%s1934 + $0x30] sm:$0xff]
        %v1944 = vld [vmem:[%s1934 + $0x38] sm:$0xf]
        %v1945 = vld [vmem:[%s1934 + $0x3c] sm:$0xff]
        %v1946 = vld [vmem:[%s1934 + $0x44] sm:$0xf]
        %v1947 = vld [vmem:[%s1934 + $0x48] sm:$0xff]
        %v1948 = vld [vmem:[%s1934 + $0x50] sm:$0xf]
        %v1949 = vld [vmem:[%s1934 + $0x54] sm:$0xff]
        %v1950 = vld [vmem:[%s1934 + $0x5c] sm:$0xf]
        %v1951 = vld [vmem:[%s1934 + $0x60] sm:$0xff]
        %v1952 = vld [vmem:[%s1934 + $0x68] sm:$0xf]
        %v1953 = vld [vmem:[%s1934 + $0x6c] sm:$0xff]
        %v1954 = vld [vmem:[%s1934 + $0x74] sm:$0xf]
        %v1955 = vld [vmem:[%s1934 + $0x78] sm:$0xff]
        %v1956 = vld [vmem:[%s1934 + $0x80] sm:$0xf]
        %v1957 = vld [vmem:[%s1934 + $0x84] sm:$0xff]
        %v1958 = vld [vmem:[%s1934 + $0x8c] sm:$0xf]
        %v1959 = vld [vmem:[%s1934 + $0x90] sm:$0xff]
        %v1960 = vld [vmem:[%s1934 + $0x98] sm:$0xf]
        %v1961 = vld [vmem:[%s1934 + $0x9c] sm:$0xff]
        %v1962 = vld [vmem:[%s1934 + $0xa4] sm:$0xf]
        %v1963 = vld [vmem:[%s1934 + $0xa8] sm:$0xff]
        %v1964 = vld [vmem:[%s1934 + $0xb0] sm:$0xf]
        %v1965 = vld [vmem:[%s1934 + $0xb4] sm:$0xff]
        %v1966 = vld [vmem:[%s1934 + $0xbc] sm:$0xf]
        %s1967 = scalar_lea.vmem %s6, 64
        %v1968 = vld [vmem:[%s1967] sm:$0xf]
        %v1969 = vld [vmem:[%s1967 + $0x4] sm:$0xf]
        %v1970 = vld [vmem:[%s1967 + $0x8] sm:$0xf]
        %v1971 = vld [vmem:[%s1967 + $0xc] sm:$0xf]
        %v1972 = vld [vmem:[%s1967 + $0x10] sm:$0xf]
        %v1973 = vld [vmem:[%s1967 + $0x14] sm:$0xf]
        %v1974 = vld [vmem:[%s1967 + $0x18] sm:$0xf]
        %v1975 = vld [vmem:[%s1967 + $0x1c] sm:$0xf]
        %v1976 = vld [vmem:[%s1967 + $0x20] sm:$0xf]
        %v1977 = vld [vmem:[%s1967 + $0x24] sm:$0xf]
        %v1978 = vld [vmem:[%s1967 + $0x28] sm:$0xf]
        %v1979 = vld [vmem:[%s1967 + $0x2c] sm:$0xf]
        %v1980 = vld [vmem:[%s1967 + $0x30] sm:$0xf]
        %v1981 = vld [vmem:[%s1967 + $0x34] sm:$0xf]
        %v1982 = vld [vmem:[%s1967 + $0x38] sm:$0xf]
        %v1983 = vld [vmem:[%s1967 + $0x3c] sm:$0xf]
        %v1984 = vpack.c.bf16 %v1933, %v1932
        %s1985 = scalar_lea.vmem %s5, 3
        %v1986 = vld [vmem:[%s1985] sm:$0x7]
        %v1988 = vperm.slane %v1986, 0
        %v1989 = vperm.slane %v1986, 1
        %v1990 = vperm.slane %v1986, 2
        %v2026 = vunpack.c.l.b16 %v1935
        %v2027 = vunpack.c.h.b16 %v1935
        %v2028 = vunpack.c.l.b16 %v1936
        %v2029 = vunpack.c.l.b16 %v1937
        %v2030 = vunpack.c.h.b16 %v1937
        %v2031 = vunpack.c.l.b16 %v1938
        %v2032 = vunpack.c.l.b16 %v1939
        %v2033 = vunpack.c.h.b16 %v1939
        %v2034 = vunpack.c.l.b16 %v1940
        %v2035 = vunpack.c.l.b16 %v1941
        %v2036 = vunpack.c.h.b16 %v1941
        %v2037 = vunpack.c.l.b16 %v1942
        %v2038 = vunpack.c.l.b16 %v1943
        %v2039 = vunpack.c.h.b16 %v1943
        %v2040 = vunpack.c.l.b16 %v1944
        %v2041 = vunpack.c.l.b16 %v1945
        %v2042 = vunpack.c.h.b16 %v1945
        %v2043 = vunpack.c.l.b16 %v1946
        %v2044 = vunpack.c.l.b16 %v1947
        %v2045 = vunpack.c.h.b16 %v1947
        %v2046 = vunpack.c.l.b16 %v1948
        %v2047 = vunpack.c.l.b16 %v1949
        %v2048 = vunpack.c.h.b16 %v1949
        %v2049 = vunpack.c.l.b16 %v1950
        %v2050 = vunpack.c.l.b16 %v1951
        %v2051 = vunpack.c.h.b16 %v1951
        %v2052 = vunpack.c.l.b16 %v1952
        %v2053 = vunpack.c.l.b16 %v1953
        %v2054 = vunpack.c.h.b16 %v1953
        %v2055 = vunpack.c.l.b16 %v1954
        %v2056 = vunpack.c.l.b16 %v1955
        %v2057 = vunpack.c.h.b16 %v1955
        %v2058 = vunpack.c.l.b16 %v1956
        %v2059 = vunpack.c.l.b16 %v1957
        %v2060 = vunpack.c.h.b16 %v1957
        %v2061 = vunpack.c.l.b16 %v1958
        %v2062 = vunpack.c.l.b16 %v1959
        %v2063 = vunpack.c.h.b16 %v1959
        %v2064 = vunpack.c.l.b16 %v1960
        %v2065 = vunpack.c.l.b16 %v1961
        %v2066 = vunpack.c.h.b16 %v1961
        %v2067 = vunpack.c.l.b16 %v1962
        %v2068 = vunpack.c.l.b16 %v1963
        %v2069 = vunpack.c.h.b16 %v1963
        %v2070 = vunpack.c.l.b16 %v1964
        %v2071 = vunpack.c.l.b16 %v1965
        %v2072 = vunpack.c.h.b16 %v1965
        %v2073 = vunpack.c.l.b16 %v1966
        %v2074 = vpack.c.b16 %v2029, %v2026
        %v2075 = vpack.c.b16 %v2030, %v2027
        %v2076 = vpack.c.b16 %v2031, %v2028
        %v2077 = vpack.c.b16 %v2035, %v2032
        %v2078 = vpack.c.b16 %v2036, %v2033
        %v2079 = vpack.c.b16 %v2037, %v2034
        %v2080 = vpack.c.b16 %v2041, %v2038
        %v2081 = vpack.c.b16 %v2042, %v2039
        %v2082 = vpack.c.b16 %v2043, %v2040
        %v2083 = vpack.c.b16 %v2047, %v2044
        %v2084 = vpack.c.b16 %v2048, %v2045
        %v2085 = vpack.c.b16 %v2049, %v2046
        %v2086 = vpack.c.b16 %v2053, %v2050
        %v2087 = vpack.c.b16 %v2054, %v2051
        %v2088 = vpack.c.b16 %v2055, %v2052
        %v2089 = vpack.c.b16 %v2059, %v2056
        %v2090 = vpack.c.b16 %v2060, %v2057
        %v2091 = vpack.c.b16 %v2061, %v2058
        %v2092 = vpack.c.b16 %v2065, %v2062
        %v2093 = vpack.c.b16 %v2066, %v2063
        %v2094 = vpack.c.b16 %v2067, %v2064
        %v2095 = vpack.c.b16 %v2071, %v2068
        %v2096 = vpack.c.b16 %v2072, %v2069
        %v2097 = vpack.c.b16 %v2073, %v2070
        %2122 = vmatpush.bf16.msra.mxu0 %v2095
        %2123 = vmatpush.bf16.msra.mxu0 %v2092
        %2124 = vmatpush.bf16.msra.mxu0 %v2089
        %2125 = vmatpush.bf16.msra.mxu0 %v2086
        %2126 = vmatpush.bf16.msra.mxu0 %v2083
        %2127 = vmatpush.bf16.msra.mxu0 %v2080
        %2128 = vmatpush.bf16.msra.mxu0 %v2077
        %2129 = vmatpush.bf16.msra.mxu0 %v2074
        %2130 = vmatmul.bf16.gmra.mxu0 %v1984
        %v2131 = vpop.f32.mrf.mxu0
        %v2132 = vadd.f32 %v1988, %v2131
        %v2133 = vpop.f32.mrf.mxu0
        %v2134 = vadd.f32 %v1988, %v2133
        %2135 = vdwg.mxu0
        %2136 = vmatpush.bf16.msra.mxu0 %v2096
        %2137 = vmatpush.bf16.msra.mxu0 %v2093
        %2138 = vmatpush.bf16.msra.mxu0 %v2090
        %2139 = vmatpush.bf16.msra.mxu0 %v2087
        %2140 = vmatpush.bf16.msra.mxu0 %v2084
        %2141 = vmatpush.bf16.msra.mxu0 %v2081
        %2142 = vmatpush.bf16.msra.mxu0 %v2078
        %2143 = vmatpush.bf16.msra.mxu0 %v2075
        %2144 = vmatmul.bf16.gmra.mxu0 %v1984
        %v2145 = vpop.f32.mrf.mxu0
        %v2146 = vadd.f32 %v1989, %v2145
        %v2147 = vpop.f32.mrf.mxu0
        %v2148 = vadd.f32 %v1989, %v2147
        %2149 = vdwg.mxu0
        %2150 = vmatpush.bf16.msra.mxu0 %v2097
        %2151 = vmatpush.bf16.msra.mxu0 %v2094
        %2152 = vmatpush.bf16.msra.mxu0 %v2091
        %2153 = vmatpush.bf16.msra.mxu0 %v2088
        %2154 = vmatpush.bf16.msra.mxu0 %v2085
        %2155 = vmatpush.bf16.msra.mxu0 %v2082
        %2156 = vmatpush.bf16.msra.mxu0 %v2079
        %2157 = vmatpush.bf16.msra.mxu0 %v2076
        %2158 = vmatmul.bf16.gmra.mxu0 %v1984
        %v2159 = vpop.f32.mrf.mxu0
        %v2160 = vadd.f32 %v1990, %v2159
        %v2161 = vpop.f32.mrf.mxu0
        %v2162 = vadd.f32 %v1990, %v2161
        %2163 = vdwg.mxu0
        %v2164 = vpack.c.bf16 %v2132, %v2132
        %v2165 = vpack.c.bf16 %v2134, %v2134
        %v2166 = vpack.c.bf16 %v2146, %v2146
        %v2167 = vpack.c.bf16 %v2148, %v2148
        %v2168 = vpack.c.bf16 %v2160, %v2160
        %v2169 = vpack.c.bf16 %v2162, %v2162
        %v2171 = vsel %vm1164, %v2164, 0
        %v2174 = vsel %vm1164, %v2166, 0
        %2176 = vmatpush.bf16.xpose.msra.mxu0 0
        %2177 = vmatpush.bf16.xpose.msra.mxu0 0
        %2178 = vmatpush.bf16.xpose.msra.mxu0 0
        %2179 = vmatpush.bf16.xpose.msra.mxu0 0
        %2180 = vmatpush.bf16.xpose.msra.mxu0 0
        %2181 = vmatpush.bf16.xpose.msra.mxu0 0
        %2182 = vmatpush.bf16.xpose.msra.mxu0 0
        %2183 = vmatpush.bf16.xpose.msra.mxu0 %v2174
        %2184 = vmatmul.bf16.gmra.mxu0 %v2171
        %v2185 = vpop.f32.mrf.mxu0
        %v2186 = vadd.f32 0.0, %v2185
        %v2187 = vpop.f32.mrf.mxu0
        %2188 = vdwg.mxu0
        %v2189 = vmul.f32 %v2186, 0.125
        %v2190 = vadd.f32 %v2189, %v1185
        %v2191 = vsel %vm1187, %v2190, -inf
        %2192 = vmax.xlane.f32.xlu0 %v2191
        %v2193 = vpop.xlane.xlu0 %2192
        %v2194 = vsub.f32 %v2190, %v2193
        %v2195 = vmul.f32 %v2194, 1.442695
        %v2196 = vpow.pop %v2195
        %v2197 = vsel %vm1187, %v2196, 0.0
        %2198 = vadd.xlane.f32.xlu0 %v2197
        %v2199 = vpop.xlane.xlu0 %2198
        %v2200 = vrcp.pop %v2199
        %v2201 = vmul.f32 %v2196, %v2200
        %v2202 = vpack.c.bf16 %v2201, %v2201
        %v2204 = vsel %vm1187, %v2202, 0
        %v2207 = vsel %vm1203, %v2168, 0
        %2209 = vmatpush.bf16.msra.mxu0 0
        %2210 = vmatpush.bf16.msra.mxu0 0
        %2211 = vmatpush.bf16.msra.mxu0 0
        %2212 = vmatpush.bf16.msra.mxu0 0
        %2213 = vmatpush.bf16.msra.mxu0 0
        %2214 = vmatpush.bf16.msra.mxu0 0
        %2215 = vmatpush.bf16.msra.mxu0 0
        %2216 = vmatpush.bf16.msra.mxu0 %v2207
        %2217 = vmatmul.bf16.gmra.mxu0 %v2204
        %v2218 = vpop.f32.mrf.mxu0
        %v2219 = vadd.f32 0.0, %v2218
        %v2220 = vpop.f32.mrf.mxu0
        %2221 = vdwg.mxu0
        %v2223 = vsel %vm1164, %v2165, 0
        %v2226 = vsel %vm1164, %v2167, 0
        %2228 = vmatpush.bf16.xpose.msra.mxu0 0
        %2229 = vmatpush.bf16.xpose.msra.mxu0 0
        %2230 = vmatpush.bf16.xpose.msra.mxu0 0
        %2231 = vmatpush.bf16.xpose.msra.mxu0 0
        %2232 = vmatpush.bf16.xpose.msra.mxu0 0
        %2233 = vmatpush.bf16.xpose.msra.mxu0 0
        %2234 = vmatpush.bf16.xpose.msra.mxu0 0
        %2235 = vmatpush.bf16.xpose.msra.mxu0 %v2226
        %2236 = vmatmul.bf16.gmra.mxu0 %v2223
        %v2237 = vpop.f32.mrf.mxu0
        %v2238 = vadd.f32 0.0, %v2237
        %v2239 = vpop.f32.mrf.mxu0
        %2240 = vdwg.mxu0
        %v2241 = vmul.f32 %v2238, 0.125
        %v2242 = vadd.f32 %v2241, %v1240
        %v2243 = vsel %vm1187, %v2242, -inf
        %2244 = vmax.xlane.f32.xlu0 %v2243
        %v2245 = vpop.xlane.xlu0 %2244
        %v2246 = vsub.f32 %v2242, %v2245
        %v2247 = vmul.f32 %v2246, 1.442695
        %v2248 = vpow.pop %v2247
        %v2249 = vsel %vm1187, %v2248, 0.0
        %2250 = vadd.xlane.f32.xlu0 %v2249
        %v2251 = vpop.xlane.xlu0 %2250
        %v2252 = vrcp.pop %v2251
        %v2253 = vmul.f32 %v2248, %v2252
        %v2254 = vpack.c.bf16 %v2253, %v2253
        %v2256 = vsel %vm1187, %v2254, 0
        %v2259 = vsel %vm1203, %v2169, 0
        %2261 = vmatpush.bf16.msra.mxu0 0
        %2262 = vmatpush.bf16.msra.mxu0 0
        %2263 = vmatpush.bf16.msra.mxu0 0
        %2264 = vmatpush.bf16.msra.mxu0 0
        %2265 = vmatpush.bf16.msra.mxu0 0
        %2266 = vmatpush.bf16.msra.mxu0 0
        %2267 = vmatpush.bf16.msra.mxu0 0
        %2268 = vmatpush.bf16.msra.mxu0 %v2259
        %2269 = vmatmul.bf16.gmra.mxu0 %v2256
        %v2270 = vpop.f32.mrf.mxu0
        %v2271 = vadd.f32 0.0, %v2270
        %v2272 = vpop.f32.mrf.mxu0
        %2273 = vdwg.mxu0
        %v2274 = vpack.c.bf16 %v2271, %v2219
        %v2276 = vunpack.c.l.b16 %v2164
        %v2277 = vpack.c.b16 %v2276, %v2276
        %2278 = vrot.lane.b32.xlu0 %v2277, 64
        %v2279 = vpop.permute.xlu0 %2278
        %v2281 = vunpack.c.l.b16 %v2166
        %v2282 = vpack.c.b16 %v2281, %v2281
        %2283 = vrot.lane.b32.xlu0 %v2282, 64
        %v2284 = vpop.permute.xlu0 %2283
        %v2286 = vsel %vm1164, %v2279, 0
        %v2289 = vsel %vm1164, %v2284, 0
        %2291 = vmatpush.bf16.xpose.msra.mxu0 0
        %2292 = vmatpush.bf16.xpose.msra.mxu0 0
        %2293 = vmatpush.bf16.xpose.msra.mxu0 0
        %2294 = vmatpush.bf16.xpose.msra.mxu0 0
        %2295 = vmatpush.bf16.xpose.msra.mxu0 0
        %2296 = vmatpush.bf16.xpose.msra.mxu0 0
        %2297 = vmatpush.bf16.xpose.msra.mxu0 0
        %2298 = vmatpush.bf16.xpose.msra.mxu0 %v2289
        %2299 = vmatmul.bf16.gmra.mxu0 %v2286
        %v2300 = vpop.f32.mrf.mxu0
        %v2301 = vadd.f32 0.0, %v2300
        %v2302 = vpop.f32.mrf.mxu0
        %2303 = vdwg.mxu0
        %v2304 = vmul.f32 %v2301, 0.125
        %v2305 = vadd.f32 %v2304, %v1185
        %v2306 = vsel %vm1187, %v2305, -inf
        %2307 = vmax.xlane.f32.xlu0 %v2306
        %v2308 = vpop.xlane.xlu0 %2307
        %v2309 = vsub.f32 %v2305, %v2308
        %v2310 = vmul.f32 %v2309, 1.442695
        %v2311 = vpow.pop %v2310
        %v2312 = vsel %vm1187, %v2311, 0.0
        %2313 = vadd.xlane.f32.xlu0 %v2312
        %v2314 = vpop.xlane.xlu0 %2313
        %v2315 = vrcp.pop %v2314
        %v2316 = vmul.f32 %v2311, %v2315
        %v2317 = vpack.c.bf16 %v2316, %v2316
        %v2319 = vunpack.c.l.b16 %v2168
        %v2320 = vpack.c.b16 %v2319, %v2319
        %2321 = vrot.lane.b32.xlu0 %v2320, 64
        %v2322 = vpop.permute.xlu0 %2321
        %v2324 = vsel %vm1187, %v2317, 0
        %v2327 = vsel %vm1203, %v2322, 0
        %2329 = vmatpush.bf16.msra.mxu0 0
        %2330 = vmatpush.bf16.msra.mxu0 0
        %2331 = vmatpush.bf16.msra.mxu0 0
        %2332 = vmatpush.bf16.msra.mxu0 0
        %2333 = vmatpush.bf16.msra.mxu0 0
        %2334 = vmatpush.bf16.msra.mxu0 0
        %2335 = vmatpush.bf16.msra.mxu0 0
        %2336 = vmatpush.bf16.msra.mxu0 %v2327
        %2337 = vmatmul.bf16.gmra.mxu0 %v2324
        %v2338 = vpop.f32.mrf.mxu0
        %v2339 = vadd.f32 0.0, %v2338
        %v2340 = vpop.f32.mrf.mxu0
        %2341 = vdwg.mxu0
        %v2343 = vunpack.c.l.b16 %v2165
        %v2344 = vpack.c.b16 %v2343, %v2343
        %2345 = vrot.lane.b32.xlu0 %v2344, 64
        %v2346 = vpop.permute.xlu0 %2345
        %v2348 = vunpack.c.l.b16 %v2167
        %v2349 = vpack.c.b16 %v2348, %v2348
        %2350 = vrot.lane.b32.xlu0 %v2349, 64
        %v2351 = vpop.permute.xlu0 %2350
        %v2353 = vsel %vm1164, %v2346, 0
        %v2356 = vsel %vm1164, %v2351, 0
        %2358 = vmatpush.bf16.xpose.msra.mxu0 0
        %2359 = vmatpush.bf16.xpose.msra.mxu0 0
        %2360 = vmatpush.bf16.xpose.msra.mxu0 0
        %2361 = vmatpush.bf16.xpose.msra.mxu0 0
        %2362 = vmatpush.bf16.xpose.msra.mxu0 0
        %2363 = vmatpush.bf16.xpose.msra.mxu0 0
        %2364 = vmatpush.bf16.xpose.msra.mxu0 0
        %2365 = vmatpush.bf16.xpose.msra.mxu0 %v2356
        %2366 = vmatmul.bf16.gmra.mxu0 %v2353
        %v2367 = vpop.f32.mrf.mxu0
        %v2368 = vadd.f32 0.0, %v2367
        %v2369 = vpop.f32.mrf.mxu0
        %2370 = vdwg.mxu0
        %v2371 = vmul.f32 %v2368, 0.125
        %v2372 = vadd.f32 %v2371, %v1240
        %v2373 = vsel %vm1187, %v2372, -inf
        %2374 = vmax.xlane.f32.xlu0 %v2373
        %v2375 = vpop.xlane.xlu0 %2374
        %v2376 = vsub.f32 %v2372, %v2375
        %v2377 = vmul.f32 %v2376, 1.442695
        %v2378 = vpow.pop %v2377
        %v2379 = vsel %vm1187, %v2378, 0.0
        %2380 = vadd.xlane.f32.xlu0 %v2379
        %v2381 = vpop.xlane.xlu0 %2380
        %v2382 = vrcp.pop %v2381
        %v2383 = vmul.f32 %v2378, %v2382
        %v2384 = vpack.c.bf16 %v2383, %v2383
        %v2386 = vunpack.c.l.b16 %v2169
        %v2387 = vpack.c.b16 %v2386, %v2386
        %2388 = vrot.lane.b32.xlu0 %v2387, 64
        %v2389 = vpop.permute.xlu0 %2388
        %v2391 = vsel %vm1187, %v2384, 0
        %v2394 = vsel %vm1203, %v2389, 0
        %2396 = vmatpush.bf16.msra.mxu0 0
        %2397 = vmatpush.bf16.msra.mxu0 0
        %2398 = vmatpush.bf16.msra.mxu0 0
        %2399 = vmatpush.bf16.msra.mxu0 0
        %2400 = vmatpush.bf16.msra.mxu0 0
        %2401 = vmatpush.bf16.msra.mxu0 0
        %2402 = vmatpush.bf16.msra.mxu0 0
        %2403 = vmatpush.bf16.msra.mxu0 %v2394
        %2404 = vmatmul.bf16.gmra.mxu0 %v2391
        %v2405 = vpop.f32.mrf.mxu0
        %v2406 = vadd.f32 0.0, %v2405
        %v2407 = vpop.f32.mrf.mxu0
        %2408 = vdwg.mxu0
        %v2409 = vpack.c.bf16 %v2406, %v2339
        %v2418 = vunpack.c.l.b16 %v1976
        %v2419 = vunpack.c.l.b16 %v1977
        %v2420 = vunpack.c.l.b16 %v1978
        %v2421 = vunpack.c.l.b16 %v1979
        %v2422 = vunpack.c.l.b16 %v1980
        %v2423 = vunpack.c.l.b16 %v1981
        %v2424 = vunpack.c.l.b16 %v1982
        %v2425 = vunpack.c.l.b16 %v1983
        %v2426 = vpack.c.b16 %v2419, %v2418
        %v2427 = vpack.c.b16 %v2421, %v2420
        %v2428 = vpack.c.b16 %v2423, %v2422
        %v2429 = vpack.c.b16 %v2425, %v2424
        %v2435 = vsel %vm1164, %v2409, 0
        %2437 = vmatpush.bf16.msra.mxu0 0
        %2438 = vmatpush.bf16.msra.mxu0 0
        %2439 = vmatpush.bf16.msra.mxu0 0
        %2440 = vmatpush.bf16.msra.mxu0 0
        %2441 = vmatpush.bf16.msra.mxu0 %v2429
        %2442 = vmatpush.bf16.msra.mxu0 %v2428
        %2443 = vmatpush.bf16.msra.mxu0 %v2427
        %2444 = vmatpush.bf16.msra.mxu0 %v2426
        %2445 = vmatmul.bf16.gmra.mxu0 %v2435
        %v2446 = vpop.f32.mrf.mxu0
        %v2447 = vadd.f32 0.0, %v2446
        %v2448 = vpop.f32.mrf.mxu0
        %v2449 = vadd.f32 0.0, %v2448
        %2450 = vdwg.mxu0
        %v2459 = vunpack.c.l.b16 %v1968
        %v2460 = vunpack.c.l.b16 %v1969
        %v2461 = vunpack.c.l.b16 %v1970
        %v2462 = vunpack.c.l.b16 %v1971
        %v2463 = vunpack.c.l.b16 %v1972
        %v2464 = vunpack.c.l.b16 %v1973
        %v2465 = vunpack.c.l.b16 %v1974
        %v2466 = vunpack.c.l.b16 %v1975
        %v2467 = vpack.c.b16 %v2460, %v2459
        %v2468 = vpack.c.b16 %v2462, %v2461
        %v2469 = vpack.c.b16 %v2464, %v2463
        %v2470 = vpack.c.b16 %v2466, %v2465
        %v2476 = vsel %vm1164, %v2274, 0
        %2478 = vmatpush.bf16.msra.mxu0 0
        %2479 = vmatpush.bf16.msra.mxu0 0
        %2480 = vmatpush.bf16.msra.mxu0 0
        %2481 = vmatpush.bf16.msra.mxu0 0
        %2482 = vmatpush.bf16.msra.mxu0 %v2470
        %2483 = vmatpush.bf16.msra.mxu0 %v2469
        %2484 = vmatpush.bf16.msra.mxu0 %v2468
        %2485 = vmatpush.bf16.msra.mxu0 %v2467
        %2486 = vmatmul.bf16.gmra.mxu0 %v2476
        %v2487 = vpop.f32.mrf.mxu0
        %v2488 = vadd.f32 %v2447, %v2487
        %v2489 = vpop.f32.mrf.mxu0
        %v2490 = vadd.f32 %v2449, %v2489
        %2491 = vdwg.mxu0
        %s2492 = scalar_lea.vmem %s7, 1
        %v2493 = vld [vmem:[%s2492] sm:$0x1]
        %v2495 = vperm.slane %v2493, 0
        %v2497 = vadd.f32 %v2488, %v2495
        %v2498 = vadd.f32 %v2490, %v2495
        %v2499 = vadd.f32 %v2497, %v1932
        %v2500 = vadd.f32 %v2498, %v1933
        %s2501 = scalar_lea.vmem %s8, 1
        %v2502 = vld [vmem:[%s2501] sm:$0x1]
        %s2503 = scalar_lea.vmem %s9, 1
        %v2504 = vld [vmem:[%s2503] sm:$0x1]
        %2505 = vadd.xlane.f32.xlu0 %v2499
        %v2506 = vpop.xlane.xlu0 %2505
        %2507 = vadd.xlane.f32.xlu0 %v2500
        %v2508 = vpop.xlane.xlu0 %2507
        %v2509 = vmul.f32 %v2506, %v880
        %v2510 = vmul.f32 %v2508, %v880
        %v2511 = vsub.f32 %v2499, %v2509
        %v2512 = vsub.f32 %v2500, %v2510
        %v2513 = vmul.f32 %v2511, %v2511
        %v2514 = vmul.f32 %v2512, %v2512
        %2515 = vadd.xlane.f32.xlu0 %v2513
        %v2516 = vpop.xlane.xlu0 %2515
        %2517 = vadd.xlane.f32.xlu0 %v2514
        %v2518 = vpop.xlane.xlu0 %2517
        %v2519 = vmul.f32 %v2516, %v880
        %v2520 = vmul.f32 %v2518, %v880
        %v2521 = vadd.f32 %v2519, 1e-12
        %v2522 = vadd.f32 %v2520, 1e-12
        %v2523 = vrsqrt.pop %v2521
        %v2524 = vmul.f32 %v2523, %v2521
        %v2525 = vmul.f32 %v2524, %v2523
        %v2526 = vmul.f32 0.5, %v2525
        %v2527 = vsub.f32 1.5, %v2526
        %v2528 = vmul.f32 %v2523, %v2527
        %vm2529 = vweird.f32 %v2521
        %vm2530 = vweird.f32 %v2523
        %vm2531 = vmor %vm2529, %vm2530
        %v2532 = vsel %vm2531, %v2523, %v2528
        %v2533 = vrsqrt.pop %v2522
        %v2534 = vmul.f32 %v2533, %v2522
        %v2535 = vmul.f32 %v2534, %v2533
        %v2536 = vmul.f32 0.5, %v2535
        %v2537 = vsub.f32 1.5, %v2536
        %v2538 = vmul.f32 %v2533, %v2537
        %vm2539 = vweird.f32 %v2522
        %vm2540 = vweird.f32 %v2533
        %vm2541 = vmor %vm2539, %vm2540
        %v2542 = vsel %vm2541, %v2533, %v2538
        %v2543 = vmul.f32 %v2511, %v2532
        %v2544 = vmul.f32 %v2512, %v2542
        %v2546 = vperm.slane %v2502, 0
        %v2548 = vmul.f32 %v2543, %v2546
        %v2549 = vmul.f32 %v2544, %v2546
        %v2551 = vperm.slane %v2504, 0
        %v2553 = vadd.f32 %v2548, %v2551
        %v2554 = vadd.f32 %v2549, %v2551
        %v2555 = vpack.c.bf16 %v2554, %v2553
        %s2556 = scalar_lea.vmem %s10, 128
        %v2557 = vld [vmem:[%s2556] sm:$0xff]
        %v2558 = vld [vmem:[%s2556 + $0x8] sm:$0xff]
        %v2559 = vld [vmem:[%s2556 + $0x10] sm:$0xff]
        %v2560 = vld [vmem:[%s2556 + $0x18] sm:$0xff]
        %v2561 = vld [vmem:[%s2556 + $0x20] sm:$0xff]
        %v2562 = vld [vmem:[%s2556 + $0x28] sm:$0xff]
        %v2563 = vld [vmem:[%s2556 + $0x30] sm:$0xff]
        %v2564 = vld [vmem:[%s2556 + $0x38] sm:$0xff]
        %v2565 = vld [vmem:[%s2556 + $0x40] sm:$0xff]
        %v2566 = vld [vmem:[%s2556 + $0x48] sm:$0xff]
        %v2567 = vld [vmem:[%s2556 + $0x50] sm:$0xff]
        %v2568 = vld [vmem:[%s2556 + $0x58] sm:$0xff]
        %v2569 = vld [vmem:[%s2556 + $0x60] sm:$0xff]
        %v2570 = vld [vmem:[%s2556 + $0x68] sm:$0xff]
        %v2571 = vld [vmem:[%s2556 + $0x70] sm:$0xff]
        %v2572 = vld [vmem:[%s2556 + $0x78] sm:$0xff]
        %s2573 = scalar_lea.vmem %s11, 2
        %v2574 = vld [vmem:[%s2573] sm:$0x3]
        %v2576 = vperm.slane %v2574, 0
        %v2577 = vperm.slane %v2574, 1
        %v2596 = vunpack.c.l.b16 %v2557
        %v2597 = vunpack.c.h.b16 %v2557
        %v2598 = vunpack.c.l.b16 %v2558
        %v2599 = vunpack.c.h.b16 %v2558
        %v2600 = vunpack.c.l.b16 %v2559
        %v2601 = vunpack.c.h.b16 %v2559
        %v2602 = vunpack.c.l.b16 %v2560
        %v2603 = vunpack.c.h.b16 %v2560
        %v2604 = vunpack.c.l.b16 %v2561
        %v2605 = vunpack.c.h.b16 %v2561
        %v2606 = vunpack.c.l.b16 %v2562
        %v2607 = vunpack.c.h.b16 %v2562
        %v2608 = vunpack.c.l.b16 %v2563
        %v2609 = vunpack.c.h.b16 %v2563
        %v2610 = vunpack.c.l.b16 %v2564
        %v2611 = vunpack.c.h.b16 %v2564
        %v2612 = vunpack.c.l.b16 %v2565
        %v2613 = vunpack.c.h.b16 %v2565
        %v2614 = vunpack.c.l.b16 %v2566
        %v2615 = vunpack.c.h.b16 %v2566
        %v2616 = vunpack.c.l.b16 %v2567
        %v2617 = vunpack.c.h.b16 %v2567
        %v2618 = vunpack.c.l.b16 %v2568
        %v2619 = vunpack.c.h.b16 %v2568
        %v2620 = vunpack.c.l.b16 %v2569
        %v2621 = vunpack.c.h.b16 %v2569
        %v2622 = vunpack.c.l.b16 %v2570
        %v2623 = vunpack.c.h.b16 %v2570
        %v2624 = vunpack.c.l.b16 %v2571
        %v2625 = vunpack.c.h.b16 %v2571
        %v2626 = vunpack.c.l.b16 %v2572
        %v2627 = vunpack.c.h.b16 %v2572
        %v2628 = vpack.c.b16 %v2598, %v2596
        %v2629 = vpack.c.b16 %v2599, %v2597
        %v2630 = vpack.c.b16 %v2602, %v2600
        %v2631 = vpack.c.b16 %v2603, %v2601
        %v2632 = vpack.c.b16 %v2606, %v2604
        %v2633 = vpack.c.b16 %v2607, %v2605
        %v2634 = vpack.c.b16 %v2610, %v2608
        %v2635 = vpack.c.b16 %v2611, %v2609
        %v2636 = vpack.c.b16 %v2614, %v2612
        %v2637 = vpack.c.b16 %v2615, %v2613
        %v2638 = vpack.c.b16 %v2618, %v2616
        %v2639 = vpack.c.b16 %v2619, %v2617
        %v2640 = vpack.c.b16 %v2622, %v2620
        %v2641 = vpack.c.b16 %v2623, %v2621
        %v2642 = vpack.c.b16 %v2626, %v2624
        %v2643 = vpack.c.b16 %v2627, %v2625
        %2660 = vmatpush.bf16.msra.mxu0 %v2642
        %2661 = vmatpush.bf16.msra.mxu0 %v2640
        %2662 = vmatpush.bf16.msra.mxu0 %v2638
        %2663 = vmatpush.bf16.msra.mxu0 %v2636
        %2664 = vmatpush.bf16.msra.mxu0 %v2634
        %2665 = vmatpush.bf16.msra.mxu0 %v2632
        %2666 = vmatpush.bf16.msra.mxu0 %v2630
        %2667 = vmatpush.bf16.msra.mxu0 %v2628
        %2668 = vmatmul.bf16.gmra.mxu0 %v2555
        %v2669 = vpop.f32.mrf.mxu0
        %v2670 = vadd.f32 %v2576, %v2669
        %v2671 = vpop.f32.mrf.mxu0
        %v2672 = vadd.f32 %v2576, %v2671
        %2673 = vdwg.mxu0
        %2674 = vmatpush.bf16.msra.mxu0 %v2643
        %2675 = vmatpush.bf16.msra.mxu0 %v2641
        %2676 = vmatpush.bf16.msra.mxu0 %v2639
        %2677 = vmatpush.bf16.msra.mxu0 %v2637
        %2678 = vmatpush.bf16.msra.mxu0 %v2635
        %2679 = vmatpush.bf16.msra.mxu0 %v2633
        %2680 = vmatpush.bf16.msra.mxu0 %v2631
        %2681 = vmatpush.bf16.msra.mxu0 %v2629
        %2682 = vmatmul.bf16.gmra.mxu0 %v2555
        %v2683 = vpop.f32.mrf.mxu0
        %v2684 = vadd.f32 %v2577, %v2683
        %v2685 = vpop.f32.mrf.mxu0
        %v2686 = vadd.f32 %v2577, %v2685
        %2687 = vdwg.mxu0
        %v2688 = vmul.f32 %v2670, %v2670
        %v2689 = vmul.f32 %v2684, %v2684
        %v2690 = vmul.f32 %v2672, %v2672
        %v2691 = vmul.f32 %v2686, %v2686
        %v2692 = vmul.f32 %v2670, %v2688
        %v2693 = vmul.f32 %v2684, %v2689
        %v2694 = vmul.f32 %v2672, %v2690
        %v2695 = vmul.f32 %v2686, %v2691
        %v2696 = vmul.f32 %v2692, 0.044715
        %v2697 = vmul.f32 %v2693, 0.044715
        %v2698 = vmul.f32 %v2694, 0.044715
        %v2699 = vmul.f32 %v2695, 0.044715
        %v2700 = vadd.f32 %v2670, %v2696
        %v2701 = vadd.f32 %v2684, %v2697
        %v2702 = vadd.f32 %v2672, %v2698
        %v2703 = vadd.f32 %v2686, %v2699
        %v2704 = vmul.f32 %v2700, 0.7978846
        %v2705 = vmul.f32 %v2701, 0.7978846
        %v2706 = vmul.f32 %v2702, 0.7978846
        %v2707 = vmul.f32 %v2703, 0.7978846
        %v2708 = vtanh.pop %v2704
        %v2709 = vtanh.pop %v2705
        %v2710 = vtanh.pop %v2706
        %v2711 = vtanh.pop %v2707
        %v2712 = vadd.f32 %v2708, 1.0
        %v2713 = vadd.f32 %v2709, 1.0
        %v2714 = vadd.f32 %v2710, 1.0
        %v2715 = vadd.f32 %v2711, 1.0
        %v2716 = vmul.f32 %v2712, 0.5
        %v2717 = vmul.f32 %v2713, 0.5
        %v2718 = vmul.f32 %v2714, 0.5
        %v2719 = vmul.f32 %v2715, 0.5
        %v2720 = vmul.f32 %v2670, %v2716
        %v2721 = vmul.f32 %v2684, %v2717
        %v2722 = vmul.f32 %v2672, %v2718
        %v2723 = vmul.f32 %v2686, %v2719
        %v2724 = vpack.c.bf16 %v2722, %v2720
        %v2725 = vpack.c.bf16 %v2723, %v2721
        %s2726 = scalar_lea.vmem [#allocation5], 128
        %v2727 = vld [vmem:[%s2726] sm:$0xf]
        %v2728 = vld [vmem:[%s2726 + $0x4] sm:$0xf]
        %v2729 = vld [vmem:[%s2726 + $0x8] sm:$0xf]
        %v2730 = vld [vmem:[%s2726 + $0xc] sm:$0xf]
        %v2731 = vld [vmem:[%s2726 + $0x10] sm:$0xf]
        %v2732 = vld [vmem:[%s2726 + $0x14] sm:$0xf]
        %v2733 = vld [vmem:[%s2726 + $0x18] sm:$0xf]
        %v2734 = vld [vmem:[%s2726 + $0x1c] sm:$0xf]
        %v2735 = vld [vmem:[%s2726 + $0x20] sm:$0xf]
        %v2736 = vld [vmem:[%s2726 + $0x24] sm:$0xf]
        %v2737 = vld [vmem:[%s2726 + $0x28] sm:$0xf]
        %v2738 = vld [vmem:[%s2726 + $0x2c] sm:$0xf]
        %v2739 = vld [vmem:[%s2726 + $0x30] sm:$0xf]
        %v2740 = vld [vmem:[%s2726 + $0x34] sm:$0xf]
        %v2741 = vld [vmem:[%s2726 + $0x38] sm:$0xf]
        %v2742 = vld [vmem:[%s2726 + $0x3c] sm:$0xf]
        %v2743 = vld [vmem:[%s2726 + $0x40] sm:$0xf]
        %v2744 = vld [vmem:[%s2726 + $0x44] sm:$0xf]
        %v2745 = vld [vmem:[%s2726 + $0x48] sm:$0xf]
        %v2746 = vld [vmem:[%s2726 + $0x4c] sm:$0xf]
        %v2747 = vld [vmem:[%s2726 + $0x50] sm:$0xf]
        %v2748 = vld [vmem:[%s2726 + $0x54] sm:$0xf]
        %v2749 = vld [vmem:[%s2726 + $0x58] sm:$0xf]
        %v2750 = vld [vmem:[%s2726 + $0x5c] sm:$0xf]
        %v2751 = vld [vmem:[%s2726 + $0x60] sm:$0xf]
        %v2752 = vld [vmem:[%s2726 + $0x64] sm:$0xf]
        %v2753 = vld [vmem:[%s2726 + $0x68] sm:$0xf]
        %v2754 = vld [vmem:[%s2726 + $0x6c] sm:$0xf]
        %v2755 = vld [vmem:[%s2726 + $0x70] sm:$0xf]
        %v2756 = vld [vmem:[%s2726 + $0x74] sm:$0xf]
        %v2757 = vld [vmem:[%s2726 + $0x78] sm:$0xf]
        %v2758 = vld [vmem:[%s2726 + $0x7c] sm:$0xf]
        %s2759 = scalar_lea.vmem %s13, 1
        %v2760 = vld [vmem:[%s2759] sm:$0x1]
        %v2762 = vperm.slane %v2760, 0
        %v2796 = vunpack.c.l.b16 %v2727
        %v2797 = vunpack.c.l.b16 %v2728
        %v2798 = vunpack.c.l.b16 %v2729
        %v2799 = vunpack.c.l.b16 %v2730
        %v2800 = vunpack.c.l.b16 %v2731
        %v2801 = vunpack.c.l.b16 %v2732
        %v2802 = vunpack.c.l.b16 %v2733
        %v2803 = vunpack.c.l.b16 %v2734
        %v2804 = vunpack.c.l.b16 %v2735
        %v2805 = vunpack.c.l.b16 %v2736
        %v2806 = vunpack.c.l.b16 %v2737
        %v2807 = vunpack.c.l.b16 %v2738
        %v2808 = vunpack.c.l.b16 %v2739
        %v2809 = vunpack.c.l.b16 %v2740
        %v2810 = vunpack.c.l.b16 %v2741
        %v2811 = vunpack.c.l.b16 %v2742
        %v2812 = vunpack.c.l.b16 %v2743
        %v2813 = vunpack.c.l.b16 %v2744
        %v2814 = vunpack.c.l.b16 %v2745
        %v2815 = vunpack.c.l.b16 %v2746
        %v2816 = vunpack.c.l.b16 %v2747
        %v2817 = vunpack.c.l.b16 %v2748
        %v2818 = vunpack.c.l.b16 %v2749
        %v2819 = vunpack.c.l.b16 %v2750
        %v2820 = vunpack.c.l.b16 %v2751
        %v2821 = vunpack.c.l.b16 %v2752
        %v2822 = vunpack.c.l.b16 %v2753
        %v2823 = vunpack.c.l.b16 %v2754
        %v2824 = vunpack.c.l.b16 %v2755
        %v2825 = vunpack.c.l.b16 %v2756
        %v2826 = vunpack.c.l.b16 %v2757
        %v2827 = vunpack.c.l.b16 %v2758
        %v2828 = vpack.c.b16 %v2797, %v2796
        %v2829 = vpack.c.b16 %v2799, %v2798
        %v2830 = vpack.c.b16 %v2801, %v2800
        %v2831 = vpack.c.b16 %v2803, %v2802
        %v2832 = vpack.c.b16 %v2805, %v2804
        %v2833 = vpack.c.b16 %v2807, %v2806
        %v2834 = vpack.c.b16 %v2809, %v2808
        %v2835 = vpack.c.b16 %v2811, %v2810
        %v2836 = vpack.c.b16 %v2813, %v2812
        %v2837 = vpack.c.b16 %v2815, %v2814
        %v2838 = vpack.c.b16 %v2817, %v2816
        %v2839 = vpack.c.b16 %v2819, %v2818
        %v2840 = vpack.c.b16 %v2821, %v2820
        %v2841 = vpack.c.b16 %v2823, %v2822
        %v2842 = vpack.c.b16 %v2825, %v2824
        %v2843 = vpack.c.b16 %v2827, %v2826
        %2860 = vmatpush.bf16.msra.mxu0 %v2835
        %2861 = vmatpush.bf16.msra.mxu0 %v2834
        %2862 = vmatpush.bf16.msra.mxu0 %v2833
        %2863 = vmatpush.bf16.msra.mxu0 %v2832
        %2864 = vmatpush.bf16.msra.mxu0 %v2831
        %2865 = vmatpush.bf16.msra.mxu0 %v2830
        %2866 = vmatpush.bf16.msra.mxu0 %v2829
        %2867 = vmatpush.bf16.msra.mxu0 %v2828
        %2868 = vmatmul.bf16.gmra.mxu0 %v2724
        %v2869 = vpop.f32.mrf.mxu0
        %v2870 = vadd.f32 %v2762, %v2869
        %v2871 = vpop.f32.mrf.mxu0
        %v2872 = vadd.f32 %v2762, %v2871
        %2873 = vdwg.mxu0
        %2874 = vmatpush.bf16.msra.mxu0 %v2843
        %2875 = vmatpush.bf16.msra.mxu0 %v2842
        %2876 = vmatpush.bf16.msra.mxu0 %v2841
        %2877 = vmatpush.bf16.msra.mxu0 %v2840
        %2878 = vmatpush.bf16.msra.mxu0 %v2839
        %2879 = vmatpush.bf16.msra.mxu0 %v2838
        %2880 = vmatpush.bf16.msra.mxu0 %v2837
        %2881 = vmatpush.bf16.msra.mxu0 %v2836
        %2882 = vmatmul.bf16.gmra.mxu0 %v2725
        %v2883 = vpop.f32.mrf.mxu0
        %v2884 = vadd.f32 %v2870, %v2883
        %v2885 = vpop.f32.mrf.mxu0
        %v2886 = vadd.f32 %v2872, %v2885
        %2887 = vdwg.mxu0
        %v2888 = vadd.f32 %v2884, %v2553
        %v2889 = vadd.f32 %v2886, %v2554
        %s2890 = scalar_lea.vmem %s14, 1
        %v2891 = vld [vmem:[%s2890] sm:$0x1]
        %s2892 = scalar_lea.vmem %s15, 1
        %v2893 = vld [vmem:[%s2892] sm:$0x1]
        %2894 = vadd.xlane.f32.xlu0 %v2888
        %v2895 = vpop.xlane.xlu0 %2894
        %2896 = vadd.xlane.f32.xlu0 %v2889
        %v2897 = vpop.xlane.xlu0 %2896
        %v2898 = vmul.f32 %v2895, %v880
        %v2899 = vmul.f32 %v2897, %v880
        %v2900 = vsub.f32 %v2888, %v2898
        %v2901 = vsub.f32 %v2889, %v2899
        %v2902 = vmul.f32 %v2900, %v2900
        %v2903 = vmul.f32 %v2901, %v2901
        %2904 = vadd.xlane.f32.xlu0 %v2902
        %v2905 = vpop.xlane.xlu0 %2904
        %2906 = vadd.xlane.f32.xlu0 %v2903
        %v2907 = vpop.xlane.xlu0 %2906
        %v2908 = vmul.f32 %v2905, %v880
        %v2909 = vmul.f32 %v2907, %v880
        %v2910 = vadd.f32 %v2908, 1e-12
        %v2911 = vadd.f32 %v2909, 1e-12
        %v2912 = vrsqrt.pop %v2910
        %v2913 = vmul.f32 %v2912, %v2910
        %v2914 = vmul.f32 %v2913, %v2912
        %v2915 = vmul.f32 0.5, %v2914
        %v2916 = vsub.f32 1.5, %v2915
        %v2917 = vmul.f32 %v2912, %v2916
        %vm2918 = vweird.f32 %v2910
        %vm2919 = vweird.f32 %v2912
        %vm2920 = vmor %vm2918, %vm2919
        %v2921 = vsel %vm2920, %v2912, %v2917
        %v2922 = vrsqrt.pop %v2911
        %v2923 = vmul.f32 %v2922, %v2911
        %v2924 = vmul.f32 %v2923, %v2922
        %v2925 = vmul.f32 0.5, %v2924
        %v2926 = vsub.f32 1.5, %v2925
        %v2927 = vmul.f32 %v2922, %v2926
        %vm2928 = vweird.f32 %v2911
        %vm2929 = vweird.f32 %v2922
        %vm2930 = vmor %vm2928, %vm2929
        %v2931 = vsel %vm2930, %v2922, %v2927
        %v2932 = vmul.f32 %v2900, %v2921
        %v2933 = vmul.f32 %v2901, %v2931
        %v2935 = vperm.slane %v2891, 0
        %v2937 = vmul.f32 %v2932, %v2935
        %v2938 = vmul.f32 %v2933, %v2935
        %v2940 = vperm.slane %v2893, 0
        %v2942 = vadd.f32 %v2937, %v2940
        %v2943 = vadd.f32 %v2938, %v2940
        %v2945 = vrot.slane %v2943, 7
        %vm2947 = vcmask 1040384
        %v2948 = vsel %vm2947, %v2942, %v2945
        %v2949 = vpack.c.bf16 %v2948, %v2948
        %v2950 = vld [vmem:[%s16] sm:$0xf]
        %v2951 = vld [vmem:[%s16 + $0x4] sm:$0xf]
        %v2952 = vld [vmem:[%s16 + $0x8] sm:$0xf]
        %v2953 = vld [vmem:[%s16 + $0xc] sm:$0xf]
        %v2954 = vld [vmem:[%s16 + $0x10] sm:$0xf]
        %v2955 = vld [vmem:[%s16 + $0x14] sm:$0xf]
        %v2956 = vld [vmem:[%s16 + $0x18] sm:$0xf]
        %v2957 = vld [vmem:[%s16 + $0x1c] sm:$0xf]
        %v2958 = vld [vmem:[%s16 + $0x20] sm:$0xf]
        %v2959 = vld [vmem:[%s16 + $0x24] sm:$0xf]
        %v2960 = vld [vmem:[%s16 + $0x28] sm:$0xf]
        %v2961 = vld [vmem:[%s16 + $0x2c] sm:$0xf]
        %v2962 = vld [vmem:[%s16 + $0x30] sm:$0xf]
        %v2963 = vld [vmem:[%s16 + $0x34] sm:$0xf]
        %v2964 = vld [vmem:[%s16 + $0x38] sm:$0xf]
        %v2965 = vld [vmem:[%s16 + $0x3c] sm:$0xf]
        %v2966 = vld [vmem:[%s17] sm:$0x1]
        %v2968 = vperm.slane %v2966, 0
        %v2986 = vunpack.c.l.b16 %v2950
        %v2987 = vunpack.c.l.b16 %v2951
        %v2988 = vunpack.c.l.b16 %v2952
        %v2989 = vunpack.c.l.b16 %v2953
        %v2990 = vunpack.c.l.b16 %v2954
        %v2991 = vunpack.c.l.b16 %v2955
        %v2992 = vunpack.c.l.b16 %v2956
        %v2993 = vunpack.c.l.b16 %v2957
        %v2994 = vunpack.c.l.b16 %v2958
        %v2995 = vunpack.c.l.b16 %v2959
        %v2996 = vunpack.c.l.b16 %v2960
        %v2997 = vunpack.c.l.b16 %v2961
        %v2998 = vunpack.c.l.b16 %v2962
        %v2999 = vunpack.c.l.b16 %v2963
        %v3000 = vunpack.c.l.b16 %v2964
        %v3001 = vunpack.c.l.b16 %v2965
        %v3002 = vpack.c.b16 %v2987, %v2986
        %v3003 = vpack.c.b16 %v2989, %v2988
        %v3004 = vpack.c.b16 %v2991, %v2990
        %v3005 = vpack.c.b16 %v2993, %v2992
        %v3006 = vpack.c.b16 %v2995, %v2994
        %v3007 = vpack.c.b16 %v2997, %v2996
        %v3008 = vpack.c.b16 %v2999, %v2998
        %v3009 = vpack.c.b16 %v3001, %v3000
        %3018 = vmatpush.bf16.msra.mxu0 %v3009
        %3019 = vmatpush.bf16.msra.mxu0 %v3008
        %3020 = vmatpush.bf16.msra.mxu0 %v3007
        %3021 = vmatpush.bf16.msra.mxu0 %v3006
        %3022 = vmatpush.bf16.msra.mxu0 %v3005
        %3023 = vmatpush.bf16.msra.mxu0 %v3004
        %3024 = vmatpush.bf16.msra.mxu0 %v3003
        %3025 = vmatpush.bf16.msra.mxu0 %v3002
        %3026 = vmatmul.bf16.gmra.mxu0 %v2949
        %v3027 = vpop.f32.mrf.mxu0
        %v3028 = vadd.f32 %v2968, %v3027
        %v3029 = vpop.f32.mrf.mxu0
        %3030 = vdwg.mxu0
        %v3031 = vtanh.pop %v3028
        %v3033 = vrot.slane %v3031, 1
        %v3035 = vsub.f32 %v3031, %v3033
        %v3036 = vand.u32 2147483647, %v3035
        %v3037 = vpack.c.bf16 %v3031, %v3031
        %v3038 = vld [vmem:[%s18] sm:$0xf]
        %v3039 = vld [vmem:[%s18 + $0x4] sm:$0xf]
        %v3040 = vld [vmem:[%s18 + $0x8] sm:$0xf]
        %v3041 = vld [vmem:[%s18 + $0xc] sm:$0xf]
        %v3042 = vld [vmem:[%s18 + $0x10] sm:$0xf]
        %v3043 = vld [vmem:[%s18 + $0x14] sm:$0xf]
        %v3044 = vld [vmem:[%s18 + $0x18] sm:$0xf]
        %v3045 = vld [vmem:[%s18 + $0x1c] sm:$0xf]
        %v3046 = vld [vmem:[%s18 + $0x20] sm:$0xf]
        %v3047 = vld [vmem:[%s18 + $0x24] sm:$0xf]
        %v3048 = vld [vmem:[%s18 + $0x28] sm:$0xf]
        %v3049 = vld [vmem:[%s18 + $0x2c] sm:$0xf]
        %v3050 = vld [vmem:[%s18 + $0x30] sm:$0xf]
        %v3051 = vld [vmem:[%s18 + $0x34] sm:$0xf]
        %v3052 = vld [vmem:[%s18 + $0x38] sm:$0xf]
        %v3053 = vld [vmem:[%s18 + $0x3c] sm:$0xf]
        %v3054 = vld [vmem:[%s19] sm:$0xf]
        %v3055 = vld [vmem:[%s19 + $0x4] sm:$0xf]
        %v3056 = vld [vmem:[%s19 + $0x8] sm:$0xf]
        %v3057 = vld [vmem:[%s19 + $0xc] sm:$0xf]
        %v3058 = vld [vmem:[%s19 + $0x10] sm:$0xf]
        %v3059 = vld [vmem:[%s19 + $0x14] sm:$0xf]
        %v3060 = vld [vmem:[%s19 + $0x18] sm:$0xf]
        %v3061 = vld [vmem:[%s19 + $0x1c] sm:$0xf]
        %v3062 = vld [vmem:[%s19 + $0x20] sm:$0xf]
        %v3063 = vld [vmem:[%s19 + $0x24] sm:$0xf]
        %v3064 = vld [vmem:[%s19 + $0x28] sm:$0xf]
        %v3065 = vld [vmem:[%s19 + $0x2c] sm:$0xf]
        %v3066 = vld [vmem:[%s19 + $0x30] sm:$0xf]
        %v3067 = vld [vmem:[%s19 + $0x34] sm:$0xf]
        %v3068 = vld [vmem:[%s19 + $0x38] sm:$0xf]
        %v3069 = vld [vmem:[%s19 + $0x3c] sm:$0xf]
        %v3071 = vshrl.u32 %v3037, 16
        %v3090 = vunpack.c.l.b16 %v3054
        %v3091 = vunpack.c.l.b16 %v3055
        %v3092 = vunpack.c.l.b16 %v3056
        %v3093 = vunpack.c.l.b16 %v3057
        %v3094 = vunpack.c.l.b16 %v3058
        %v3095 = vunpack.c.l.b16 %v3059
        %v3096 = vunpack.c.l.b16 %v3060
        %v3097 = vunpack.c.l.b16 %v3061
        %v3098 = vunpack.c.l.b16 %v3062
        %v3099 = vunpack.c.l.b16 %v3063
        %v3100 = vunpack.c.l.b16 %v3064
        %v3101 = vunpack.c.l.b16 %v3065
        %v3102 = vunpack.c.l.b16 %v3066
        %v3103 = vunpack.c.l.b16 %v3067
        %v3104 = vunpack.c.l.b16 %v3068
        %v3105 = vunpack.c.l.b16 %v3069
        %v3106 = vpack.c.b16 %v3091, %v3090
        %v3107 = vpack.c.b16 %v3093, %v3092
        %v3108 = vpack.c.b16 %v3095, %v3094
        %v3109 = vpack.c.b16 %v3097, %v3096
        %v3110 = vpack.c.b16 %v3099, %v3098
        %v3111 = vpack.c.b16 %v3101, %v3100
        %v3112 = vpack.c.b16 %v3103, %v3102
        %v3113 = vpack.c.b16 %v3105, %v3104
        %3122 = vmatpush.bf16.msra.mxu0 %v3113
        %3123 = vmatpush.bf16.msra.mxu0 %v3112
        %3124 = vmatpush.bf16.msra.mxu0 %v3111
        %3125 = vmatpush.bf16.msra.mxu0 %v3110
        %3126 = vmatpush.bf16.msra.mxu0 %v3109
        %3127 = vmatpush.bf16.msra.mxu0 %v3108
        %3128 = vmatpush.bf16.msra.mxu0 %v3107
        %3129 = vmatpush.bf16.msra.mxu0 %v3106
        %3130 = vmatmul.bf16.gmra.mxu0 %v3071
        %v3131 = vpop.f32.mrf.mxu0
        %v3132 = vadd.f32 0.0, %v3131
        %v3133 = vpop.f32.mrf.mxu0
        %3134 = vdwg.mxu0
        %v3151 = vunpack.c.l.b16 %v3038
        %v3152 = vunpack.c.l.b16 %v3039
        %v3153 = vunpack.c.l.b16 %v3040
        %v3154 = vunpack.c.l.b16 %v3041
        %v3155 = vunpack.c.l.b16 %v3042
        %v3156 = vunpack.c.l.b16 %v3043
        %v3157 = vunpack.c.l.b16 %v3044
        %v3158 = vunpack.c.l.b16 %v3045
        %v3159 = vunpack.c.l.b16 %v3046
        %v3160 = vunpack.c.l.b16 %v3047
        %v3161 = vunpack.c.l.b16 %v3048
        %v3162 = vunpack.c.l.b16 %v3049
        %v3163 = vunpack.c.l.b16 %v3050
        %v3164 = vunpack.c.l.b16 %v3051
        %v3165 = vunpack.c.l.b16 %v3052
        %v3166 = vunpack.c.l.b16 %v3053
        %v3167 = vpack.c.b16 %v3152, %v3151
        %v3168 = vpack.c.b16 %v3154, %v3153
        %v3169 = vpack.c.b16 %v3156, %v3155
        %v3170 = vpack.c.b16 %v3158, %v3157
        %v3171 = vpack.c.b16 %v3160, %v3159
        %v3172 = vpack.c.b16 %v3162, %v3161
        %v3173 = vpack.c.b16 %v3164, %v3163
        %v3174 = vpack.c.b16 %v3166, %v3165
        %3183 = vmatpush.bf16.msra.mxu0 %v3174
        %3184 = vmatpush.bf16.msra.mxu0 %v3173
        %3185 = vmatpush.bf16.msra.mxu0 %v3172
        %3186 = vmatpush.bf16.msra.mxu0 %v3171
        %3187 = vmatpush.bf16.msra.mxu0 %v3170
        %3188 = vmatpush.bf16.msra.mxu0 %v3169
        %3189 = vmatpush.bf16.msra.mxu0 %v3168
        %3190 = vmatpush.bf16.msra.mxu0 %v3167
        %3191 = vmatmul.bf16.gmra.mxu0 %v3037
        %v3192 = vpop.f32.mrf.mxu0
        %v3193 = vadd.f32 %v3132, %v3192
        %v3194 = vpop.f32.mrf.mxu0
        %3195 = vdwg.mxu0
        %v3196 = vpack.c.bf16 %v3036, %v3036
        %v3197 = vld [vmem:[%s20] sm:$0xf]
        %v3198 = vld [vmem:[%s20 + $0x4] sm:$0xf]
        %v3199 = vld [vmem:[%s20 + $0x8] sm:$0xf]
        %v3200 = vld [vmem:[%s20 + $0xc] sm:$0xf]
        %v3201 = vld [vmem:[%s20 + $0x10] sm:$0xf]
        %v3202 = vld [vmem:[%s20 + $0x14] sm:$0xf]
        %v3203 = vld [vmem:[%s20 + $0x18] sm:$0xf]
        %v3204 = vld [vmem:[%s20 + $0x1c] sm:$0xf]
        %v3205 = vld [vmem:[%s20 + $0x20] sm:$0xf]
        %v3206 = vld [vmem:[%s20 + $0x24] sm:$0xf]
        %v3207 = vld [vmem:[%s20 + $0x28] sm:$0xf]
        %v3208 = vld [vmem:[%s20 + $0x2c] sm:$0xf]
        %v3209 = vld [vmem:[%s20 + $0x30] sm:$0xf]
        %v3210 = vld [vmem:[%s20 + $0x34] sm:$0xf]
        %v3211 = vld [vmem:[%s20 + $0x38] sm:$0xf]
        %v3212 = vld [vmem:[%s20 + $0x3c] sm:$0xf]
        %v3229 = vunpack.c.l.b16 %v3197
        %v3230 = vunpack.c.l.b16 %v3198
        %v3231 = vunpack.c.l.b16 %v3199
        %v3232 = vunpack.c.l.b16 %v3200
        %v3233 = vunpack.c.l.b16 %v3201
        %v3234 = vunpack.c.l.b16 %v3202
        %v3235 = vunpack.c.l.b16 %v3203
        %v3236 = vunpack.c.l.b16 %v3204
        %v3237 = vunpack.c.l.b16 %v3205
        %v3238 = vunpack.c.l.b16 %v3206
        %v3239 = vunpack.c.l.b16 %v3207
        %v3240 = vunpack.c.l.b16 %v3208
        %v3241 = vunpack.c.l.b16 %v3209
        %v3242 = vunpack.c.l.b16 %v3210
        %v3243 = vunpack.c.l.b16 %v3211
        %v3244 = vunpack.c.l.b16 %v3212
        %v3245 = vpack.c.b16 %v3230, %v3229
        %v3246 = vpack.c.b16 %v3232, %v3231
        %v3247 = vpack.c.b16 %v3234, %v3233
        %v3248 = vpack.c.b16 %v3236, %v3235
        %v3249 = vpack.c.b16 %v3238, %v3237
        %v3250 = vpack.c.b16 %v3240, %v3239
        %v3251 = vpack.c.b16 %v3242, %v3241
        %v3252 = vpack.c.b16 %v3244, %v3243
        %3261 = vmatpush.bf16.msra.mxu0 %v3252
        %3262 = vmatpush.bf16.msra.mxu0 %v3251
        %3263 = vmatpush.bf16.msra.mxu0 %v3250
        %3264 = vmatpush.bf16.msra.mxu0 %v3249
        %3265 = vmatpush.bf16.msra.mxu0 %v3248
        %3266 = vmatpush.bf16.msra.mxu0 %v3247
        %3267 = vmatpush.bf16.msra.mxu0 %v3246
        %3268 = vmatpush.bf16.msra.mxu0 %v3245
        %3269 = vmatmul.bf16.gmra.mxu0 %v3196
        %v3270 = vpop.f32.mrf.mxu0
        %v3271 = vadd.f32 0.0, %v3270
        %v3272 = vpop.f32.mrf.mxu0
        %3273 = vdwg.mxu0
        %v3274 = vadd.f32 %v3193, %v3271
        %v3275 = vld [vmem:[%s21] sm:$0x1]
        %v3276 = vadd.f32 %v3274, %v3275
        %v3277 = vmax.f32 %v3276, 0.0
        %v3278 = vpack.c.bf16 %v3277, %v3277
        %v3279 = vld [vmem:[%s22] sm:$0xf]
        %v3280 = vld [vmem:[%s22 + $0x4] sm:$0xf]
        %v3281 = vld [vmem:[%s22 + $0x8] sm:$0xf]
        %v3282 = vld [vmem:[%s22 + $0xc] sm:$0xf]
        %v3283 = vld [vmem:[%s22 + $0x10] sm:$0xf]
        %v3284 = vld [vmem:[%s22 + $0x14] sm:$0xf]
        %v3285 = vld [vmem:[%s22 + $0x18] sm:$0xf]
        %v3286 = vld [vmem:[%s22 + $0x1c] sm:$0xf]
        %v3287 = vld [vmem:[%s22 + $0x20] sm:$0xf]
        %v3288 = vld [vmem:[%s22 + $0x24] sm:$0xf]
        %v3289 = vld [vmem:[%s22 + $0x28] sm:$0xf]
        %v3290 = vld [vmem:[%s22 + $0x2c] sm:$0xf]
        %v3291 = vld [vmem:[%s22 + $0x30] sm:$0xf]
        %v3292 = vld [vmem:[%s22 + $0x34] sm:$0xf]
        %v3293 = vld [vmem:[%s22 + $0x38] sm:$0xf]
        %v3294 = vld [vmem:[%s22 + $0x3c] sm:$0xf]
        %v3295 = vld [vmem:[%s23] sm:$0x1]
        %v3312 = vunpack.c.l.b16 %v3279
        %v3313 = vunpack.c.l.b16 %v3280
        %v3314 = vunpack.c.l.b16 %v3281
        %v3315 = vunpack.c.l.b16 %v3282
        %v3316 = vunpack.c.l.b16 %v3283
        %v3317 = vunpack.c.l.b16 %v3284
        %v3318 = vunpack.c.l.b16 %v3285
        %v3319 = vunpack.c.l.b16 %v3286
        %v3320 = vunpack.c.l.b16 %v3287
        %v3321 = vunpack.c.l.b16 %v3288
        %v3322 = vunpack.c.l.b16 %v3289
        %v3323 = vunpack.c.l.b16 %v3290
        %v3324 = vunpack.c.l.b16 %v3291
        %v3325 = vunpack.c.l.b16 %v3292
        %v3326 = vunpack.c.l.b16 %v3293
        %v3327 = vunpack.c.l.b16 %v3294
        %v3328 = vpack.c.b16 %v3313, %v3312
        %v3329 = vpack.c.b16 %v3315, %v3314
        %v3330 = vpack.c.b16 %v3317, %v3316
        %v3331 = vpack.c.b16 %v3319, %v3318
        %v3332 = vpack.c.b16 %v3321, %v3320
        %v3333 = vpack.c.b16 %v3323, %v3322
        %v3334 = vpack.c.b16 %v3325, %v3324
        %v3335 = vpack.c.b16 %v3327, %v3326
        %3344 = vmatpush.bf16.msra.mxu0 %v3335
        %3345 = vmatpush.bf16.msra.mxu0 %v3334
        %3346 = vmatpush.bf16.msra.mxu0 %v3333
        %3347 = vmatpush.bf16.msra.mxu0 %v3332
        %3348 = vmatpush.bf16.msra.mxu0 %v3331
        %3349 = vmatpush.bf16.msra.mxu0 %v3330
        %3350 = vmatpush.bf16.msra.mxu0 %v3329
        %3351 = vmatpush.bf16.msra.mxu0 %v3328
        %3352 = vmatmul.bf16.gmra.mxu0 %v3278
        %v3353 = vpop.f32.mrf.mxu0
        %v3354 = vadd.f32 %v3295, %v3353
        %v3355 = vpop.f32.mrf.mxu0
        %3356 = vdwg.mxu0
        %vm3357 = vcmask 8192
        %3358 = vst.msk [vmem:[%s843] sm:$0x1] %vm3357, %v3354
        %v3359 = vld [vmem:[%s861] sm:$0x1]
        %v3360 = vsel %vm3357, %v3354, -inf
        %3361 = vmax.xlane.f32.xlu0 %v3360
        %v3362 = vpop.xlane.xlu0 %3361
        %v3363 = vsub.f32 %v3354, %v3362
        %v3364 = vmul.f32 %v3363, 1.442695
        %v3365 = vpow.pop %v3364
        %v3366 = vsel %vm3357, %v3365, 0.0
        %3367 = vadd.xlane.f32.xlu0 %v3366
        %v3368 = vpop.xlane.xlu0 %3367
        %v3369 = vlog2.pop %v3368
        %v3370 = vmul.f32 %v3369, 0.6931472
        %v3371 = vadd.f32 %v3362, %v3370
        %v3372 = vmul.f32 %v3354, %v3359
        %v3373 = vsel %vm3357, %v3372, 0.0
        %3374 = vadd.xlane.f32.xlu0 %v3373
        %v3375 = vpop.xlane.xlu0 %3374
        %v3376 = vsub.f32 %v3371, %v3375
        %vm3377 = vcmask 0
        %3378 = vst.msk [vmem:[%s864] sm:$0x1] %vm3377, %v3376
        %s3379 = sand.u32 %s591, 1
        %s3380 = scalar_lea.sflag [#allocation4], %s3379
        %s3381 = sand.u32 %s591, 1
        %s3382 = scalar_lea.vmem [#allocation7], %s3381
        %p3383 = scmp.lt.s32.totalorder %s43, 1
        %s3384 = scalar_select %p3383, %s43, 1
        %s3385 = scalar_lea.vmem %s26, %s3384
        // Predicated region
        $region129: #{bert_classification_forward.1} parent=119 // pred_check
          %p3386 = pneg %p601
        $region130: #{bert_classification_forward.1} parent=119 // pred_check_branch
          %3388 = sbr.rel (%p3386) target = $region132
        $region131: #{bert_classification_forward.1} parent=119 // pred_region
          %3390 = vsyncadd %s3380, 0
          %s3391 = scalar_lea.hbm %s25, %s43
          %s3393 = sshll.u32 %s3382, 4
          %s3394 = int_to_ptr.vmem [resolvable:$true] %s3393
          %s3395 = sshll.u32 %s3391, 4
          %s3396 = int_to_ptr.hbm [resolvable:$true] %s3395
          %3398 = dma.vmem_to_hbm [thread:$0]  %s3394, 16, %s3396, %s3380
        $region132: #{bert_classification_forward.1} parent=119 // pred_fallthru
          _
        // Predicated region
        $region133: #{bert_classification_forward.1} parent=119 // pred_check
          %p3399 = pneg %p627
        $region134: #{bert_classification_forward.1} parent=119 // pred_check_branch
          %3401 = sbr.rel (%p3399) target = $region136
        $region135: #{bert_classification_forward.1} parent=119 // pred_region
          _
        $region136: #{bert_classification_forward.1} parent=119 // pred_fallthru
          _
      $region120: #{bert_classification_forward.1} parent=5 // pred_fallthru
        _
      %p3402 = scmp.le.s32.totalorder 2, %s38
      // Predicated region
      $region137: #{bert_classification_forward.1} parent=5 // pred_check
        %p3403 = pneg %p3402
      $region138: #{bert_classification_forward.1} parent=5 // pred_check_branch
        %3405 = sbr.rel (%p3403) target = $region140
      $region139: #{bert_classification_forward.1} parent=5 // pred_region
        %s3406 = ssub.s32 %s38, 2
        // Predicated region
        $region141: #{bert_classification_forward.1} parent=139 // pred_check
          %p3407 = pneg %p607
        $region142: #{bert_classification_forward.1} parent=139 // pred_check_branch
          %3409 = sbr.rel (%p3407) target = $region144
        $region143: #{bert_classification_forward.1} parent=139 // pred_region
          %s3410 = sand.u32 %s592, 1
          %s3411 = scalar_lea.sflag [#allocation4], %s3410
          %s3412 = sand.u32 %s592, 1
          %s3413 = scalar_lea.vmem [#allocation7], %s3412
          %3415 = dma.done %s3411, 16
        $region144: #{bert_classification_forward.1} parent=139 // pred_fallthru
          _
        // Predicated region
        $region145: #{bert_classification_forward.1} parent=139 // pred_check
          %p3416 = pneg %p633
        $region146: #{bert_classification_forward.1} parent=139 // pred_check_branch
          %3418 = sbr.rel (%p3416) target = $region148
        $region147: #{bert_classification_forward.1} parent=139 // pred_region
          %p3419 = scmp.lt.s32.totalorder %s44, 1
          %s3420 = scalar_select %p3419, %s44, 1
          %s3421 = scalar_lea.vmem %s26, %s3420
        $region148: #{bert_classification_forward.1} parent=139 // pred_fallthru
          _
      $region140: #{bert_classification_forward.1} parent=5 // pred_fallthru
        _
    $region6: #{bert_classification_forward.1} parent=1 // loop_footer
      %s42 = sadd.s32 1, %s38
    $region7: #{bert_classification_forward.1} parent=1 // loop_footer_branch
      %37 = sbr.rel target = $region3
    $region8: #{bert_classification_forward.1} parent=1 // loop_exit
      _
    %3422 = vsyncpa [#allocation3], 1
    %s3423 = scalar_lea.sflag [#allocation3], 1
    %3424 = vsyncpa %s3423, 1
    %3425 = vsyncpa [#allocation6], 1
    %3426 = vsyncpa [#allocation4], 1
    %s3427 = scalar_lea.sflag [#allocation4], 1
    %3428 = vsyncpa %s3427, 1

</llo_original>
